<compile_context>
chip_gen: v7x
topology: tpu7x:2x2x1
jax: 0.10.0
libtpu: 0.0.40
codegen_flags: <defaults>
</compile_context>

<pallas_src>
import functools

import jax
import jax.numpy as jnp
from jax.experimental import pallas as pl
from jax.experimental.pallas import tpu as pltpu


def _round_up(x, m):
    return (x + m - 1) // m * m


# ----------------------------- Pallas kernels ------------------------------


def _conv_stats_kernel(x_ref, w_ref, y_ref, stats_ref, *, toh, ow, ks, stride):
    """Conv tile via per-tap MXU matmuls + per-tile BN partial statistics.

    x_ref:     (1, HP, WP, CP)      padded NHWC input, one image (resident).
    w_ref:     (ks*ks, CP, NOP)     per-tap weights (resident).
    y_ref:     (1, 1, toh*ow, NOP)  conv output tile (f32).
    stats_ref: (1, 1, 2, NOP)       [sum, sum_of_squares] over this tile.
    """
    i = pl.program_id(1)
    oh0 = i * toh
    r = toh * ow
    cp = x_ref.shape[-1]
    nop = y_ref.shape[-1]

    acc = jnp.zeros((r, nop), jnp.float32)
    for t in range(ks * ks):                      # static, unrolled tap loop
        ki, kj = t // ks, t % ks
        if stride == 1:
            # dynamic offset only on a leading dim (H); static offset on the
            # sublane dim (W); lane dim full -> cheap, alignment-safe slices.
            win = x_ref[0, pl.ds(oh0 + ki, toh), pl.ds(kj, ow), :]
        else:
            # stride > 1 path uses strided dynamic slices (not exercised by
            # the stride=1 config validated in __main__).
            win = x_ref[0, pl.ds(oh0 * stride + ki, toh, stride),
                        pl.ds(kj, ow, stride), :]
        a = win.reshape(r, cp)                    # lane dim (CP=128k) unchanged
        acc = acc + jnp.dot(a, w_ref[t], preferred_element_type=jnp.float32)

    y_ref[0, 0] = acc
    # BN partial stats as a matmul epilogue (XLU reductions, off the VALU path)
    stats_ref[0, 0, 0:1, :] = jnp.sum(acc, axis=0, keepdims=True)
    stats_ref[0, 0, 1:2, :] = jnp.sum(acc * acc, axis=0, keepdims=True)


def _bn_finalize_kernel(stats_ref, gamma_ref, beta_ref, ss_ref, *, m_total, eps):
    """Tiny kernel: reduce per-tile partials -> per-channel scale / shift."""
    s = jnp.sum(stats_ref[...], axis=(0, 1))      # (2, NOP)
    inv_m = 1.0 / m_total
    mean = s[0:1, :] * inv_m
    ex2 = s[1:2, :] * inv_m
    var = ex2 - mean * mean                       # biased variance (BN train)
    scale = gamma_ref[...] * jax.lax.rsqrt(var + eps)
    ss_ref[0:1, :] = scale
    ss_ref[1:2, :] = beta_ref[...] - mean * scale


def _bn_act_kernel(y_ref, ss_ref, o_ref):
    """yhat = y*scale + shift; LeakyReLU(0.2). Writes in place over y."""
    y = y_ref[0, 0]
    yhat = y * ss_ref[0:1, :] + ss_ref[1:2, :]
    o_ref[0, 0] = jnp.where(yhat >= 0, yhat, 0.2 * yhat)


# ------------------------------- wrapper ------------------------------------


@functools.partial(jax.jit,
                   static_argnames=("stride", "pad", "eps", "compute_dtype"))
def conv_block_forward(x, w, gamma, beta, *, stride, pad, eps=1e-5,
                       compute_dtype=jnp.bfloat16):
    """x: [N, C, H, W] (NCHW), w: [no, C, ks, ks], gamma/beta: [no]."""
    n, c, h, wd = x.shape
    no, ni, ks, _ = w.shape
    assert ni == c
    out_h = (h + 2 * pad - ks) // stride + 1
    out_w = (wd + 2 * pad - ks) // stride + 1
    hp, wp = h + 2 * pad, wd + 2 * pad

    cp = _round_up(c, 128)    # pad the contraction (channels) to lane width
    nop = _round_up(no, 128)  # pad output channels -> lane-dense stores

    # --- layout glue (XLA): NCHW -> padded NHWC, pad channels, cast bf16 ---
    # TODO(synk): if the surrounding model consumes NHWC, drop these two
    # layout transposes (here and at the end) entirely.
    x_nhwc = jnp.transpose(x, (0, 2, 3, 1))
    x_p = jnp.pad(x_nhwc, ((0, 0), (pad, pad), (pad, pad), (0, cp - c)))
    x_p = x_p.astype(compute_dtype)

    # weights: (no, c, ks, ks) -> (ks*ks, CP, NOP), tap-major, zero-padded.
    w_t = jnp.transpose(w, (2, 3, 1, 0)).reshape(ks * ks, c, no)
    w_t = jnp.pad(w_t, ((0, 0), (0, cp - c), (0, nop - no))).astype(compute_dtype)

    gamma_p = jnp.pad(gamma.astype(jnp.float32).reshape(1, no),
                      ((0, 0), (0, nop - no)))
    beta_p = jnp.pad(beta.astype(jnp.float32).reshape(1, no),
                     ((0, 0), (0, nop - no)))

    # --- tile the output rows: keep the f32 y tile <= ~2 MiB and give the
    # grid >= 2 steps so v7x's two TensorCores both get work.  toh always
    # divides out_h (halve only while even) so there is never a fringe tile.
    toh = out_h
    while toh % 2 == 0 and (toh * out_w * nop * 4 > 2 * 1024 * 1024
                            or n * (out_h // toh) < 2):
        toh //= 2
    n_oh_tiles = out_h // toh
    r = toh * out_w

    # VMEM budget: resident image + resident taps + double-buffered tiles,
    # with headroom; capped well under v7x's 64 MiB physical VMEM.
    bpe = jnp.dtype(compute_dtype).itemsize
    need = (2 * hp * wp * cp * bpe            # input block (double-buffered)
            + 2 * ks * ks * cp * nop * bpe    # weights
            + 8 * r * nop * 4)                # y/out tiles + accumulator
    vmem_limit = int(min(48 * 1024 * 1024, max(32 * 1024 * 1024, 2 * need)))

    # --- kernel 1: conv (per-tap MXU matmuls) + BN partial stats ------------
    conv_kernel = functools.partial(_conv_stats_kernel, toh=toh, ow=out_w,
                                    ks=ks, stride=stride)
    y, stats = pl.pallas_call(
        conv_kernel,
        out_shape=(
            jax.ShapeDtypeStruct((n, n_oh_tiles, r, nop), jnp.float32),
            jax.ShapeDtypeStruct((n, n_oh_tiles, 2, nop), jnp.float32),
        ),
        grid_spec=pltpu.PrefetchScalarGridSpec(
            num_scalar_prefetch=0,
            grid=(n, n_oh_tiles),
            in_specs=[
                pl.BlockSpec((1, hp, wp, cp), lambda b, i: (b, 0, 0, 0)),
                pl.BlockSpec((ks * ks, cp, nop), lambda b, i: (0, 0, 0)),
            ],
            out_specs=(
                pl.BlockSpec((1, 1, r, nop), lambda b, i: (b, i, 0, 0)),
                pl.BlockSpec((1, 1, 2, nop), lambda b, i: (b, i, 0, 0)),
            ),
        ),
        compiler_params=pltpu.CompilerParams(
            dimension_semantics=("parallel", "parallel"),
            vmem_limit_bytes=vmem_limit),
    )(x_p, w_t)

    # --- kernel 2: tiny finalize -> per-channel scale / shift ---------------
    m_total = float(n * out_h * out_w)
    scale_shift = pl.pallas_call(
        functools.partial(_bn_finalize_kernel, m_total=m_total, eps=eps),
        out_shape=jax.ShapeDtypeStruct((2, nop), jnp.float32),
        grid_spec=pltpu.PrefetchScalarGridSpec(
            num_scalar_prefetch=0,
            grid=(1,),
            in_specs=[
                pl.BlockSpec((n, n_oh_tiles, 2, nop), lambda i: (0, 0, 0, 0)),
                pl.BlockSpec((1, nop), lambda i: (0, 0)),
                pl.BlockSpec((1, nop), lambda i: (0, 0)),
            ],
            out_specs=pl.BlockSpec((2, nop), lambda i: (0, 0)),
        ),
        compiler_params=pltpu.CompilerParams(
            dimension_semantics=("arbitrary",)),
    )(stats, gamma_p, beta_p)

    # --- kernel 3: normalize + LeakyReLU, tiled over M, in place over y -----
    out4 = pl.pallas_call(
        _bn_act_kernel,
        out_shape=jax.ShapeDtypeStruct((n, n_oh_tiles, r, nop), jnp.float32),
        grid_spec=pltpu.PrefetchScalarGridSpec(
            num_scalar_prefetch=0,
            grid=(n, n_oh_tiles),
            in_specs=[
                pl.BlockSpec((1, 1, r, nop), lambda b, i: (b, i, 0, 0)),
                pl.BlockSpec((2, nop), lambda b, i: (0, 0)),
            ],
            out_specs=pl.BlockSpec((1, 1, r, nop), lambda b, i: (b, i, 0, 0)),
        ),
        compiler_params=pltpu.CompilerParams(
            dimension_semantics=("parallel", "parallel"),
            vmem_limit_bytes=vmem_limit),
        input_output_aliases={0: 0},
    )(y, scale_shift)

    # --- layout glue: unpad channels, back to NCHW ---------------------------
    out_nhwc = out4.reshape(n, out_h, out_w, nop)[..., :no]
    return jnp.transpose(out_nhwc, (0, 3, 1, 2))


# ------------------------------- reference ----------------------------------


def _reference(x, w, gamma, beta, *, stride, pad, eps=1e-5,
               compute_dtype=jnp.bfloat16):
    # Models the kernel's numerics policy: conv inputs rounded to the MXU
    # compute dtype, accumulation and BatchNorm statistics in f32.
    xr = x.astype(compute_dtype).astype(jnp.float32)
    wr = w.astype(compute_dtype).astype(jnp.float32)
    y = jax.lax.conv_general_dilated(
        xr, wr, (stride, stride), ((pad, pad), (pad, pad)),
        dimension_numbers=("NCHW", "OIHW", "NCHW"))
    mean = y.mean(axis=(0, 2, 3), keepdims=True)
    var = y.var(axis=(0, 2, 3), keepdims=True)
    yhat = (y - mean) / jnp.sqrt(var + eps)
    yhat = yhat * gamma.reshape(1, -1, 1, 1) + beta.reshape(1, -1, 1, 1)
    return jnp.where(yhat >= 0, yhat, 0.2 * yhat)


if __name__ == "__main__":
    # ConvBlock(ni=4, no=8, ks=3, stride=1) -> pad = 3 // 2 // 1 = 1
    ni, no, ks, stride = 4, 8, 3, 1
    pad = ks // 2 // stride

    key = jax.random.PRNGKey(0)
    kx, kw = jax.random.split(key)
    x = jax.random.normal(kx, (2, ni, 16, 16), dtype=jnp.float32)
    # deterministic conv weight (Conv2d has bias=False in the module)
    w = jax.random.normal(kw, (no, ni, ks, ks), dtype=jnp.float32) * 0.1
    # BatchNorm2d affine params at their PyTorch init values
    gamma = jnp.ones((no,), dtype=jnp.float32)
    beta = jnp.zeros((no,), dtype=jnp.float32)

    out = conv_block_forward(x, w, gamma, beta, stride=stride, pad=pad)
    out = jax.block_until_ready(out)

    ref = _reference(x, w, gamma, beta, stride=stride, pad=pad)
    assert out.shape == (2, no, 16, 16), out.shape
    err = float(jnp.max(jnp.abs(out - ref)))
    assert err < 2e-3, err

    print("KERNEL_OK")
</pallas_src>

<mosaic_0001>
module attributes {stable_mosaic.version = 11 : i64} {
  func.func @_conv_stats_kernel(%arg0: i32, %arg1: i32, %arg2: memref<1x18x18x128xbf16, #tpu.memory_space<vmem>>, %arg3: memref<9x128x128xbf16, #tpu.memory_space<vmem>>, %arg4: memref<1x1x256x128xf32, #tpu.memory_space<vmem>>, %arg5: memref<1x1x2x128xf32, #tpu.memory_space<vmem>>) attributes {dimension_semantics = [#tpu.dimension_semantics<parallel>, #tpu.dimension_semantics<parallel>], iteration_bounds = array<i64: 2, 1>, scalar_prefetch = 0 : i64, scratch_operands = 0 : i64, tpu.core_type = #tpu.core_type<tc>, window_params = [{transform_indices = @transform_0, window_bounds = array<i64: 1, 18, 18, 128>}, {pipeline_mode = #tpu.pipeline_mode<synchronous>, transform_indices = @transform_1, window_bounds = array<i64: 9, 128, 128>}, {transform_indices = @transform_2, window_bounds = array<i64: 1, 1, 256, 128>}, {transform_indices = @transform_3, window_bounds = array<i64: 1, 1, 2, 128>}]} {
    %c16_i32 = arith.constant 16 : i32
    %0 = arith.muli %arg1, %c16_i32 : i32
    %cst = arith.constant 0.000000e+00 : f32
    %1 = vector.broadcast %cst : f32 to vector<256x128xf32>
    %c0_i32 = arith.constant 0 : i32
    %2 = arith.addi %0, %c0_i32 : i32
    %c0 = arith.constant 0 : index
    %3 = arith.index_cast %2 : i32 to index
    %c0_0 = arith.constant 0 : index
    %c0_1 = arith.constant 0 : index
    %4 = vector.load %arg2[%c0, %3, %c0_0, %c0_1] : memref<1x18x18x128xbf16, #tpu.memory_space<vmem>>, vector<1x16x16x128xbf16>
    %5 = vector.shape_cast %4 : vector<1x16x16x128xbf16> to vector<16x16x128xbf16>
    %6 = vector.shape_cast %5 : vector<16x16x128xbf16> to vector<256x128xbf16>
    %c0_2 = arith.constant 0 : index
    %c0_3 = arith.constant 0 : index
    %c0_4 = arith.constant 0 : index
    %7 = vector.load %arg3[%c0_2, %c0_3, %c0_4] : memref<9x128x128xbf16, #tpu.memory_space<vmem>>, vector<1x128x128xbf16>
    %8 = vector.shape_cast %7 : vector<1x128x128xbf16> to vector<128x128xbf16>
    %cst_5 = arith.constant dense<0.000000e+00> : vector<256x128xf32>
    %9 = tpu.matmul %6, %8, %cst_5 {dimension_numbers = #tpu.dot_dimension_numbers<[1], [0], [0], [1], [0, 0, 1, 1], [], []>} : vector<256x128xbf16>, vector<128x128xbf16>, vector<256x128xf32> -> vector<256x128xf32>
    %10 = arith.addf %1, %9 : vector<256x128xf32>
    %c0_i32_6 = arith.constant 0 : i32
    %11 = arith.addi %0, %c0_i32_6 : i32
    %c0_7 = arith.constant 0 : index
    %12 = arith.index_cast %11 : i32 to index
    %c1 = arith.constant 1 : index
    %c0_8 = arith.constant 0 : index
    %13 = vector.load %arg2[%c0_7, %12, %c1, %c0_8] : memref<1x18x18x128xbf16, #tpu.memory_space<vmem>>, vector<1x16x16x128xbf16>
    %14 = vector.shape_cast %13 : vector<1x16x16x128xbf16> to vector<16x16x128xbf16>
    %15 = vector.shape_cast %14 : vector<16x16x128xbf16> to vector<256x128xbf16>
    %c1_9 = arith.constant 1 : index
    %c0_10 = arith.constant 0 : index
    %c0_11 = arith.constant 0 : index
    %16 = vector.load %arg3[%c1_9, %c0_10, %c0_11] : memref<9x128x128xbf16, #tpu.memory_space<vmem>>, vector<1x128x128xbf16>
    %17 = vector.shape_cast %16 : vector<1x128x128xbf16> to vector<128x128xbf16>
    %cst_12 = arith.constant dense<0.000000e+00> : vector<256x128xf32>
    %18 = tpu.matmul %15, %17, %cst_12 {dimension_numbers = #tpu.dot_dimension_numbers<[1], [0], [0], [1], [0, 0, 1, 1], [], []>} : vector<256x128xbf16>, vector<128x128xbf16>, vector<256x128xf32> -> vector<256x128xf32>
    %19 = arith.addf %10, %18 : vector<256x128xf32>
    %c0_i32_13 = arith.constant 0 : i32
    %20 = arith.addi %0, %c0_i32_13 : i32
    %c0_14 = arith.constant 0 : index
    %21 = arith.index_cast %20 : i32 to index
    %c2 = arith.constant 2 : index
    %c0_15 = arith.constant 0 : index
    %22 = vector.load %arg2[%c0_14, %21, %c2, %c0_15] : memref<1x18x18x128xbf16, #tpu.memory_space<vmem>>, vector<1x16x16x128xbf16>
    %23 = vector.shape_cast %22 : vector<1x16x16x128xbf16> to vector<16x16x128xbf16>
    %24 = vector.shape_cast %23 : vector<16x16x128xbf16> to vector<256x128xbf16>
    %c2_16 = arith.constant 2 : index
    %c0_17 = arith.constant 0 : index
    %c0_18 = arith.constant 0 : index
    %25 = vector.load %arg3[%c2_16, %c0_17, %c0_18] : memref<9x128x128xbf16, #tpu.memory_space<vmem>>, vector<1x128x128xbf16>
    %26 = vector.shape_cast %25 : vector<1x128x128xbf16> to vector<128x128xbf16>
    %cst_19 = arith.constant dense<0.000000e+00> : vector<256x128xf32>
    %27 = tpu.matmul %24, %26, %cst_19 {dimension_numbers = #tpu.dot_dimension_numbers<[1], [0], [0], [1], [0, 0, 1, 1], [], []>} : vector<256x128xbf16>, vector<128x128xbf16>, vector<256x128xf32> -> vector<256x128xf32>
    %28 = arith.addf %19, %27 : vector<256x128xf32>
    %c1_i32 = arith.constant 1 : i32
    %29 = arith.addi %0, %c1_i32 : i32
    %c0_20 = arith.constant 0 : index
    %30 = arith.index_cast %29 : i32 to index
    %c0_21 = arith.constant 0 : index
    %c0_22 = arith.constant 0 : index
    %31 = vector.load %arg2[%c0_20, %30, %c0_21, %c0_22] : memref<1x18x18x128xbf16, #tpu.memory_space<vmem>>, vector<1x16x16x128xbf16>
    %32 = vector.shape_cast %31 : vector<1x16x16x128xbf16> to vector<16x16x128xbf16>
    %33 = vector.shape_cast %32 : vector<16x16x128xbf16> to vector<256x128xbf16>
    %c3 = arith.constant 3 : index
    %c0_23 = arith.constant 0 : index
    %c0_24 = arith.constant 0 : index
    %34 = vector.load %arg3[%c3, %c0_23, %c0_24] : memref<9x128x128xbf16, #tpu.memory_space<vmem>>, vector<1x128x128xbf16>
    %35 = vector.shape_cast %34 : vector<1x128x128xbf16> to vector<128x128xbf16>
    %cst_25 = arith.constant dense<0.000000e+00> : vector<256x128xf32>
    %36 = tpu.matmul %33, %35, %cst_25 {dimension_numbers = #tpu.dot_dimension_numbers<[1], [0], [0], [1], [0, 0, 1, 1], [], []>} : vector<256x128xbf16>, vector<128x128xbf16>, vector<256x128xf32> -> vector<256x128xf32>
    %37 = arith.addf %28, %36 : vector<256x128xf32>
    %c1_i32_26 = arith.constant 1 : i32
    %38 = arith.addi %0, %c1_i32_26 : i32
    %c0_27 = arith.constant 0 : index
    %39 = arith.index_cast %38 : i32 to index
    %c1_28 = arith.constant 1 : index
    %c0_29 = arith.constant 0 : index
    %40 = vector.load %arg2[%c0_27, %39, %c1_28, %c0_29] : memref<1x18x18x128xbf16, #tpu.memory_space<vmem>>, vector<1x16x16x128xbf16>
    %41 = vector.shape_cast %40 : vector<1x16x16x128xbf16> to vector<16x16x128xbf16>
    %42 = vector.shape_cast %41 : vector<16x16x128xbf16> to vector<256x128xbf16>
    %c4 = arith.constant 4 : index
    %c0_30 = arith.constant 0 : index
    %c0_31 = arith.constant 0 : index
    %43 = vector.load %arg3[%c4, %c0_30, %c0_31] : memref<9x128x128xbf16, #tpu.memory_space<vmem>>, vector<1x128x128xbf16>
    %44 = vector.shape_cast %43 : vector<1x128x128xbf16> to vector<128x128xbf16>
    %cst_32 = arith.constant dense<0.000000e+00> : vector<256x128xf32>
    %45 = tpu.matmul %42, %44, %cst_32 {dimension_numbers = #tpu.dot_dimension_numbers<[1], [0], [0], [1], [0, 0, 1, 1], [], []>} : vector<256x128xbf16>, vector<128x128xbf16>, vector<256x128xf32> -> vector<256x128xf32>
    %46 = arith.addf %37, %45 : vector<256x128xf32>
    %c1_i32_33 = arith.constant 1 : i32
    %47 = arith.addi %0, %c1_i32_33 : i32
    %c0_34 = arith.constant 0 : index
    %48 = arith.index_cast %47 : i32 to index
    %c2_35 = arith.constant 2 : index
    %c0_36 = arith.constant 0 : index
    %49 = vector.load %arg2[%c0_34, %48, %c2_35, %c0_36] : memref<1x18x18x128xbf16, #tpu.memory_space<vmem>>, vector<1x16x16x128xbf16>
    %50 = vector.shape_cast %49 : vector<1x16x16x128xbf16> to vector<16x16x128xbf16>
    %51 = vector.shape_cast %50 : vector<16x16x128xbf16> to vector<256x128xbf16>
    %c5 = arith.constant 5 : index
    %c0_37 = arith.constant 0 : index
    %c0_38 = arith.constant 0 : index
    %52 = vector.load %arg3[%c5, %c0_37, %c0_38] : memref<9x128x128xbf16, #tpu.memory_space<vmem>>, vector<1x128x128xbf16>
    %53 = vector.shape_cast %52 : vector<1x128x128xbf16> to vector<128x128xbf16>
    %cst_39 = arith.constant dense<0.000000e+00> : vector<256x128xf32>
    %54 = tpu.matmul %51, %53, %cst_39 {dimension_numbers = #tpu.dot_dimension_numbers<[1], [0], [0], [1], [0, 0, 1, 1], [], []>} : vector<256x128xbf16>, vector<128x128xbf16>, vector<256x128xf32> -> vector<256x128xf32>
    %55 = arith.addf %46, %54 : vector<256x128xf32>
    %c2_i32 = arith.constant 2 : i32
    %56 = arith.addi %0, %c2_i32 : i32
    %c0_40 = arith.constant 0 : index
    %57 = arith.index_cast %56 : i32 to index
    %c0_41 = arith.constant 0 : index
    %c0_42 = arith.constant 0 : index
    %58 = vector.load %arg2[%c0_40, %57, %c0_41, %c0_42] : memref<1x18x18x128xbf16, #tpu.memory_space<vmem>>, vector<1x16x16x128xbf16>
    %59 = vector.shape_cast %58 : vector<1x16x16x128xbf16> to vector<16x16x128xbf16>
    %60 = vector.shape_cast %59 : vector<16x16x128xbf16> to vector<256x128xbf16>
    %c6 = arith.constant 6 : index
    %c0_43 = arith.constant 0 : index
    %c0_44 = arith.constant 0 : index
    %61 = vector.load %arg3[%c6, %c0_43, %c0_44] : memref<9x128x128xbf16, #tpu.memory_space<vmem>>, vector<1x128x128xbf16>
    %62 = vector.shape_cast %61 : vector<1x128x128xbf16> to vector<128x128xbf16>
    %cst_45 = arith.constant dense<0.000000e+00> : vector<256x128xf32>
    %63 = tpu.matmul %60, %62, %cst_45 {dimension_numbers = #tpu.dot_dimension_numbers<[1], [0], [0], [1], [0, 0, 1, 1], [], []>} : vector<256x128xbf16>, vector<128x128xbf16>, vector<256x128xf32> -> vector<256x128xf32>
    %64 = arith.addf %55, %63 : vector<256x128xf32>
    %c2_i32_46 = arith.constant 2 : i32
    %65 = arith.addi %0, %c2_i32_46 : i32
    %c0_47 = arith.constant 0 : index
    %66 = arith.index_cast %65 : i32 to index
    %c1_48 = arith.constant 1 : index
    %c0_49 = arith.constant 0 : index
    %67 = vector.load %arg2[%c0_47, %66, %c1_48, %c0_49] : memref<1x18x18x128xbf16, #tpu.memory_space<vmem>>, vector<1x16x16x128xbf16>
    %68 = vector.shape_cast %67 : vector<1x16x16x128xbf16> to vector<16x16x128xbf16>
    %69 = vector.shape_cast %68 : vector<16x16x128xbf16> to vector<256x128xbf16>
    %c7 = arith.constant 7 : index
    %c0_50 = arith.constant 0 : index
    %c0_51 = arith.constant 0 : index
    %70 = vector.load %arg3[%c7, %c0_50, %c0_51] : memref<9x128x128xbf16, #tpu.memory_space<vmem>>, vector<1x128x128xbf16>
    %71 = vector.shape_cast %70 : vector<1x128x128xbf16> to vector<128x128xbf16>
    %cst_52 = arith.constant dense<0.000000e+00> : vector<256x128xf32>
    %72 = tpu.matmul %69, %71, %cst_52 {dimension_numbers = #tpu.dot_dimension_numbers<[1], [0], [0], [1], [0, 0, 1, 1], [], []>} : vector<256x128xbf16>, vector<128x128xbf16>, vector<256x128xf32> -> vector<256x128xf32>
    %73 = arith.addf %64, %72 : vector<256x128xf32>
    %c2_i32_53 = arith.constant 2 : i32
    %74 = arith.addi %0, %c2_i32_53 : i32
    %c0_54 = arith.constant 0 : index
    %75 = arith.index_cast %74 : i32 to index
    %c2_55 = arith.constant 2 : index
    %c0_56 = arith.constant 0 : index
    %76 = vector.load %arg2[%c0_54, %75, %c2_55, %c0_56] : memref<1x18x18x128xbf16, #tpu.memory_space<vmem>>, vector<1x16x16x128xbf16>
    %77 = vector.shape_cast %76 : vector<1x16x16x128xbf16> to vector<16x16x128xbf16>
    %78 = vector.shape_cast %77 : vector<16x16x128xbf16> to vector<256x128xbf16>
    %c8 = arith.constant 8 : index
    %c0_57 = arith.constant 0 : index
    %c0_58 = arith.constant 0 : index
    %79 = vector.load %arg3[%c8, %c0_57, %c0_58] : memref<9x128x128xbf16, #tpu.memory_space<vmem>>, vector<1x128x128xbf16>
    %80 = vector.shape_cast %79 : vector<1x128x128xbf16> to vector<128x128xbf16>
    %cst_59 = arith.constant dense<0.000000e+00> : vector<256x128xf32>
    %81 = tpu.matmul %78, %80, %cst_59 {dimension_numbers = #tpu.dot_dimension_numbers<[1], [0], [0], [1], [0, 0, 1, 1], [], []>} : vector<256x128xbf16>, vector<128x128xbf16>, vector<256x128xf32> -> vector<256x128xf32>
    %82 = arith.addf %73, %81 : vector<256x128xf32>
    %c0_60 = arith.constant 0 : index
    %c0_61 = arith.constant 0 : index
    %c0_62 = arith.constant 0 : index
    %c0_63 = arith.constant 0 : index
    %83 = vector.load %arg4[%c0_60, %c0_61, %c0_62, %c0_63] : memref<1x1x256x128xf32, #tpu.memory_space<vmem>>, vector<1x1x256x128xf32>
    %84 = vector.shape_cast %83 : vector<1x1x256x128xf32> to vector<256x128xf32>
    %85 = vector.shape_cast %82 : vector<256x128xf32> to vector<1x1x256x128xf32>
    tpu.vector_store %arg4[%c0_60, %c0_61, %c0_62, %c0_63], %85 {strides = array<i32>} : memref<1x1x256x128xf32, #tpu.memory_space<vmem>>, vector<1x1x256x128xf32>,
    %cst_64 = arith.constant dense<0.000000e+00> : vector<128xf32>
    %86 = vector.multi_reduction <add>, %82, %cst_64 [0] : vector<256x128xf32> to vector<128xf32>
    %87 = vector.shape_cast %86 : vector<128xf32> to vector<1x128xf32>
    %c0_65 = arith.constant 0 : index
    %c0_66 = arith.constant 0 : index
    %c0_67 = arith.constant 0 : index
    %c0_68 = arith.constant 0 : index
    %88 = vector.load %arg5[%c0_65, %c0_66, %c0_67, %c0_68] : memref<1x1x2x128xf32, #tpu.memory_space<vmem>>, vector<1x1x1x128xf32>
    %89 = vector.shape_cast %88 : vector<1x1x1x128xf32> to vector<1x128xf32>
    %90 = vector.shape_cast %87 : vector<1x128xf32> to vector<1x1x1x128xf32>
    tpu.vector_store %arg5[%c0_65, %c0_66, %c0_67, %c0_68], %90 {strides = array<i32>} : memref<1x1x2x128xf32, #tpu.memory_space<vmem>>, vector<1x1x1x128xf32>,
    %91 = arith.mulf %82, %82 : vector<256x128xf32>
    %cst_69 = arith.constant dense<0.000000e+00> : vector<128xf32>
    %92 = vector.multi_reduction <add>, %91, %cst_69 [0] : vector<256x128xf32> to vector<128xf32>
    %93 = vector.shape_cast %92 : vector<128xf32> to vector<1x128xf32>
    %c0_70 = arith.constant 0 : index
    %c0_71 = arith.constant 0 : index
    %c1_72 = arith.constant 1 : index
    %c0_73 = arith.constant 0 : index
    %94 = vector.load %arg5[%c0_70, %c0_71, %c1_72, %c0_73] : memref<1x1x2x128xf32, #tpu.memory_space<vmem>>, vector<1x1x1x128xf32>
    %95 = vector.shape_cast %94 : vector<1x1x1x128xf32> to vector<1x128xf32>
    %96 = vector.shape_cast %93 : vector<1x128xf32> to vector<1x1x1x128xf32>
    tpu.vector_store %arg5[%c0_70, %c0_71, %c1_72, %c0_73], %96 {strides = array<i32>} : memref<1x1x2x128xf32, #tpu.memory_space<vmem>>, vector<1x1x1x128xf32>,
    return
  }
  func.func @transform_0(%arg0: i32, %arg1: i32) -> (i32, i32, i32, i32) {
    %c0_i32 = arith.constant 0 : i32
    %c0_i32_0 = arith.constant 0 : i32
    %c0_i32_1 = arith.constant 0 : i32
    %c0_i32_2 = arith.constant 0 : i32
    return %arg0, %c0_i32, %c0_i32_0, %c0_i32_1 : i32, i32, i32, i32
  }
  func.func @transform_1(%arg0: i32, %arg1: i32) -> (i32, i32, i32) {
    %c0_i32 = arith.constant 0 : i32
    %c0_i32_0 = arith.constant 0 : i32
    %c0_i32_1 = arith.constant 0 : i32
    %c0_i32_2 = arith.constant 0 : i32
    return %c0_i32, %c0_i32_0, %c0_i32_1 : i32, i32, i32
  }
  func.func @transform_2(%arg0: i32, %arg1: i32) -> (i32, i32, i32, i32) {
    %c0_i32 = arith.constant 0 : i32
    %c0_i32_0 = arith.constant 0 : i32
    %c0_i32_1 = arith.constant 0 : i32
    return %arg0, %arg1, %c0_i32, %c0_i32_0 : i32, i32, i32, i32
  }
  func.func @transform_3(%arg0: i32, %arg1: i32) -> (i32, i32, i32, i32) {
    %c0_i32 = arith.constant 0 : i32
    %c0_i32_0 = arith.constant 0 : i32
    %c0_i32_1 = arith.constant 0 : i32
    return %arg0, %arg1, %c0_i32, %c0_i32_0 : i32, i32, i32, i32
  }
}

module attributes {stable_mosaic.version = 11 : i64} {
  func.func @_bn_act_kernel(%arg0: i32, %arg1: i32, %arg2: memref<1x1x256x128xf32, #tpu.memory_space<vmem>>, %arg3: memref<2x128xf32, #tpu.memory_space<vmem>>, %arg4: memref<1x1x256x128xf32, #tpu.memory_space<vmem>>) attributes {dimension_semantics = [#tpu.dimension_semantics<parallel>, #tpu.dimension_semantics<parallel>], iteration_bounds = array<i64: 2, 1>, scalar_prefetch = 0 : i64, scratch_operands = 0 : i64, tpu.core_type = #tpu.core_type<tc>, window_params = [{transform_indices = @transform_0, window_bounds = array<i64: 1, 1, 256, 128>}, {pipeline_mode = #tpu.pipeline_mode<synchronous>, transform_indices = @transform_1, window_bounds = array<i64: 2, 128>}, {transform_indices = @transform_2, window_bounds = array<i64: 1, 1, 256, 128>}]} {
    %c0 = arith.constant 0 : index
    %c0_0 = arith.constant 0 : index
    %c0_1 = arith.constant 0 : index
    %c0_2 = arith.constant 0 : index
    %0 = vector.load %arg2[%c0, %c0_0, %c0_1, %c0_2] : memref<1x1x256x128xf32, #tpu.memory_space<vmem>>, vector<1x1x256x128xf32>
    %1 = vector.shape_cast %0 : vector<1x1x256x128xf32> to vector<256x128xf32>
    %c0_3 = arith.constant 0 : index
    %c0_4 = arith.constant 0 : index
    %2 = vector.load %arg3[%c0_3, %c0_4] : memref<2x128xf32, #tpu.memory_space<vmem>>, vector<1x128xf32>
    %3 = vector.broadcast %2 : vector<1x128xf32> to vector<256x128xf32>
    %4 = arith.mulf %1, %3 : vector<256x128xf32>
    %c1 = arith.constant 1 : index
    %c0_5 = arith.constant 0 : index
    %5 = vector.load %arg3[%c1, %c0_5] : memref<2x128xf32, #tpu.memory_space<vmem>>, vector<1x128xf32>
    %6 = vector.broadcast %5 : vector<1x128xf32> to vector<256x128xf32>
    %7 = arith.addf %4, %6 : vector<256x128xf32>
    %cst = arith.constant 0.000000e+00 : f32
    %8 = vector.broadcast %cst : f32 to vector<256x128xf32>
    %9 = arith.cmpf oge, %7, %8 : vector<256x128xf32>
    %cst_6 = arith.constant 2.000000e-01 : f32
    %10 = vector.broadcast %cst_6 : f32 to vector<256x128xf32>
    %11 = arith.mulf %10, %7 : vector<256x128xf32>
    %12 = arith.select %9, %7, %11 : vector<256x128xi1>, vector<256x128xf32>
    %c0_7 = arith.constant 0 : index
    %c0_8 = arith.constant 0 : index
    %c0_9 = arith.constant 0 : index
    %c0_10 = arith.constant 0 : index
    %13 = vector.load %arg4[%c0_7, %c0_8, %c0_9, %c0_10] : memref<1x1x256x128xf32, #tpu.memory_space<vmem>>, vector<1x1x256x128xf32>
    %14 = vector.shape_cast %13 : vector<1x1x256x128xf32> to vector<256x128xf32>
    %15 = vector.shape_cast %12 : vector<256x128xf32> to vector<1x1x256x128xf32>
    tpu.vector_store %arg4[%c0_7, %c0_8, %c0_9, %c0_10], %15 {strides = array<i32>} : memref<1x1x256x128xf32, #tpu.memory_space<vmem>>, vector<1x1x256x128xf32>,
    return
  }
  func.func @transform_0(%arg0: i32, %arg1: i32) -> (i32, i32, i32, i32) {
    %c0_i32 = arith.constant 0 : i32
    %c0_i32_0 = arith.constant 0 : i32
    %c0_i32_1 = arith.constant 0 : i32
    return %arg0, %arg1, %c0_i32, %c0_i32_0 : i32, i32, i32, i32
  }
  func.func @transform_1(%arg0: i32, %arg1: i32) -> (i32, i32) {
    %c0_i32 = arith.constant 0 : i32
    %c0_i32_0 = arith.constant 0 : i32
    %c0_i32_1 = arith.constant 0 : i32
    return %c0_i32, %c0_i32_0 : i32, i32
  }
  func.func @transform_2(%arg0: i32, %arg1: i32) -> (i32, i32, i32, i32) {
    %c0_i32 = arith.constant 0 : i32
    %c0_i32_0 = arith.constant 0 : i32
    %c0_i32_1 = arith.constant 0 : i32
    return %arg0, %arg1, %c0_i32, %c0_i32_0 : i32, i32, i32, i32
  }
}

module attributes {stable_mosaic.version = 11 : i64} {
  func.func @_bn_finalize_kernel(%arg0: i32, %arg1: memref<2x1x2x128xf32, #tpu.memory_space<vmem>>, %arg2: memref<1x128xf32, #tpu.memory_space<vmem>>, %arg3: memref<1x128xf32, #tpu.memory_space<vmem>>, %arg4: memref<2x128xf32, #tpu.memory_space<vmem>>) attributes {dimension_semantics = [#tpu.dimension_semantics<arbitrary>], iteration_bounds = array<i64: 1>, scalar_prefetch = 0 : i64, scratch_operands = 0 : i64, tpu.core_type = #tpu.core_type<tc>, window_params = [{pipeline_mode = #tpu.pipeline_mode<synchronous>, transform_indices = @transform_0, window_bounds = array<i64: 2, 1, 2, 128>}, {pipeline_mode = #tpu.pipeline_mode<synchronous>, transform_indices = @transform_1, window_bounds = array<i64: 1, 128>}, {pipeline_mode = #tpu.pipeline_mode<synchronous>, transform_indices = @transform_2, window_bounds = array<i64: 1, 128>}, {pipeline_mode = #tpu.pipeline_mode<synchronous>, transform_indices = @transform_3, window_bounds = array<i64: 2, 128>}]} {
    %c0 = arith.constant 0 : index
    %c0_0 = arith.constant 0 : index
    %c0_1 = arith.constant 0 : index
    %c0_2 = arith.constant 0 : index
    %0 = vector.load %arg1[%c0, %c0_0, %c0_1, %c0_2] : memref<2x1x2x128xf32, #tpu.memory_space<vmem>>, vector<2x1x2x128xf32>
    %cst = arith.constant dense<0.000000e+00> : vector<2x128xf32>
    %1 = vector.multi_reduction <add>, %0, %cst [0, 1] : vector<2x1x2x128xf32> to vector<2x128xf32>
    %2 = vector.extract_strided_slice %1 {offsets = [0, 0], sizes = [1, 128], strides = [1, 1]} : vector<2x128xf32> to vector<1x128xf32>
    %cst_3 = arith.constant 0.001953125 : f32
    %3 = vector.broadcast %cst_3 : f32 to vector<1x128xf32>
    %4 = arith.mulf %2, %3 : vector<1x128xf32>
    %5 = vector.extract_strided_slice %1 {offsets = [1, 0], sizes = [1, 128], strides = [1, 1]} : vector<2x128xf32> to vector<1x128xf32>
    %cst_4 = arith.constant 0.001953125 : f32
    %6 = vector.broadcast %cst_4 : f32 to vector<1x128xf32>
    %7 = arith.mulf %5, %6 : vector<1x128xf32>
    %8 = arith.mulf %4, %4 : vector<1x128xf32>
    %9 = arith.subf %7, %8 : vector<1x128xf32>
    %c0_5 = arith.constant 0 : index
    %c0_6 = arith.constant 0 : index
    %10 = vector.load %arg2[%c0_5, %c0_6] : memref<1x128xf32, #tpu.memory_space<vmem>>, vector<1x128xf32>
    %cst_7 = arith.constant 9.99999974E-6 : f32
    %11 = vector.broadcast %cst_7 : f32 to vector<1x128xf32>
    %12 = arith.addf %9, %11 : vector<1x128xf32>
    %13 = math.rsqrt %12 : vector<1x128xf32>
    %14 = arith.mulf %10, %13 : vector<1x128xf32>
    %c0_8 = arith.constant 0 : index
    %c0_9 = arith.constant 0 : index
    %15 = vector.load %arg4[%c0_8, %c0_9] : memref<2x128xf32, #tpu.memory_space<vmem>>, vector<1x128xf32>
    tpu.vector_store %arg4[%c0_8, %c0_9], %14 {strides = array<i32>} : memref<2x128xf32, #tpu.memory_space<vmem>>, vector<1x128xf32>,
    %c0_10 = arith.constant 0 : index
    %c0_11 = arith.constant 0 : index
    %16 = vector.load %arg3[%c0_10, %c0_11] : memref<1x128xf32, #tpu.memory_space<vmem>>, vector<1x128xf32>
    %17 = arith.mulf %4, %14 : vector<1x128xf32>
    %18 = arith.subf %16, %17 : vector<1x128xf32>
    %c1 = arith.constant 1 : index
    %c0_12 = arith.constant 0 : index
    %19 = vector.load %arg4[%c1, %c0_12] : memref<2x128xf32, #tpu.memory_space<vmem>>, vector<1x128xf32>
    tpu.vector_store %arg4[%c1, %c0_12], %18 {strides = array<i32>} : memref<2x128xf32, #tpu.memory_space<vmem>>, vector<1x128xf32>,
    return
  }
  func.func @transform_0(%arg0: i32) -> (i32, i32, i32, i32) {
    %c0_i32 = arith.constant 0 : i32
    %c0_i32_0 = arith.constant 0 : i32
    %c0_i32_1 = arith.constant 0 : i32
    %c0_i32_2 = arith.constant 0 : i32
    %c0_i32_3 = arith.constant 0 : i32
    return %c0_i32, %c0_i32_0, %c0_i32_1, %c0_i32_2 : i32, i32, i32, i32
  }
  func.func @transform_1(%arg0: i32) -> (i32, i32) {
    %c0_i32 = arith.constant 0 : i32
    %c0_i32_0 = arith.constant 0 : i32
    %c0_i32_1 = arith.constant 0 : i32
    return %c0_i32, %c0_i32_0 : i32, i32
  }
  func.func @transform_2(%arg0: i32) -> (i32, i32) {
    %c0_i32 = arith.constant 0 : i32
    %c0_i32_0 = arith.constant 0 : i32
    %c0_i32_1 = arith.constant 0 : i32
    return %c0_i32, %c0_i32_0 : i32, i32
  }
  func.func @transform_3(%arg0: i32) -> (i32, i32) {
    %c0_i32 = arith.constant 0 : i32
    %c0_i32_0 = arith.constant 0 : i32
    %c0_i32_1 = arith.constant 0 : i32
    return %c0_i32, %c0_i32_0 : i32, i32
  }
}

</mosaic_0001>

<llo_original>
// kernel: conv_block_forward.4
$region0: #{conv_block_forward.4}
  #allocation0 [shape = 'u32[]', space=smem, size = 0x4, offset = 0x4, fixed_abs, tag = 'smem constant byte address 0x4 - core index']
  #allocation1 [shape = 'u32[144,128]{1,0:T(1,128)}', space=vmem, size = 0x12000, scoped, tag = 'internal scratch']
  %s0 = inlined_call_operand.vmem [shape: f32[2,1,2,128], index: 0, kind: input, shape index: {}]
  %s1 = inlined_call_operand.vmem [shape: f32[1,128], index: 1, kind: input, shape index: {}]
  %s2 = inlined_call_operand.vmem [shape: f32[1,128], index: 2, kind: input, shape index: {}]
  %s3 = inlined_call_operand.vmem [shape: f32[2,128], index: 3, kind: output, shape index: {}]
  %s4 = sld [smem:[#allocation0]]
  $region22: #{conv_block_forward.4} parent=0
    _
  %s6 = ssub.s32 1, %s4
  %s7 = scalar_select 0, %s6, %s4
  // Predicated region
  $region2: #{conv_block_forward.4} parent=0 // pred_check
    _
  $region3: #{conv_block_forward.4} parent=0 // pred_check_branch
    %9 = sbr.rel (0) target = $region5
  $region4: #{conv_block_forward.4} parent=0 // pred_region
    _
  $region5: #{conv_block_forward.4} parent=0 // pred_fallthru
    _
  // Predicated region
  $region6: #{conv_block_forward.4} parent=0 // pred_check
    _
  $region7: #{conv_block_forward.4} parent=0 // pred_check_branch
    %11 = sbr.rel (0) target = $region9
  $region8: #{conv_block_forward.4} parent=0 // pred_region
    _
  $region9: #{conv_block_forward.4} parent=0 // pred_fallthru
    _
  // Predicated region
  $region10: #{conv_block_forward.4} parent=0 // pred_check
    _
  $region11: #{conv_block_forward.4} parent=0 // pred_check_branch
    %13 = sbr.rel (0) target = $region13
  $region12: #{conv_block_forward.4} parent=0 // pred_region
    _
  $region13: #{conv_block_forward.4} parent=0 // pred_fallthru
    _
  %v14 = vld [vmem:[%s0] sm:$0x3]
  %v15 = vld [vmem:[%s0 + $0x2] sm:$0x3]
  %vm16 = vcmask 1041408
  %v17 = vsel %vm16, %v14, 0.0
  %v18 = vsel %vm16, %v15, 0.0
  %v19 = vadd.f32 %v17, %v18
  %v20 = vmul.f32 %v19, 0.001953125
  %v21 = vmul.f32 %v20, %v20
  %v23 = vrot.slane %v21, 7
  %v25 = vsub.f32 %v20, %v23
  %v26 = vld [vmem:[%s1] sm:$0x1]
  %v27 = vadd.f32 %v25, 1e-05
  %v28 = vrsqrt.pop %v27
  %v31 = vunpack.c.l.s4 1966171168
  %v32 = vunpack.c.0.s8 %v31
  %v33 = vlaneseq
  %v34 = vshrl.u32 %v33, 7
  %v35 = vsub.s32 %v32, %v34
  %v36 = vrot.slane %v28, %v35
  %v37 = vcombine.high %v36, %v36
  %v39 = vunpack.c.l.s4 1966171168
  %v40 = vunpack.c.0.s8 %v39
  %v41 = vlaneseq
  %v42 = vshrl.u32 %v41, 7
  %v43 = vsub.s32 %v40, %v42
  %v44 = vrot.slane %v37, %v43
  %v46 = vmul.f32 %v26, %v44
  %47 = vst [vmem:[%s3] sm:$0x1] %v46
  %v48 = vld [vmem:[%s2] sm:$0x1]
  %v49 = vmul.f32 %v20, %v46
  %v50 = vsub.f32 %v48, %v49
  %51 = vst [vmem:[%s3 + $0x1] sm:$0x1] %v50
  // Predicated region
  $region14: #{conv_block_forward.4} parent=0 // pred_check
    _
  $region15: #{conv_block_forward.4} parent=0 // pred_check_branch
    %53 = sbr.rel (0) target = $region17
  $region16: #{conv_block_forward.4} parent=0 // pred_region
    _
  $region17: #{conv_block_forward.4} parent=0 // pred_fallthru
    _
  // Predicated region
  $region18: #{conv_block_forward.4} parent=0 // pred_check
    _
  $region19: #{conv_block_forward.4} parent=0 // pred_check_branch
    %55 = sbr.rel (0) target = $region21
  $region20: #{conv_block_forward.4} parent=0 // pred_region
    _
  $region21: #{conv_block_forward.4} parent=0 // pred_fallthru
    _

// kernel: conv_block_forward.5
$region0: #{conv_block_forward.5}
  #allocation0 [shape = 'u32[]', space=smem, size = 0x4, offset = 0x4, fixed_abs, tag = 'smem constant byte address 0x4 - core index']
  #allocation1 [shape = 'u32[144,128]{1,0:T(1,128)}', space=vmem, size = 0x12000, scoped, tag = 'internal scratch']
  %s0 = inlined_call_operand.vmem [shape: f32[2,1,256,128], index: 0, kind: input, shape index: {}, may-alias: {0,2}]
  %s1 = inlined_call_operand.vmem [shape: f32[2,128], index: 1, kind: input, shape index: {}]
  %s2 = inlined_call_operand.vmem [shape: f32[2,1,256,128], index: 2, kind: output, shape index: {}, may-alias: {0,2}]
  %s3 = sld [smem:[#allocation0]]
  $region41: #{conv_block_forward.5} parent=0
    _
  %s5 = ssub.s32 1, %s3
  %s6 = scalar_select 0, %s5, %s3
  loop: start=0, step=1, limit=4
  $region2: #{conv_block_forward.5} parent=0 // loop_pre_header
    _
  $region3: #{conv_block_forward.5} parent=0 // loop_header
    %s8 = sphi 0, %s12
    %p9 = scmp.ge.s32.totalorder %s8, 4
    %s15 = sphi 0, %s27
    %s16 = sphi 0, %s23
    %s17 = sphi 0, %s15
    %s18 = sphi 0, %s16
    %s19 = sphi 0, %s17
    %s20 = sphi 0, %s18
    %s32 = sphi 0, %s34
    %s35 = sphi 0, %s32
    %s36 = sphi 0, %s35
    %s52 = sphi 0, %s36
    %s56 = sphi 0, %s56
    %s58 = sphi 0, %s56
    %s59 = sphi 0, %s58
    %s73 = sphi 0, %s59
    %s81 = sphi 0, %s83
    %s84 = sphi 0, %s81
    %s85 = sphi 0, %s84
    %s101 = sphi 0, %s85
  $region4: #{conv_block_forward.5} parent=0 // loop_header_branch
    %11 = sbr.rel (%p9) target = $region8
  $region5: #{conv_block_forward.5} parent=0 // loop_body
    %s13 = ssub.s32 %s8, 1
    %s14 = ssub.s32 %s8, 2
    %s21 = sadd.s32 1, %s16
    %p22 = scmp.ge.s32.totalorder %s21, 1
    %s23 = scalar_select %p22, 0, %s21
    %s24 = sadd.s32 1, %s15
    %s25 = scalar_select %p22, %s24, %s15
    %p26 = scmp.ge.s32.totalorder %s25, 2
    %s27 = scalar_select %p26, 0, %s25
    %s28 = ssub.s32 %s15, %s27
    %s29 = ssub.s32 %s16, %s23
    %s30 = sor.u32 %s28, %s29
    %p31 = scmp.eq.s32.totalorder %s30, 0
    %s33 = sadd.s32 %s32, 1
    %s34 = scalar_select %p31, %s32, %s33
    %p37 = pneg %p31
    %p38 = scmp.eq.s32.totalorder %s8, 1
    %p39 = por %p37, %p38
    %p40 = scmp.ne.s32.totalorder %s32, %s35
    %p41 = scmp.eq.s32.totalorder %s8, 0
    %p42 = por %p40, %p41
    %p43 = scmp.ne.s32.totalorder %s32, %s35
    %p44 = scmp.eq.s32.totalorder %s13, 1
    %p45 = por %p43, %p44
    %p46 = scmp.ne.s32.totalorder %s35, %s36
    %p47 = scmp.eq.s32.totalorder %s13, 0
    %p48 = por %p46, %p47
    %p49 = scmp.ne.s32.totalorder %s35, %s36
    %p50 = scmp.eq.s32.totalorder %s14, 1
    %p51 = por %p49, %p50
    %p53 = scmp.ne.s32.totalorder %s36, %s52
    %p54 = scmp.eq.s32.totalorder %s14, 0
    %p55 = por %p53, %p54
    %s57 = sadd.s32 %s56, 1
    %p60 = scmp.eq.s32.totalorder %s8, 1
    %p61 = scmp.ne.s32.totalorder %s56, %s58
    %p62 = scmp.eq.s32.totalorder %s8, 0
    %p63 = por %p61, %p62
    %p64 = scmp.ne.s32.totalorder %s56, %s58
    %p65 = scmp.eq.s32.totalorder %s13, 1
    %p66 = por %p64, %p65
    %p67 = scmp.ne.s32.totalorder %s58, %s59
    %p68 = scmp.eq.s32.totalorder %s13, 0
    %p69 = por %p67, %p68
    %p70 = scmp.ne.s32.totalorder %s58, %s59
    %p71 = scmp.eq.s32.totalorder %s14, 1
    %p72 = por %p70, %p71
    %p74 = scmp.ne.s32.totalorder %s59, %s73
    %p75 = scmp.eq.s32.totalorder %s14, 0
    %p76 = por %p74, %p75
    %s77 = ssub.s32 %s15, %s27
    %s78 = ssub.s32 %s16, %s23
    %s79 = sor.u32 %s77, %s78
    %p80 = scmp.eq.s32.totalorder %s79, 0
    %s82 = sadd.s32 %s81, 1
    %s83 = scalar_select %p80, %s81, %s82
    %p86 = pneg %p80
    %p87 = scmp.eq.s32.totalorder %s8, 1
    %p88 = por %p86, %p87
    %p89 = scmp.ne.s32.totalorder %s81, %s84
    %p90 = scmp.eq.s32.totalorder %s8, 0
    %p91 = por %p89, %p90
    %p92 = scmp.ne.s32.totalorder %s81, %s84
    %p93 = scmp.eq.s32.totalorder %s13, 1
    %p94 = por %p92, %p93
    %p95 = scmp.ne.s32.totalorder %s84, %s85
    %p96 = scmp.eq.s32.totalorder %s13, 0
    %p97 = por %p95, %p96
    %p98 = scmp.ne.s32.totalorder %s84, %s85
    %p99 = scmp.eq.s32.totalorder %s14, 1
    %p100 = por %p98, %p99
    %p102 = scmp.ne.s32.totalorder %s85, %s101
    %p103 = scmp.eq.s32.totalorder %s14, 0
    %p104 = por %p102, %p103
    %p105 = scmp.le.s32.totalorder 1, %s8
    %p106 = scmp.lt.s32.totalorder %s8, 3
    %p107 = pnand %p105, %p106
    %p108 = pneg %p107
    // Predicated region
    $region9: #{conv_block_forward.5} parent=5 // pred_check
      _
    $region10: #{conv_block_forward.5} parent=5 // pred_check_branch
      %110 = sbr.rel (%p107) target = $region12
    $region11: #{conv_block_forward.5} parent=5 // pred_region
      %s111 = ssub.s32 %s8, 1
      // Predicated region
      $region13: #{conv_block_forward.5} parent=11 // pred_check
        %p112 = pneg %p69
      $region14: #{conv_block_forward.5} parent=11 // pred_check_branch
        %114 = sbr.rel (%p112) target = $region16
      $region15: #{conv_block_forward.5} parent=11 // pred_region
        _
      $region16: #{conv_block_forward.5} parent=11 // pred_fallthru
        _
    $region12: #{conv_block_forward.5} parent=5 // pred_fallthru
      _
    %p115 = scmp.lt.s32.totalorder %s8, 2
    // Predicated region
    $region17: #{conv_block_forward.5} parent=5 // pred_check
      %p116 = pneg %p115
    $region18: #{conv_block_forward.5} parent=5 // pred_check_branch
      %118 = sbr.rel (%p116) target = $region20
    $region19: #{conv_block_forward.5} parent=5 // pred_region
      // Predicated region
      $region21: #{conv_block_forward.5} parent=19 // pred_check
        %p119 = pneg %p42
      $region22: #{conv_block_forward.5} parent=19 // pred_check_branch
        %121 = sbr.rel (%p119) target = $region24
      $region23: #{conv_block_forward.5} parent=19 // pred_region
        %p122 = scmp.lt.s32.totalorder %s15, 1
        %s123 = scalar_select %p122, %s15, 1
        %p124 = scmp.lt.s32.totalorder %s16, 0
        %s125 = scalar_select %p124, %s16, 0
        %s126 = smul.addr %s125, 32
        %s127 = smul.addr %s123, 32
        %s128 = sadd.s32 %s126, %s127
        %s129 = smul.addr %s128, 8
        %s130 = scalar_lea.vmem %s0, %s129
      $region24: #{conv_block_forward.5} parent=19 // pred_fallthru
        _
    $region20: #{conv_block_forward.5} parent=5 // pred_fallthru
      _
    %p131 = scmp.le.s32.totalorder 1, %s8
    %p132 = scmp.lt.s32.totalorder %s8, 3
    %p133 = pnand %p131, %p132
    %p134 = pneg %p133
    // Predicated region
    $region25: #{conv_block_forward.5} parent=5 // pred_check
      _
    $region26: #{conv_block_forward.5} parent=5 // pred_check_branch
      %136 = sbr.rel (%p133) target = $region28
    $region27: #{conv_block_forward.5} parent=5 // pred_region
      %s137 = ssub.s32 %s8, 1
      %p138 = scmp.lt.s32.totalorder %s17, 1
      %s139 = scalar_select %p138, %s17, 1
      %p140 = scmp.lt.s32.totalorder %s18, 0
      %s141 = scalar_select %p140, %s18, 0
      %s142 = smul.addr %s141, 32
      %s143 = smul.addr %s139, 32
      %s144 = sadd.s32 %s142, %s143
      %s145 = smul.addr %s144, 8
      %s146 = scalar_lea.vmem %s0, %s145
      %p147 = pneg %p48
      %p148 = pneg %p45
      %p149 = pneg %p69
      %p150 = pneg %p66
      %p151 = pneg %p97
      %p152 = pneg %p94
      %p153 = scmp.lt.s32.totalorder %s17, 1
      %s154 = scalar_select %p153, %s17, 1
      %p155 = scmp.lt.s32.totalorder %s18, 0
      %s156 = scalar_select %p155, %s18, 0
      %s157 = smul.addr %s156, 32
      %s158 = smul.addr %s154, 32
      %s159 = sadd.s32 %s157, %s158
      %s160 = smul.addr %s159, 8
      %s161 = scalar_lea.vmem %s2, %s160
      %p162 = scmp.lt.s32.totalorder %s17, 1
      %s163 = scalar_select %p162, %s17, 1
      %p164 = scmp.lt.s32.totalorder %s18, 0
      %s165 = scalar_select %p164, %s18, 0
      %s166 = smul.addr %s165, 32
      %s167 = smul.addr %s163, 32
      %s168 = sadd.s32 %s166, %s167
      %s169 = smul.addr %s168, 8
      %s170 = scalar_lea.vmem %s0, %s169
      %p171 = scmp.lt.s32.totalorder %s17, 1
      %s172 = scalar_select %p171, %s17, 1
      %p173 = scmp.lt.s32.totalorder %s18, 0
      %s174 = scalar_select %p173, %s18, 0
      %s175 = smul.addr %s174, 32
      %s176 = smul.addr %s172, 32
      %s177 = sadd.s32 %s175, %s176
      %s178 = smul.addr %s177, 8
      %s179 = scalar_lea.vmem %s2, %s178
      %v180 = vld [vmem:[%s170] sm:$0xff]
      %v181 = vld [vmem:[%s170 + $0x8] sm:$0xff]
      %v182 = vld [vmem:[%s170 + $0x10] sm:$0xff]
      %v183 = vld [vmem:[%s170 + $0x18] sm:$0xff]
      %v184 = vld [vmem:[%s170 + $0x20] sm:$0xff]
      %v185 = vld [vmem:[%s170 + $0x28] sm:$0xff]
      %v186 = vld [vmem:[%s170 + $0x30] sm:$0xff]
      %v187 = vld [vmem:[%s170 + $0x38] sm:$0xff]
      %v188 = vld [vmem:[%s170 + $0x40] sm:$0xff]
      %v189 = vld [vmem:[%s170 + $0x48] sm:$0xff]
      %v190 = vld [vmem:[%s170 + $0x50] sm:$0xff]
      %v191 = vld [vmem:[%s170 + $0x58] sm:$0xff]
      %v192 = vld [vmem:[%s170 + $0x60] sm:$0xff]
      %v193 = vld [vmem:[%s170 + $0x68] sm:$0xff]
      %v194 = vld [vmem:[%s170 + $0x70] sm:$0xff]
      %v195 = vld [vmem:[%s170 + $0x78] sm:$0xff]
      %v196 = vld [vmem:[%s170 + $0x80] sm:$0xff]
      %v197 = vld [vmem:[%s170 + $0x88] sm:$0xff]
      %v198 = vld [vmem:[%s170 + $0x90] sm:$0xff]
      %v199 = vld [vmem:[%s170 + $0x98] sm:$0xff]
      %v200 = vld [vmem:[%s170 + $0xa0] sm:$0xff]
      %v201 = vld [vmem:[%s170 + $0xa8] sm:$0xff]
      %v202 = vld [vmem:[%s170 + $0xb0] sm:$0xff]
      %v203 = vld [vmem:[%s170 + $0xb8] sm:$0xff]
      %v204 = vld [vmem:[%s170 + $0xc0] sm:$0xff]
      %v205 = vld [vmem:[%s170 + $0xc8] sm:$0xff]
      %v206 = vld [vmem:[%s170 + $0xd0] sm:$0xff]
      %v207 = vld [vmem:[%s170 + $0xd8] sm:$0xff]
      %v208 = vld [vmem:[%s170 + $0xe0] sm:$0xff]
      %v209 = vld [vmem:[%s170 + $0xe8] sm:$0xff]
      %v210 = vld [vmem:[%s170 + $0xf0] sm:$0xff]
      %v211 = vld [vmem:[%s170 + $0xf8] sm:$0xff]
      %v212 = vld [vmem:[%s1] sm:$0x1]
      %v213 = vlaneseq
      %v214 = vshrl.u32 %v213, 7
      %v215 = vsub.s32 0, %v214
      %v216 = vrot.slane %v212, %v215
      %v217 = vmul.f32 %v180, %v216
      %v218 = vmul.f32 %v181, %v216
      %v219 = vmul.f32 %v182, %v216
      %v220 = vmul.f32 %v183, %v216
      %v221 = vmul.f32 %v184, %v216
      %v222 = vmul.f32 %v185, %v216
      %v223 = vmul.f32 %v186, %v216
      %v224 = vmul.f32 %v187, %v216
      %v225 = vmul.f32 %v188, %v216
      %v226 = vmul.f32 %v189, %v216
      %v227 = vmul.f32 %v190, %v216
      %v228 = vmul.f32 %v191, %v216
      %v229 = vmul.f32 %v192, %v216
      %v230 = vmul.f32 %v193, %v216
      %v231 = vmul.f32 %v194, %v216
      %v232 = vmul.f32 %v195, %v216
      %v233 = vmul.f32 %v196, %v216
      %v234 = vmul.f32 %v197, %v216
      %v235 = vmul.f32 %v198, %v216
      %v236 = vmul.f32 %v199, %v216
      %v237 = vmul.f32 %v200, %v216
      %v238 = vmul.f32 %v201, %v216
      %v239 = vmul.f32 %v202, %v216
      %v240 = vmul.f32 %v203, %v216
      %v241 = vmul.f32 %v204, %v216
      %v242 = vmul.f32 %v205, %v216
      %v243 = vmul.f32 %v206, %v216
      %v244 = vmul.f32 %v207, %v216
      %v245 = vmul.f32 %v208, %v216
      %v246 = vmul.f32 %v209, %v216
      %v247 = vmul.f32 %v210, %v216
      %v248 = vmul.f32 %v211, %v216
      %v249 = vld [vmem:[%s1 + $0x1] sm:$0x1]
      %v250 = vlaneseq
      %v251 = vshrl.u32 %v250, 7
      %v252 = vsub.s32 0, %v251
      %v253 = vrot.slane %v249, %v252
      %v254 = vadd.f32 %v217, %v253
      %v255 = vadd.f32 %v218, %v253
      %v256 = vadd.f32 %v219, %v253
      %v257 = vadd.f32 %v220, %v253
      %v258 = vadd.f32 %v221, %v253
      %v259 = vadd.f32 %v222, %v253
      %v260 = vadd.f32 %v223, %v253
      %v261 = vadd.f32 %v224, %v253
      %v262 = vadd.f32 %v225, %v253
      %v263 = vadd.f32 %v226, %v253
      %v264 = vadd.f32 %v227, %v253
      %v265 = vadd.f32 %v228, %v253
      %v266 = vadd.f32 %v229, %v253
      %v267 = vadd.f32 %v230, %v253
      %v268 = vadd.f32 %v231, %v253
      %v269 = vadd.f32 %v232, %v253
      %v270 = vadd.f32 %v233, %v253
      %v271 = vadd.f32 %v234, %v253
      %v272 = vadd.f32 %v235, %v253
      %v273 = vadd.f32 %v236, %v253
      %v274 = vadd.f32 %v237, %v253
      %v275 = vadd.f32 %v238, %v253
      %v276 = vadd.f32 %v239, %v253
      %v277 = vadd.f32 %v240, %v253
      %v278 = vadd.f32 %v241, %v253
      %v279 = vadd.f32 %v242, %v253
      %v280 = vadd.f32 %v243, %v253
      %v281 = vadd.f32 %v244, %v253
      %v282 = vadd.f32 %v245, %v253
      %v283 = vadd.f32 %v246, %v253
      %v284 = vadd.f32 %v247, %v253
      %v285 = vadd.f32 %v248, %v253
      %vm286 = vcmp.ge.f32.partialorder %v254, 0.0
      %vm287 = vcmp.ge.f32.partialorder %v255, 0.0
      %vm288 = vcmp.ge.f32.partialorder %v256, 0.0
      %vm289 = vcmp.ge.f32.partialorder %v257, 0.0
      %vm290 = vcmp.ge.f32.partialorder %v258, 0.0
      %vm291 = vcmp.ge.f32.partialorder %v259, 0.0
      %vm292 = vcmp.ge.f32.partialorder %v260, 0.0
      %vm293 = vcmp.ge.f32.partialorder %v261, 0.0
      %vm294 = vcmp.ge.f32.partialorder %v262, 0.0
      %vm295 = vcmp.ge.f32.partialorder %v263, 0.0
      %vm296 = vcmp.ge.f32.partialorder %v264, 0.0
      %vm297 = vcmp.ge.f32.partialorder %v265, 0.0
      %vm298 = vcmp.ge.f32.partialorder %v266, 0.0
      %vm299 = vcmp.ge.f32.partialorder %v267, 0.0
      %vm300 = vcmp.ge.f32.partialorder %v268, 0.0
      %vm301 = vcmp.ge.f32.partialorder %v269, 0.0
      %vm302 = vcmp.ge.f32.partialorder %v270, 0.0
      %vm303 = vcmp.ge.f32.partialorder %v271, 0.0
      %vm304 = vcmp.ge.f32.partialorder %v272, 0.0
      %vm305 = vcmp.ge.f32.partialorder %v273, 0.0
      %vm306 = vcmp.ge.f32.partialorder %v274, 0.0
      %vm307 = vcmp.ge.f32.partialorder %v275, 0.0
      %vm308 = vcmp.ge.f32.partialorder %v276, 0.0
      %vm309 = vcmp.ge.f32.partialorder %v277, 0.0
      %vm310 = vcmp.ge.f32.partialorder %v278, 0.0
      %vm311 = vcmp.ge.f32.partialorder %v279, 0.0
      %vm312 = vcmp.ge.f32.partialorder %v280, 0.0
      %vm313 = vcmp.ge.f32.partialorder %v281, 0.0
      %vm314 = vcmp.ge.f32.partialorder %v282, 0.0
      %vm315 = vcmp.ge.f32.partialorder %v283, 0.0
      %vm316 = vcmp.ge.f32.partialorder %v284, 0.0
      %vm317 = vcmp.ge.f32.partialorder %v285, 0.0
      %v318 = vmul.f32 %v254, 0.2
      %v319 = vmul.f32 %v255, 0.2
      %v320 = vmul.f32 %v256, 0.2
      %v321 = vmul.f32 %v257, 0.2
      %v322 = vmul.f32 %v258, 0.2
      %v323 = vmul.f32 %v259, 0.2
      %v324 = vmul.f32 %v260, 0.2
      %v325 = vmul.f32 %v261, 0.2
      %v326 = vmul.f32 %v262, 0.2
      %v327 = vmul.f32 %v263, 0.2
      %v328 = vmul.f32 %v264, 0.2
      %v329 = vmul.f32 %v265, 0.2
      %v330 = vmul.f32 %v266, 0.2
      %v331 = vmul.f32 %v267, 0.2
      %v332 = vmul.f32 %v268, 0.2
      %v333 = vmul.f32 %v269, 0.2
      %v334 = vmul.f32 %v270, 0.2
      %v335 = vmul.f32 %v271, 0.2
      %v336 = vmul.f32 %v272, 0.2
      %v337 = vmul.f32 %v273, 0.2
      %v338 = vmul.f32 %v274, 0.2
      %v339 = vmul.f32 %v275, 0.2
      %v340 = vmul.f32 %v276, 0.2
      %v341 = vmul.f32 %v277, 0.2
      %v342 = vmul.f32 %v278, 0.2
      %v343 = vmul.f32 %v279, 0.2
      %v344 = vmul.f32 %v280, 0.2
      %v345 = vmul.f32 %v281, 0.2
      %v346 = vmul.f32 %v282, 0.2
      %v347 = vmul.f32 %v283, 0.2
      %v348 = vmul.f32 %v284, 0.2
      %v349 = vmul.f32 %v285, 0.2
      %v350 = vsel %vm286, %v254, %v318
      %v351 = vsel %vm287, %v255, %v319
      %v352 = vsel %vm288, %v256, %v320
      %v353 = vsel %vm289, %v257, %v321
      %v354 = vsel %vm290, %v258, %v322
      %v355 = vsel %vm291, %v259, %v323
      %v356 = vsel %vm292, %v260, %v324
      %v357 = vsel %vm293, %v261, %v325
      %v358 = vsel %vm294, %v262, %v326
      %v359 = vsel %vm295, %v263, %v327
      %v360 = vsel %vm296, %v264, %v328
      %v361 = vsel %vm297, %v265, %v329
      %v362 = vsel %vm298, %v266, %v330
      %v363 = vsel %vm299, %v267, %v331
      %v364 = vsel %vm300, %v268, %v332
      %v365 = vsel %vm301, %v269, %v333
      %v366 = vsel %vm302, %v270, %v334
      %v367 = vsel %vm303, %v271, %v335
      %v368 = vsel %vm304, %v272, %v336
      %v369 = vsel %vm305, %v273, %v337
      %v370 = vsel %vm306, %v274, %v338
      %v371 = vsel %vm307, %v275, %v339
      %v372 = vsel %vm308, %v276, %v340
      %v373 = vsel %vm309, %v277, %v341
      %v374 = vsel %vm310, %v278, %v342
      %v375 = vsel %vm311, %v279, %v343
      %v376 = vsel %vm312, %v280, %v344
      %v377 = vsel %vm313, %v281, %v345
      %v378 = vsel %vm314, %v282, %v346
      %v379 = vsel %vm315, %v283, %v347
      %v380 = vsel %vm316, %v284, %v348
      %v381 = vsel %vm317, %v285, %v349
      %382 = vst [vmem:[%s179] sm:$0xff] %v350
      %383 = vst [vmem:[%s179 + $0x8] sm:$0xff] %v351
      %384 = vst [vmem:[%s179 + $0x10] sm:$0xff] %v352
      %385 = vst [vmem:[%s179 + $0x18] sm:$0xff] %v353
      %386 = vst [vmem:[%s179 + $0x20] sm:$0xff] %v354
      %387 = vst [vmem:[%s179 + $0x28] sm:$0xff] %v355
      %388 = vst [vmem:[%s179 + $0x30] sm:$0xff] %v356
      %389 = vst [vmem:[%s179 + $0x38] sm:$0xff] %v357
      %390 = vst [vmem:[%s179 + $0x40] sm:$0xff] %v358
      %391 = vst [vmem:[%s179 + $0x48] sm:$0xff] %v359
      %392 = vst [vmem:[%s179 + $0x50] sm:$0xff] %v360
      %393 = vst [vmem:[%s179 + $0x58] sm:$0xff] %v361
      %394 = vst [vmem:[%s179 + $0x60] sm:$0xff] %v362
      %395 = vst [vmem:[%s179 + $0x68] sm:$0xff] %v363
      %396 = vst [vmem:[%s179 + $0x70] sm:$0xff] %v364
      %397 = vst [vmem:[%s179 + $0x78] sm:$0xff] %v365
      %398 = vst [vmem:[%s179 + $0x80] sm:$0xff] %v366
      %399 = vst [vmem:[%s179 + $0x88] sm:$0xff] %v367
      %400 = vst [vmem:[%s179 + $0x90] sm:$0xff] %v368
      %401 = vst [vmem:[%s179 + $0x98] sm:$0xff] %v369
      %402 = vst [vmem:[%s179 + $0xa0] sm:$0xff] %v370
      %403 = vst [vmem:[%s179 + $0xa8] sm:$0xff] %v371
      %404 = vst [vmem:[%s179 + $0xb0] sm:$0xff] %v372
      %405 = vst [vmem:[%s179 + $0xb8] sm:$0xff] %v373
      %406 = vst [vmem:[%s179 + $0xc0] sm:$0xff] %v374
      %407 = vst [vmem:[%s179 + $0xc8] sm:$0xff] %v375
      %408 = vst [vmem:[%s179 + $0xd0] sm:$0xff] %v376
      %409 = vst [vmem:[%s179 + $0xd8] sm:$0xff] %v377
      %410 = vst [vmem:[%s179 + $0xe0] sm:$0xff] %v378
      %411 = vst [vmem:[%s179 + $0xe8] sm:$0xff] %v379
      %412 = vst [vmem:[%s179 + $0xf0] sm:$0xff] %v380
      %413 = vst [vmem:[%s179 + $0xf8] sm:$0xff] %v381
      %p414 = scmp.lt.s32.totalorder %s17, 1
      %s415 = scalar_select %p414, %s17, 1
      %p416 = scmp.lt.s32.totalorder %s18, 0
      %s417 = scalar_select %p416, %s18, 0
      %s418 = smul.addr %s417, 32
      %s419 = smul.addr %s415, 32
      %s420 = sadd.s32 %s418, %s419
      %s421 = smul.addr %s420, 8
      %s422 = scalar_lea.vmem %s2, %s421
      // Predicated region
      $region29: #{conv_block_forward.5} parent=27 // pred_check
        %p423 = pneg %p94
      $region30: #{conv_block_forward.5} parent=27 // pred_check_branch
        %425 = sbr.rel (%p423) target = $region32
      $region31: #{conv_block_forward.5} parent=27 // pred_region
        _
      $region32: #{conv_block_forward.5} parent=27 // pred_fallthru
        _
    $region28: #{conv_block_forward.5} parent=5 // pred_fallthru
      _
    %p426 = scmp.le.s32.totalorder 2, %s8
    // Predicated region
    $region33: #{conv_block_forward.5} parent=5 // pred_check
      %p427 = pneg %p426
    $region34: #{conv_block_forward.5} parent=5 // pred_check_branch
      %429 = sbr.rel (%p427) target = $region36
    $region35: #{conv_block_forward.5} parent=5 // pred_region
      %s430 = ssub.s32 %s8, 2
      // Predicated region
      $region37: #{conv_block_forward.5} parent=35 // pred_check
        %p431 = pneg %p100
      $region38: #{conv_block_forward.5} parent=35 // pred_check_branch
        %433 = sbr.rel (%p431) target = $region40
      $region39: #{conv_block_forward.5} parent=35 // pred_region
        %p434 = scmp.lt.s32.totalorder %s19, 1
        %s435 = scalar_select %p434, %s19, 1
        %p436 = scmp.lt.s32.totalorder %s20, 0
        %s437 = scalar_select %p436, %s20, 0
        %s438 = smul.addr %s437, 32
        %s439 = smul.addr %s435, 32
        %s440 = sadd.s32 %s438, %s439
        %s441 = smul.addr %s440, 8
        %s442 = scalar_lea.vmem %s2, %s441
      $region40: #{conv_block_forward.5} parent=35 // pred_fallthru
        _
    $region36: #{conv_block_forward.5} parent=5 // pred_fallthru
      _
  $region6: #{conv_block_forward.5} parent=0 // loop_footer
    %s12 = sadd.s32 1, %s8
  $region7: #{conv_block_forward.5} parent=0 // loop_footer_branch
    %7 = sbr.rel target = $region3
  $region8: #{conv_block_forward.5} parent=0 // loop_exit
    _

// kernel: conv_block_forward.3
$region0: #{conv_block_forward.3}
  #allocation0 [shape = 'u32[]', space=smem, size = 0x4, offset = 0x4, fixed_abs, tag = 'smem constant byte address 0x4 - core index']
  #allocation1 [shape = 'u32[144,128]{1,0:T(1,128)}', space=vmem, size = 0x12000, scoped, tag = 'internal scratch']
  %s0 = inlined_call_operand.vmem [shape: bf16[2,18,18,128], index: 0, kind: input, shape index: {}]
  %s1 = inlined_call_operand.vmem [shape: bf16[9,128,128], index: 1, kind: input, shape index: {}]
  %s2 = inlined_call_operand.vmem [shape: f32[2,1,256,128], index: 2, kind: output, shape index: {0}]
  %s3 = inlined_call_operand.vmem [shape: f32[2,1,2,128], index: 3, kind: output, shape index: {1}]
  %4 = xla_tuple %s2, %s3
  %s5 = sld [smem:[#allocation0]]
  $region49: #{conv_block_forward.3} parent=0
    _
  %s7 = ssub.s32 1, %s5
  %s8 = scalar_select 0, %s7, %s5
  loop: start=0, step=1, limit=4
  $region2: #{conv_block_forward.3} parent=0 // loop_pre_header
    _
  $region3: #{conv_block_forward.3} parent=0 // loop_header
    %s10 = sphi 0, %s14
    %p11 = scmp.ge.s32.totalorder %s10, 4
    %s17 = sphi 0, %s29
    %s18 = sphi 0, %s25
    %s19 = sphi 0, %s17
    %s20 = sphi 0, %s18
    %s21 = sphi 0, %s19
    %s22 = sphi 0, %s20
    %s32 = sphi 0, %s34
    %s35 = sphi 0, %s32
    %s36 = sphi 0, %s35
    %s52 = sphi 0, %s36
    %s56 = sphi 0, %s56
    %s58 = sphi 0, %s56
    %s59 = sphi 0, %s58
    %s73 = sphi 0, %s59
    %s81 = sphi 0, %s83
    %s84 = sphi 0, %s81
    %s85 = sphi 0, %s84
    %s101 = sphi 0, %s85
    %s109 = sphi 0, %s111
    %s112 = sphi 0, %s109
    %s113 = sphi 0, %s112
    %s129 = sphi 0, %s113
  $region4: #{conv_block_forward.3} parent=0 // loop_header_branch
    %13 = sbr.rel (%p11) target = $region8
  $region5: #{conv_block_forward.3} parent=0 // loop_body
    %s15 = ssub.s32 %s10, 1
    %s16 = ssub.s32 %s10, 2
    %s23 = sadd.s32 1, %s18
    %p24 = scmp.ge.s32.totalorder %s23, 1
    %s25 = scalar_select %p24, 0, %s23
    %s26 = sadd.s32 1, %s17
    %s27 = scalar_select %p24, %s26, %s17
    %p28 = scmp.ge.s32.totalorder %s27, 2
    %s29 = scalar_select %p28, 0, %s27
    %s30 = ssub.s32 %s17, %s29
    %p31 = scmp.eq.s32.totalorder %s30, 0
    %s33 = sadd.s32 %s32, 1
    %s34 = scalar_select %p31, %s32, %s33
    %p37 = pneg %p31
    %p38 = scmp.eq.s32.totalorder %s10, 1
    %p39 = por %p37, %p38
    %p40 = scmp.ne.s32.totalorder %s32, %s35
    %p41 = scmp.eq.s32.totalorder %s10, 0
    %p42 = por %p40, %p41
    %p43 = scmp.ne.s32.totalorder %s32, %s35
    %p44 = scmp.eq.s32.totalorder %s15, 1
    %p45 = por %p43, %p44
    %p46 = scmp.ne.s32.totalorder %s35, %s36
    %p47 = scmp.eq.s32.totalorder %s15, 0
    %p48 = por %p46, %p47
    %p49 = scmp.ne.s32.totalorder %s35, %s36
    %p50 = scmp.eq.s32.totalorder %s16, 1
    %p51 = por %p49, %p50
    %p53 = scmp.ne.s32.totalorder %s36, %s52
    %p54 = scmp.eq.s32.totalorder %s16, 0
    %p55 = por %p53, %p54
    %s57 = sadd.s32 %s56, 1
    %p60 = scmp.eq.s32.totalorder %s10, 1
    %p61 = scmp.ne.s32.totalorder %s56, %s58
    %p62 = scmp.eq.s32.totalorder %s10, 0
    %p63 = por %p61, %p62
    %p64 = scmp.ne.s32.totalorder %s56, %s58
    %p65 = scmp.eq.s32.totalorder %s15, 1
    %p66 = por %p64, %p65
    %p67 = scmp.ne.s32.totalorder %s58, %s59
    %p68 = scmp.eq.s32.totalorder %s15, 0
    %p69 = por %p67, %p68
    %p70 = scmp.ne.s32.totalorder %s58, %s59
    %p71 = scmp.eq.s32.totalorder %s16, 1
    %p72 = por %p70, %p71
    %p74 = scmp.ne.s32.totalorder %s59, %s73
    %p75 = scmp.eq.s32.totalorder %s16, 0
    %p76 = por %p74, %p75
    %s77 = ssub.s32 %s17, %s29
    %s78 = ssub.s32 %s18, %s25
    %s79 = sor.u32 %s77, %s78
    %p80 = scmp.eq.s32.totalorder %s79, 0
    %s82 = sadd.s32 %s81, 1
    %s83 = scalar_select %p80, %s81, %s82
    %p86 = pneg %p80
    %p87 = scmp.eq.s32.totalorder %s10, 1
    %p88 = por %p86, %p87
    %p89 = scmp.ne.s32.totalorder %s81, %s84
    %p90 = scmp.eq.s32.totalorder %s10, 0
    %p91 = por %p89, %p90
    %p92 = scmp.ne.s32.totalorder %s81, %s84
    %p93 = scmp.eq.s32.totalorder %s15, 1
    %p94 = por %p92, %p93
    %p95 = scmp.ne.s32.totalorder %s84, %s85
    %p96 = scmp.eq.s32.totalorder %s15, 0
    %p97 = por %p95, %p96
    %p98 = scmp.ne.s32.totalorder %s84, %s85
    %p99 = scmp.eq.s32.totalorder %s16, 1
    %p100 = por %p98, %p99
    %p102 = scmp.ne.s32.totalorder %s85, %s101
    %p103 = scmp.eq.s32.totalorder %s16, 0
    %p104 = por %p102, %p103
    %s105 = ssub.s32 %s17, %s29
    %s106 = ssub.s32 %s18, %s25
    %s107 = sor.u32 %s105, %s106
    %p108 = scmp.eq.s32.totalorder %s107, 0
    %s110 = sadd.s32 %s109, 1
    %s111 = scalar_select %p108, %s109, %s110
    %p114 = pneg %p108
    %p115 = scmp.eq.s32.totalorder %s10, 1
    %p116 = por %p114, %p115
    %p117 = scmp.ne.s32.totalorder %s109, %s112
    %p118 = scmp.eq.s32.totalorder %s10, 0
    %p119 = por %p117, %p118
    %p120 = scmp.ne.s32.totalorder %s109, %s112
    %p121 = scmp.eq.s32.totalorder %s15, 1
    %p122 = por %p120, %p121
    %p123 = scmp.ne.s32.totalorder %s112, %s113
    %p124 = scmp.eq.s32.totalorder %s15, 0
    %p125 = por %p123, %p124
    %p126 = scmp.ne.s32.totalorder %s112, %s113
    %p127 = scmp.eq.s32.totalorder %s16, 1
    %p128 = por %p126, %p127
    %p130 = scmp.ne.s32.totalorder %s113, %s129
    %p131 = scmp.eq.s32.totalorder %s16, 0
    %p132 = por %p130, %p131
    %p133 = scmp.le.s32.totalorder 1, %s10
    %p134 = scmp.lt.s32.totalorder %s10, 3
    %p135 = pnand %p133, %p134
    %p136 = pneg %p135
    // Predicated region
    $region9: #{conv_block_forward.3} parent=5 // pred_check
      _
    $region10: #{conv_block_forward.3} parent=5 // pred_check_branch
      %138 = sbr.rel (%p135) target = $region12
    $region11: #{conv_block_forward.3} parent=5 // pred_region
      %s139 = ssub.s32 %s10, 1
      // Predicated region
      $region13: #{conv_block_forward.3} parent=11 // pred_check
        %p140 = pneg %p69
      $region14: #{conv_block_forward.3} parent=11 // pred_check_branch
        %142 = sbr.rel (%p140) target = $region16
      $region15: #{conv_block_forward.3} parent=11 // pred_region
        _
      $region16: #{conv_block_forward.3} parent=11 // pred_fallthru
        _
    $region12: #{conv_block_forward.3} parent=5 // pred_fallthru
      _
    %p143 = scmp.lt.s32.totalorder %s10, 2
    // Predicated region
    $region17: #{conv_block_forward.3} parent=5 // pred_check
      %p144 = pneg %p143
    $region18: #{conv_block_forward.3} parent=5 // pred_check_branch
      %146 = sbr.rel (%p144) target = $region20
    $region19: #{conv_block_forward.3} parent=5 // pred_region
      // Predicated region
      $region21: #{conv_block_forward.3} parent=19 // pred_check
        %p147 = pneg %p42
      $region22: #{conv_block_forward.3} parent=19 // pred_check_branch
        %149 = sbr.rel (%p147) target = $region24
      $region23: #{conv_block_forward.3} parent=19 // pred_region
        %p150 = scmp.lt.s32.totalorder %s17, 1
        %s151 = scalar_select %p150, %s17, 1
        %s152 = smul.addr %s151, 54
        %s153 = smul.addr %s152, 4
        %s154 = scalar_lea.vmem %s0, %s153
      $region24: #{conv_block_forward.3} parent=19 // pred_fallthru
        _
    $region20: #{conv_block_forward.3} parent=5 // pred_fallthru
      _
    %p155 = scmp.le.s32.totalorder 1, %s10
    %p156 = scmp.lt.s32.totalorder %s10, 3
    %p157 = pnand %p155, %p156
    %p158 = pneg %p157
    // Predicated region
    $region25: #{conv_block_forward.3} parent=5 // pred_check
      _
    $region26: #{conv_block_forward.3} parent=5 // pred_check_branch
      %160 = sbr.rel (%p157) target = $region28
    $region27: #{conv_block_forward.3} parent=5 // pred_region
      %s161 = ssub.s32 %s10, 1
      %p162 = scmp.lt.s32.totalorder %s19, 1
      %s163 = scalar_select %p162, %s19, 1
      %s164 = smul.addr %s163, 54
      %s165 = smul.addr %s164, 4
      %s166 = scalar_lea.vmem %s0, %s165
      %p167 = pneg %p48
      %p168 = pneg %p45
      %p169 = pneg %p69
      %p170 = pneg %p66
      %p171 = pneg %p97
      %p172 = pneg %p94
      %p173 = scmp.lt.s32.totalorder %s19, 1
      %s174 = scalar_select %p173, %s19, 1
      %p175 = scmp.lt.s32.totalorder %s20, 0
      %s176 = scalar_select %p175, %s20, 0
      %s177 = smul.addr %s176, 32
      %s178 = smul.addr %s174, 32
      %s179 = sadd.s32 %s177, %s178
      %s180 = smul.addr %s179, 8
      %s181 = scalar_lea.vmem %s2, %s180
      %p182 = pneg %p125
      %p183 = pneg %p122
      %p184 = scmp.lt.s32.totalorder %s19, 1
      %s185 = scalar_select %p184, %s19, 1
      %p186 = scmp.lt.s32.totalorder %s20, 0
      %s187 = scalar_select %p186, %s20, 0
      %s188 = sadd.s32 %s187, %s185
      %s189 = smul.addr %s188, 2
      %s190 = scalar_lea.vmem %s3, %s189
      %p191 = scmp.lt.s32.totalorder %s19, 1
      %s192 = scalar_select %p191, %s19, 1
      %s193 = smul.addr %s192, 54
      %s194 = smul.addr %s193, 4
      %s195 = scalar_lea.vmem %s0, %s194
      %p196 = scmp.lt.s32.totalorder %s19, 1
      %s197 = scalar_select %p196, %s19, 1
      %p198 = scmp.lt.s32.totalorder %s20, 0
      %s199 = scalar_select %p198, %s20, 0
      %s200 = smul.addr %s199, 32
      %s201 = smul.addr %s197, 32
      %s202 = sadd.s32 %s200, %s201
      %s203 = smul.addr %s202, 8
      %s204 = scalar_lea.vmem %s2, %s203
      %p205 = scmp.lt.s32.totalorder %s19, 1
      %s206 = scalar_select %p205, %s19, 1
      %p207 = scmp.lt.s32.totalorder %s20, 0
      %s208 = scalar_select %p207, %s20, 0
      %s209 = sadd.s32 %s208, %s206
      %s210 = smul.addr %s209, 2
      %s211 = scalar_lea.vmem %s3, %s210
      %s213 = smul.u32 %s20, 16
      %s214 = smul.u32 %s213, 3
      %s215 = smul.addr %s214, 4
      %s216 = scalar_lea.vmem %s195, %s215
      %v217 = vld [vmem:[%s216] sm:$0xf]
      %v218 = vld [vmem:[%s216 + $0x4] sm:$0xf]
      %v219 = vld [vmem:[%s216 + $0xc] sm:$0xf]
      %v220 = vld [vmem:[%s216 + $0x10] sm:$0xf]
      %v221 = vld [vmem:[%s216 + $0x18] sm:$0xf]
      %v222 = vld [vmem:[%s216 + $0x1c] sm:$0xf]
      %v223 = vld [vmem:[%s216 + $0x24] sm:$0xf]
      %v224 = vld [vmem:[%s216 + $0x28] sm:$0xf]
      %v225 = vld [vmem:[%s216 + $0x30] sm:$0xf]
      %v226 = vld [vmem:[%s216 + $0x34] sm:$0xf]
      %v227 = vld [vmem:[%s216 + $0x3c] sm:$0xf]
      %v228 = vld [vmem:[%s216 + $0x40] sm:$0xf]
      %v229 = vld [vmem:[%s216 + $0x48] sm:$0xf]
      %v230 = vld [vmem:[%s216 + $0x4c] sm:$0xf]
      %v231 = vld [vmem:[%s216 + $0x54] sm:$0xf]
      %v232 = vld [vmem:[%s216 + $0x58] sm:$0xf]
      %v233 = vld [vmem:[%s216 + $0x60] sm:$0xf]
      %v234 = vld [vmem:[%s216 + $0x64] sm:$0xf]
      %v235 = vld [vmem:[%s216 + $0x6c] sm:$0xf]
      %v236 = vld [vmem:[%s216 + $0x70] sm:$0xf]
      %v237 = vld [vmem:[%s216 + $0x78] sm:$0xf]
      %v238 = vld [vmem:[%s216 + $0x7c] sm:$0xf]
      %v239 = vld [vmem:[%s216 + $0x84] sm:$0xf]
      %v240 = vld [vmem:[%s216 + $0x88] sm:$0xf]
      %v241 = vld [vmem:[%s216 + $0x90] sm:$0xf]
      %v242 = vld [vmem:[%s216 + $0x94] sm:$0xf]
      %v243 = vld [vmem:[%s216 + $0x9c] sm:$0xf]
      %v244 = vld [vmem:[%s216 + $0xa0] sm:$0xf]
      %v245 = vld [vmem:[%s216 + $0xa8] sm:$0xf]
      %v246 = vld [vmem:[%s216 + $0xac] sm:$0xf]
      %v247 = vld [vmem:[%s216 + $0xb4] sm:$0xf]
      %v248 = vld [vmem:[%s216 + $0xb8] sm:$0xf]
      %v249 = vld [vmem:[%s1] sm:$0xf]
      %v250 = vld [vmem:[%s1 + $0x4] sm:$0xf]
      %v251 = vld [vmem:[%s1 + $0x8] sm:$0xf]
      %v252 = vld [vmem:[%s1 + $0xc] sm:$0xf]
      %v253 = vld [vmem:[%s1 + $0x10] sm:$0xf]
      %v254 = vld [vmem:[%s1 + $0x14] sm:$0xf]
      %v255 = vld [vmem:[%s1 + $0x18] sm:$0xf]
      %v256 = vld [vmem:[%s1 + $0x1c] sm:$0xf]
      %v257 = vld [vmem:[%s1 + $0x20] sm:$0xf]
      %v258 = vld [vmem:[%s1 + $0x24] sm:$0xf]
      %v259 = vld [vmem:[%s1 + $0x28] sm:$0xf]
      %v260 = vld [vmem:[%s1 + $0x2c] sm:$0xf]
      %v261 = vld [vmem:[%s1 + $0x30] sm:$0xf]
      %v262 = vld [vmem:[%s1 + $0x34] sm:$0xf]
      %v263 = vld [vmem:[%s1 + $0x38] sm:$0xf]
      %v264 = vld [vmem:[%s1 + $0x3c] sm:$0xf]
      %v265 = vld [vmem:[%s216 + $0x8] sm:$0x1]
      %v266 = vld [vmem:[%s216 + $0x14] sm:$0x1]
      %v267 = vld [vmem:[%s216 + $0x20] sm:$0x1]
      %v268 = vld [vmem:[%s216 + $0x2c] sm:$0x1]
      %v269 = vld [vmem:[%s216 + $0x38] sm:$0x1]
      %v270 = vld [vmem:[%s216 + $0x44] sm:$0x1]
      %v271 = vld [vmem:[%s216 + $0x50] sm:$0x1]
      %v272 = vld [vmem:[%s216 + $0x5c] sm:$0x1]
      %v273 = vld [vmem:[%s216 + $0x68] sm:$0x1]
      %v274 = vld [vmem:[%s216 + $0x74] sm:$0x1]
      %v275 = vld [vmem:[%s216 + $0x80] sm:$0x1]
      %v276 = vld [vmem:[%s216 + $0x8c] sm:$0x1]
      %v277 = vld [vmem:[%s216 + $0x98] sm:$0x1]
      %v278 = vld [vmem:[%s216 + $0xa4] sm:$0x1]
      %v279 = vld [vmem:[%s216 + $0xb0] sm:$0x1]
      %v280 = vld [vmem:[%s216 + $0xbc] sm:$0x1]
      %vm281 = vsmask.f32 3328
      %vm282 = vsmask.f32 7440
      %vm283 = vmor %vm281, %vm282
      %v285 = vshrl.u32 %v217, 16
      %v287 = vrot.slane %v285, 4
      %v288 = vshll.u32 %v217, 16
      %v290 = vrot.slane %v288, 5
      %v291 = vor.u32 %v287, %v290
      %v292 = vrot.slane %v291, 4
      %v294 = vshll.u32 %v218, 16
      %v296 = vrot.slane %v294, 5
      %v297 = vsel %vm283, %v292, %v296
      %v298 = vshrl.u32 %v218, 16
      %v300 = vrot.slane %v298, 4
      %v301 = vor.u32 %v300, %v296
      %v302 = vrot.slane %v301, 4
      %v304 = vshll.u32 %v265, 16
      %v306 = vrot.slane %v304, 5
      %v307 = vsel %vm283, %v302, %v306
      %v309 = vshrl.u32 %v219, 16
      %v311 = vrot.slane %v309, 4
      %v312 = vshll.u32 %v219, 16
      %v314 = vrot.slane %v312, 5
      %v315 = vor.u32 %v311, %v314
      %v316 = vrot.slane %v315, 4
      %v318 = vshll.u32 %v220, 16
      %v320 = vrot.slane %v318, 5
      %v321 = vsel %vm283, %v316, %v320
      %v322 = vshrl.u32 %v220, 16
      %v324 = vrot.slane %v322, 4
      %v325 = vor.u32 %v324, %v320
      %v326 = vrot.slane %v325, 4
      %v328 = vshll.u32 %v266, 16
      %v330 = vrot.slane %v328, 5
      %v331 = vsel %vm283, %v326, %v330
      %v333 = vshrl.u32 %v221, 16
      %v335 = vrot.slane %v333, 4
      %v336 = vshll.u32 %v221, 16
      %v338 = vrot.slane %v336, 5
      %v339 = vor.u32 %v335, %v338
      %v340 = vrot.slane %v339, 4
      %v342 = vshll.u32 %v222, 16
      %v344 = vrot.slane %v342, 5
      %v345 = vsel %vm283, %v340, %v344
      %v346 = vshrl.u32 %v222, 16
      %v348 = vrot.slane %v346, 4
      %v349 = vor.u32 %v348, %v344
      %v350 = vrot.slane %v349, 4
      %v352 = vshll.u32 %v267, 16
      %v354 = vrot.slane %v352, 5
      %v355 = vsel %vm283, %v350, %v354
      %v357 = vshrl.u32 %v223, 16
      %v359 = vrot.slane %v357, 4
      %v360 = vshll.u32 %v223, 16
      %v362 = vrot.slane %v360, 5
      %v363 = vor.u32 %v359, %v362
      %v364 = vrot.slane %v363, 4
      %v366 = vshll.u32 %v224, 16
      %v368 = vrot.slane %v366, 5
      %v369 = vsel %vm283, %v364, %v368
      %v370 = vshrl.u32 %v224, 16
      %v372 = vrot.slane %v370, 4
      %v373 = vor.u32 %v372, %v368
      %v374 = vrot.slane %v373, 4
      %v376 = vshll.u32 %v268, 16
      %v378 = vrot.slane %v376, 5
      %v379 = vsel %vm283, %v374, %v378
      %v381 = vshrl.u32 %v225, 16
      %v383 = vrot.slane %v381, 4
      %v384 = vshll.u32 %v225, 16
      %v386 = vrot.slane %v384, 5
      %v387 = vor.u32 %v383, %v386
      %v388 = vrot.slane %v387, 4
      %v390 = vshll.u32 %v226, 16
      %v392 = vrot.slane %v390, 5
      %v393 = vsel %vm283, %v388, %v392
      %v394 = vshrl.u32 %v226, 16
      %v396 = vrot.slane %v394, 4
      %v397 = vor.u32 %v396, %v392
      %v398 = vrot.slane %v397, 4
      %v400 = vshll.u32 %v269, 16
      %v402 = vrot.slane %v400, 5
      %v403 = vsel %vm283, %v398, %v402
      %v405 = vshrl.u32 %v227, 16
      %v407 = vrot.slane %v405, 4
      %v408 = vshll.u32 %v227, 16
      %v410 = vrot.slane %v408, 5
      %v411 = vor.u32 %v407, %v410
      %v412 = vrot.slane %v411, 4
      %v414 = vshll.u32 %v228, 16
      %v416 = vrot.slane %v414, 5
      %v417 = vsel %vm283, %v412, %v416
      %v418 = vshrl.u32 %v228, 16
      %v420 = vrot.slane %v418, 4
      %v421 = vor.u32 %v420, %v416
      %v422 = vrot.slane %v421, 4
      %v424 = vshll.u32 %v270, 16
      %v426 = vrot.slane %v424, 5
      %v427 = vsel %vm283, %v422, %v426
      %v429 = vshrl.u32 %v229, 16
      %v431 = vrot.slane %v429, 4
      %v432 = vshll.u32 %v229, 16
      %v434 = vrot.slane %v432, 5
      %v435 = vor.u32 %v431, %v434
      %v436 = vrot.slane %v435, 4
      %v438 = vshll.u32 %v230, 16
      %v440 = vrot.slane %v438, 5
      %v441 = vsel %vm283, %v436, %v440
      %v442 = vshrl.u32 %v230, 16
      %v444 = vrot.slane %v442, 4
      %v445 = vor.u32 %v444, %v440
      %v446 = vrot.slane %v445, 4
      %v448 = vshll.u32 %v271, 16
      %v450 = vrot.slane %v448, 5
      %v451 = vsel %vm283, %v446, %v450
      %v453 = vshrl.u32 %v231, 16
      %v455 = vrot.slane %v453, 4
      %v456 = vshll.u32 %v231, 16
      %v458 = vrot.slane %v456, 5
      %v459 = vor.u32 %v455, %v458
      %v460 = vrot.slane %v459, 4
      %v462 = vshll.u32 %v232, 16
      %v464 = vrot.slane %v462, 5
      %v465 = vsel %vm283, %v460, %v464
      %v466 = vshrl.u32 %v232, 16
      %v468 = vrot.slane %v466, 4
      %v469 = vor.u32 %v468, %v464
      %v470 = vrot.slane %v469, 4
      %v472 = vshll.u32 %v272, 16
      %v474 = vrot.slane %v472, 5
      %v475 = vsel %vm283, %v470, %v474
      %v477 = vshrl.u32 %v233, 16
      %v479 = vrot.slane %v477, 4
      %v480 = vshll.u32 %v233, 16
      %v482 = vrot.slane %v480, 5
      %v483 = vor.u32 %v479, %v482
      %v484 = vrot.slane %v483, 4
      %v486 = vshll.u32 %v234, 16
      %v488 = vrot.slane %v486, 5
      %v489 = vsel %vm283, %v484, %v488
      %v490 = vshrl.u32 %v234, 16
      %v492 = vrot.slane %v490, 4
      %v493 = vor.u32 %v492, %v488
      %v494 = vrot.slane %v493, 4
      %v496 = vshll.u32 %v273, 16
      %v498 = vrot.slane %v496, 5
      %v499 = vsel %vm283, %v494, %v498
      %v501 = vshrl.u32 %v235, 16
      %v503 = vrot.slane %v501, 4
      %v504 = vshll.u32 %v235, 16
      %v506 = vrot.slane %v504, 5
      %v507 = vor.u32 %v503, %v506
      %v508 = vrot.slane %v507, 4
      %v510 = vshll.u32 %v236, 16
      %v512 = vrot.slane %v510, 5
      %v513 = vsel %vm283, %v508, %v512
      %v514 = vshrl.u32 %v236, 16
      %v516 = vrot.slane %v514, 4
      %v517 = vor.u32 %v516, %v512
      %v518 = vrot.slane %v517, 4
      %v520 = vshll.u32 %v274, 16
      %v522 = vrot.slane %v520, 5
      %v523 = vsel %vm283, %v518, %v522
      %v525 = vshrl.u32 %v237, 16
      %v527 = vrot.slane %v525, 4
      %v528 = vshll.u32 %v237, 16
      %v530 = vrot.slane %v528, 5
      %v531 = vor.u32 %v527, %v530
      %v532 = vrot.slane %v531, 4
      %v534 = vshll.u32 %v238, 16
      %v536 = vrot.slane %v534, 5
      %v537 = vsel %vm283, %v532, %v536
      %v538 = vshrl.u32 %v238, 16
      %v540 = vrot.slane %v538, 4
      %v541 = vor.u32 %v540, %v536
      %v542 = vrot.slane %v541, 4
      %v544 = vshll.u32 %v275, 16
      %v546 = vrot.slane %v544, 5
      %v547 = vsel %vm283, %v542, %v546
      %v549 = vshrl.u32 %v239, 16
      %v551 = vrot.slane %v549, 4
      %v552 = vshll.u32 %v239, 16
      %v554 = vrot.slane %v552, 5
      %v555 = vor.u32 %v551, %v554
      %v556 = vrot.slane %v555, 4
      %v558 = vshll.u32 %v240, 16
      %v560 = vrot.slane %v558, 5
      %v561 = vsel %vm283, %v556, %v560
      %v562 = vshrl.u32 %v240, 16
      %v564 = vrot.slane %v562, 4
      %v565 = vor.u32 %v564, %v560
      %v566 = vrot.slane %v565, 4
      %v568 = vshll.u32 %v276, 16
      %v570 = vrot.slane %v568, 5
      %v571 = vsel %vm283, %v566, %v570
      %v573 = vshrl.u32 %v241, 16
      %v575 = vrot.slane %v573, 4
      %v576 = vshll.u32 %v241, 16
      %v578 = vrot.slane %v576, 5
      %v579 = vor.u32 %v575, %v578
      %v580 = vrot.slane %v579, 4
      %v582 = vshll.u32 %v242, 16
      %v584 = vrot.slane %v582, 5
      %v585 = vsel %vm283, %v580, %v584
      %v586 = vshrl.u32 %v242, 16
      %v588 = vrot.slane %v586, 4
      %v589 = vor.u32 %v588, %v584
      %v590 = vrot.slane %v589, 4
      %v592 = vshll.u32 %v277, 16
      %v594 = vrot.slane %v592, 5
      %v595 = vsel %vm283, %v590, %v594
      %v597 = vshrl.u32 %v243, 16
      %v599 = vrot.slane %v597, 4
      %v600 = vshll.u32 %v243, 16
      %v602 = vrot.slane %v600, 5
      %v603 = vor.u32 %v599, %v602
      %v604 = vrot.slane %v603, 4
      %v606 = vshll.u32 %v244, 16
      %v608 = vrot.slane %v606, 5
      %v609 = vsel %vm283, %v604, %v608
      %v610 = vshrl.u32 %v244, 16
      %v612 = vrot.slane %v610, 4
      %v613 = vor.u32 %v612, %v608
      %v614 = vrot.slane %v613, 4
      %v616 = vshll.u32 %v278, 16
      %v618 = vrot.slane %v616, 5
      %v619 = vsel %vm283, %v614, %v618
      %v621 = vshrl.u32 %v245, 16
      %v623 = vrot.slane %v621, 4
      %v624 = vshll.u32 %v245, 16
      %v626 = vrot.slane %v624, 5
      %v627 = vor.u32 %v623, %v626
      %v628 = vrot.slane %v627, 4
      %v630 = vshll.u32 %v246, 16
      %v632 = vrot.slane %v630, 5
      %v633 = vsel %vm283, %v628, %v632
      %v634 = vshrl.u32 %v246, 16
      %v636 = vrot.slane %v634, 4
      %v637 = vor.u32 %v636, %v632
      %v638 = vrot.slane %v637, 4
      %v640 = vshll.u32 %v279, 16
      %v642 = vrot.slane %v640, 5
      %v643 = vsel %vm283, %v638, %v642
      %v645 = vshrl.u32 %v247, 16
      %v647 = vrot.slane %v645, 4
      %v648 = vshll.u32 %v247, 16
      %v650 = vrot.slane %v648, 5
      %v651 = vor.u32 %v647, %v650
      %v652 = vrot.slane %v651, 4
      %v654 = vshll.u32 %v248, 16
      %v656 = vrot.slane %v654, 5
      %v657 = vsel %vm283, %v652, %v656
      %v658 = vshrl.u32 %v248, 16
      %v660 = vrot.slane %v658, 4
      %v661 = vor.u32 %v660, %v656
      %v662 = vrot.slane %v661, 4
      %v664 = vshll.u32 %v280, 16
      %v666 = vrot.slane %v664, 5
      %v667 = vsel %vm283, %v662, %v666
      %s668 = scalar_lea.vmem %s1, 64
      %v669 = vld [vmem:[%s668] sm:$0xf]
      %v670 = vld [vmem:[%s668 + $0x4] sm:$0xf]
      %v671 = vld [vmem:[%s668 + $0x8] sm:$0xf]
      %v672 = vld [vmem:[%s668 + $0xc] sm:$0xf]
      %v673 = vld [vmem:[%s668 + $0x10] sm:$0xf]
      %v674 = vld [vmem:[%s668 + $0x14] sm:$0xf]
      %v675 = vld [vmem:[%s668 + $0x18] sm:$0xf]
      %v676 = vld [vmem:[%s668 + $0x1c] sm:$0xf]
      %v677 = vld [vmem:[%s668 + $0x20] sm:$0xf]
      %v678 = vld [vmem:[%s668 + $0x24] sm:$0xf]
      %v679 = vld [vmem:[%s668 + $0x28] sm:$0xf]
      %v680 = vld [vmem:[%s668 + $0x2c] sm:$0xf]
      %v681 = vld [vmem:[%s668 + $0x30] sm:$0xf]
      %v682 = vld [vmem:[%s668 + $0x34] sm:$0xf]
      %v683 = vld [vmem:[%s668 + $0x38] sm:$0xf]
      %v684 = vld [vmem:[%s668 + $0x3c] sm:$0xf]
      %v685 = vunpack.c.l.b16 %v297
      %v686 = vunpack.c.l.b16 %v307
      %v687 = vunpack.c.l.b16 %v321
      %v688 = vunpack.c.l.b16 %v331
      %v689 = vunpack.c.l.b16 %v345
      %v690 = vunpack.c.l.b16 %v355
      %v691 = vunpack.c.l.b16 %v369
      %v692 = vunpack.c.l.b16 %v379
      %v693 = vunpack.c.l.b16 %v393
      %v694 = vunpack.c.l.b16 %v403
      %v695 = vunpack.c.l.b16 %v417
      %v696 = vunpack.c.l.b16 %v427
      %v697 = vunpack.c.l.b16 %v441
      %v698 = vunpack.c.l.b16 %v451
      %v699 = vunpack.c.l.b16 %v465
      %v700 = vunpack.c.l.b16 %v475
      %v701 = vunpack.c.l.b16 %v489
      %v702 = vunpack.c.l.b16 %v499
      %v703 = vunpack.c.l.b16 %v513
      %v704 = vunpack.c.l.b16 %v523
      %v705 = vunpack.c.l.b16 %v537
      %v706 = vunpack.c.l.b16 %v547
      %v707 = vunpack.c.l.b16 %v561
      %v708 = vunpack.c.l.b16 %v571
      %v709 = vunpack.c.l.b16 %v585
      %v710 = vunpack.c.l.b16 %v595
      %v711 = vunpack.c.l.b16 %v609
      %v712 = vunpack.c.l.b16 %v619
      %v713 = vunpack.c.l.b16 %v633
      %v714 = vunpack.c.l.b16 %v643
      %v715 = vunpack.c.l.b16 %v657
      %v716 = vunpack.c.l.b16 %v667
      %v717 = vpack.c.b16 %v686, %v685
      %v718 = vpack.c.b16 %v688, %v687
      %v719 = vpack.c.b16 %v690, %v689
      %v720 = vpack.c.b16 %v692, %v691
      %v721 = vpack.c.b16 %v694, %v693
      %v722 = vpack.c.b16 %v696, %v695
      %v723 = vpack.c.b16 %v698, %v697
      %v724 = vpack.c.b16 %v700, %v699
      %v725 = vpack.c.b16 %v702, %v701
      %v726 = vpack.c.b16 %v704, %v703
      %v727 = vpack.c.b16 %v706, %v705
      %v728 = vpack.c.b16 %v708, %v707
      %v729 = vpack.c.b16 %v710, %v709
      %v730 = vpack.c.b16 %v712, %v711
      %v731 = vpack.c.b16 %v714, %v713
      %v732 = vpack.c.b16 %v716, %v715
      %v765 = vunpack.c.l.b16 %v669
      %v766 = vunpack.c.l.b16 %v670
      %v767 = vunpack.c.l.b16 %v671
      %v768 = vunpack.c.l.b16 %v672
      %v769 = vunpack.c.l.b16 %v673
      %v770 = vunpack.c.l.b16 %v674
      %v771 = vunpack.c.l.b16 %v675
      %v772 = vunpack.c.l.b16 %v676
      %v773 = vunpack.c.l.b16 %v677
      %v774 = vunpack.c.l.b16 %v678
      %v775 = vunpack.c.l.b16 %v679
      %v776 = vunpack.c.l.b16 %v680
      %v777 = vunpack.c.l.b16 %v681
      %v778 = vunpack.c.l.b16 %v682
      %v779 = vunpack.c.l.b16 %v683
      %v780 = vunpack.c.l.b16 %v684
      %v781 = vpack.c.b16 %v766, %v765
      %v782 = vpack.c.b16 %v768, %v767
      %v783 = vpack.c.b16 %v770, %v769
      %v784 = vpack.c.b16 %v772, %v771
      %v785 = vpack.c.b16 %v774, %v773
      %v786 = vpack.c.b16 %v776, %v775
      %v787 = vpack.c.b16 %v778, %v777
      %v788 = vpack.c.b16 %v780, %v779
      %797 = vmatprep.subr.bf16.mxu0 0
      %798 = vmatpush1.bf16.msra.mxu0 %v781
      %799 = vmatprep.subr.bf16.mxu0 0
      %800 = vmatpush1.bf16.msra.mxu0 %v782
      %801 = vmatprep.subr.bf16.mxu0 0
      %802 = vmatpush1.bf16.msra.mxu0 %v783
      %803 = vmatprep.subr.bf16.mxu0 0
      %804 = vmatpush1.bf16.msra.mxu0 %v784
      %805 = vmatprep.subr.bf16.mxu0 0
      %806 = vmatpush1.bf16.msra.mxu0 %v785
      %807 = vmatprep.subr.bf16.mxu0 0
      %808 = vmatpush1.bf16.msra.mxu0 %v786
      %809 = vmatprep.subr.bf16.mxu0 0
      %810 = vmatpush1.bf16.msra.mxu0 %v787
      %811 = vmatprep.subr.bf16.mxu0 0
      %812 = vmatpush1.bf16.msra.mxu0 %v788
      %813 = vmatprep.subr.bf16.mxu0 0
      %814 = vmatpush1.bf16.msra.mxu0 0
      %815 = vmatprep.subr.bf16.mxu0 0
      %816 = vmatpush1.bf16.msra.mxu0 0
      %817 = vmatprep.subr.bf16.mxu0 0
      %818 = vmatpush1.bf16.msra.mxu0 0
      %819 = vmatprep.subr.bf16.mxu0 0
      %820 = vmatpush1.bf16.msra.mxu0 0
      %821 = vmatprep.subr.bf16.mxu0 0
      %822 = vmatpush1.bf16.msra.mxu0 0
      %823 = vmatprep.subr.bf16.mxu0 0
      %824 = vmatpush1.bf16.msra.mxu0 0
      %825 = vmatprep.subr.bf16.mxu0 0
      %826 = vmatpush1.bf16.msra.mxu0 0
      %827 = vmatprep.subr.bf16.mxu0 0
      %828 = vmatpush1.bf16.msra.mxu0 0
      %829 = vmatprep.mubr.bf16.mxu0 0
      %830 = vmatmul.mubr.bf16.gmra.mrb[0].mxu0 %v717
      %v831 = vpop.f32.mrb[0].mxu0
      %v832 = vadd.f32 0.0, %v831
      %v833 = vpop.f32.mrb[0].mxu0
      %v834 = vpop.f32.mrb[0].mxu0
      %v835 = vadd.f32 0.0, %v834
      %v836 = vpop.f32.mrb[0].mxu0
      %837 = vmatprep.mubr.bf16.mxu0 0
      %838 = vmatmul.mubr.bf16.gmra.mrb[0].mxu0 %v718
      %v839 = vpop.f32.mrb[0].mxu0
      %v840 = vadd.f32 0.0, %v839
      %v841 = vpop.f32.mrb[0].mxu0
      %v842 = vpop.f32.mrb[0].mxu0
      %v843 = vadd.f32 0.0, %v842
      %v844 = vpop.f32.mrb[0].mxu0
      %845 = vmatprep.mubr.bf16.mxu0 0
      %846 = vmatmul.mubr.bf16.gmra.mrb[0].mxu0 %v719
      %v847 = vpop.f32.mrb[0].mxu0
      %v848 = vadd.f32 0.0, %v847
      %v849 = vpop.f32.mrb[0].mxu0
      %v850 = vpop.f32.mrb[0].mxu0
      %v851 = vadd.f32 0.0, %v850
      %v852 = vpop.f32.mrb[0].mxu0
      %853 = vmatprep.mubr.bf16.mxu0 0
      %854 = vmatmul.mubr.bf16.gmra.mrb[0].mxu0 %v720
      %v855 = vpop.f32.mrb[0].mxu0
      %v856 = vadd.f32 0.0, %v855
      %v857 = vpop.f32.mrb[0].mxu0
      %v858 = vpop.f32.mrb[0].mxu0
      %v859 = vadd.f32 0.0, %v858
      %v860 = vpop.f32.mrb[0].mxu0
      %861 = vmatprep.mubr.bf16.mxu0 0
      %862 = vmatmul.mubr.bf16.gmra.mrb[0].mxu0 %v721
      %v863 = vpop.f32.mrb[0].mxu0
      %v864 = vadd.f32 0.0, %v863
      %v865 = vpop.f32.mrb[0].mxu0
      %v866 = vpop.f32.mrb[0].mxu0
      %v867 = vadd.f32 0.0, %v866
      %v868 = vpop.f32.mrb[0].mxu0
      %869 = vmatprep.mubr.bf16.mxu0 0
      %870 = vmatmul.mubr.bf16.gmra.mrb[0].mxu0 %v722
      %v871 = vpop.f32.mrb[0].mxu0
      %v872 = vadd.f32 0.0, %v871
      %v873 = vpop.f32.mrb[0].mxu0
      %v874 = vpop.f32.mrb[0].mxu0
      %v875 = vadd.f32 0.0, %v874
      %v876 = vpop.f32.mrb[0].mxu0
      %877 = vmatprep.mubr.bf16.mxu0 0
      %878 = vmatmul.mubr.bf16.gmra.mrb[0].mxu0 %v723
      %v879 = vpop.f32.mrb[0].mxu0
      %v880 = vadd.f32 0.0, %v879
      %v881 = vpop.f32.mrb[0].mxu0
      %v882 = vpop.f32.mrb[0].mxu0
      %v883 = vadd.f32 0.0, %v882
      %v884 = vpop.f32.mrb[0].mxu0
      %885 = vmatprep.mubr.bf16.mxu0 0
      %886 = vmatmul.mubr.bf16.gmra.mrb[0].mxu0 %v724
      %v887 = vpop.f32.mrb[0].mxu0
      %v888 = vadd.f32 0.0, %v887
      %v889 = vpop.f32.mrb[0].mxu0
      %v890 = vpop.f32.mrb[0].mxu0
      %v891 = vadd.f32 0.0, %v890
      %v892 = vpop.f32.mrb[0].mxu0
      %893 = vmatprep.mubr.bf16.mxu0 0
      %894 = vmatmul.mubr.bf16.gmra.mrb[0].mxu0 %v725
      %v895 = vpop.f32.mrb[0].mxu0
      %v896 = vadd.f32 0.0, %v895
      %v897 = vpop.f32.mrb[0].mxu0
      %v898 = vpop.f32.mrb[0].mxu0
      %v899 = vadd.f32 0.0, %v898
      %v900 = vpop.f32.mrb[0].mxu0
      %901 = vmatprep.mubr.bf16.mxu0 0
      %902 = vmatmul.mubr.bf16.gmra.mrb[0].mxu0 %v726
      %v903 = vpop.f32.mrb[0].mxu0
      %v904 = vadd.f32 0.0, %v903
      %v905 = vpop.f32.mrb[0].mxu0
      %v906 = vpop.f32.mrb[0].mxu0
      %v907 = vadd.f32 0.0, %v906
      %v908 = vpop.f32.mrb[0].mxu0
      %909 = vmatprep.mubr.bf16.mxu0 0
      %910 = vmatmul.mubr.bf16.gmra.mrb[0].mxu0 %v727
      %v911 = vpop.f32.mrb[0].mxu0
      %v912 = vadd.f32 0.0, %v911
      %v913 = vpop.f32.mrb[0].mxu0
      %v914 = vpop.f32.mrb[0].mxu0
      %v915 = vadd.f32 0.0, %v914
      %v916 = vpop.f32.mrb[0].mxu0
      %917 = vmatprep.mubr.bf16.mxu0 0
      %918 = vmatmul.mubr.bf16.gmra.mrb[0].mxu0 %v728
      %v919 = vpop.f32.mrb[0].mxu0
      %v920 = vadd.f32 0.0, %v919
      %v921 = vpop.f32.mrb[0].mxu0
      %v922 = vpop.f32.mrb[0].mxu0
      %v923 = vadd.f32 0.0, %v922
      %v924 = vpop.f32.mrb[0].mxu0
      %925 = vmatprep.mubr.bf16.mxu0 0
      %926 = vmatmul.mubr.bf16.gmra.mrb[0].mxu0 %v729
      %v927 = vpop.f32.mrb[0].mxu0
      %v928 = vadd.f32 0.0, %v927
      %v929 = vpop.f32.mrb[0].mxu0
      %v930 = vpop.f32.mrb[0].mxu0
      %v931 = vadd.f32 0.0, %v930
      %v932 = vpop.f32.mrb[0].mxu0
      %933 = vmatprep.mubr.bf16.mxu0 0
      %934 = vmatmul.mubr.bf16.gmra.mrb[0].mxu0 %v730
      %v935 = vpop.f32.mrb[0].mxu0
      %v936 = vadd.f32 0.0, %v935
      %v937 = vpop.f32.mrb[0].mxu0
      %v938 = vpop.f32.mrb[0].mxu0
      %v939 = vadd.f32 0.0, %v938
      %v940 = vpop.f32.mrb[0].mxu0
      %941 = vmatprep.mubr.bf16.mxu0 0
      %942 = vmatmul.mubr.bf16.gmra.mrb[0].mxu0 %v731
      %v943 = vpop.f32.mrb[0].mxu0
      %v944 = vadd.f32 0.0, %v943
      %v945 = vpop.f32.mrb[0].mxu0
      %v946 = vpop.f32.mrb[0].mxu0
      %v947 = vadd.f32 0.0, %v946
      %v948 = vpop.f32.mrb[0].mxu0
      %949 = vmatprep.mubr.bf16.mxu0 0
      %950 = vmatmul.mubr.bf16.gmra.mrb[0].mxu0 %v732
      %v951 = vpop.f32.mrb[0].mxu0
      %v952 = vadd.f32 0.0, %v951
      %v953 = vpop.f32.mrb[0].mxu0
      %v954 = vpop.f32.mrb[0].mxu0
      %v955 = vadd.f32 0.0, %v954
      %v956 = vpop.f32.mrb[0].mxu0
      %957 = vdwg.mxu0
      %v990 = vunpack.c.l.b16 %v217
      %v991 = vunpack.c.l.b16 %v218
      %v992 = vunpack.c.l.b16 %v219
      %v993 = vunpack.c.l.b16 %v220
      %v994 = vunpack.c.l.b16 %v221
      %v995 = vunpack.c.l.b16 %v222
      %v996 = vunpack.c.l.b16 %v223
      %v997 = vunpack.c.l.b16 %v224
      %v998 = vunpack.c.l.b16 %v225
      %v999 = vunpack.c.l.b16 %v226
      %v1000 = vunpack.c.l.b16 %v227
      %v1001 = vunpack.c.l.b16 %v228
      %v1002 = vunpack.c.l.b16 %v229
      %v1003 = vunpack.c.l.b16 %v230
      %v1004 = vunpack.c.l.b16 %v231
      %v1005 = vunpack.c.l.b16 %v232
      %v1006 = vunpack.c.l.b16 %v233
      %v1007 = vunpack.c.l.b16 %v234
      %v1008 = vunpack.c.l.b16 %v235
      %v1009 = vunpack.c.l.b16 %v236
      %v1010 = vunpack.c.l.b16 %v237
      %v1011 = vunpack.c.l.b16 %v238
      %v1012 = vunpack.c.l.b16 %v239
      %v1013 = vunpack.c.l.b16 %v240
      %v1014 = vunpack.c.l.b16 %v241
      %v1015 = vunpack.c.l.b16 %v242
      %v1016 = vunpack.c.l.b16 %v243
      %v1017 = vunpack.c.l.b16 %v244
      %v1018 = vunpack.c.l.b16 %v245
      %v1019 = vunpack.c.l.b16 %v246
      %v1020 = vunpack.c.l.b16 %v247
      %v1021 = vunpack.c.l.b16 %v248
      %v1022 = vpack.c.b16 %v991, %v990
      %v1023 = vpack.c.b16 %v993, %v992
      %v1024 = vpack.c.b16 %v995, %v994
      %v1025 = vpack.c.b16 %v997, %v996
      %v1026 = vpack.c.b16 %v999, %v998
      %v1027 = vpack.c.b16 %v1001, %v1000
      %v1028 = vpack.c.b16 %v1003, %v1002
      %v1029 = vpack.c.b16 %v1005, %v1004
      %v1030 = vpack.c.b16 %v1007, %v1006
      %v1031 = vpack.c.b16 %v1009, %v1008
      %v1032 = vpack.c.b16 %v1011, %v1010
      %v1033 = vpack.c.b16 %v1013, %v1012
      %v1034 = vpack.c.b16 %v1015, %v1014
      %v1035 = vpack.c.b16 %v1017, %v1016
      %v1036 = vpack.c.b16 %v1019, %v1018
      %v1037 = vpack.c.b16 %v1021, %v1020
      %v1070 = vunpack.c.l.b16 %v249
      %v1071 = vunpack.c.l.b16 %v250
      %v1072 = vunpack.c.l.b16 %v251
      %v1073 = vunpack.c.l.b16 %v252
      %v1074 = vunpack.c.l.b16 %v253
      %v1075 = vunpack.c.l.b16 %v254
      %v1076 = vunpack.c.l.b16 %v255
      %v1077 = vunpack.c.l.b16 %v256
      %v1078 = vunpack.c.l.b16 %v257
      %v1079 = vunpack.c.l.b16 %v258
      %v1080 = vunpack.c.l.b16 %v259
      %v1081 = vunpack.c.l.b16 %v260
      %v1082 = vunpack.c.l.b16 %v261
      %v1083 = vunpack.c.l.b16 %v262
      %v1084 = vunpack.c.l.b16 %v263
      %v1085 = vunpack.c.l.b16 %v264
      %v1086 = vpack.c.b16 %v1071, %v1070
      %v1087 = vpack.c.b16 %v1073, %v1072
      %v1088 = vpack.c.b16 %v1075, %v1074
      %v1089 = vpack.c.b16 %v1077, %v1076
      %v1090 = vpack.c.b16 %v1079, %v1078
      %v1091 = vpack.c.b16 %v1081, %v1080
      %v1092 = vpack.c.b16 %v1083, %v1082
      %v1093 = vpack.c.b16 %v1085, %v1084
      %1102 = vmatprep.subr.bf16.mxu0 0
      %1103 = vmatpush1.bf16.msra.mxu0 %v1086
      %1104 = vmatprep.subr.bf16.mxu0 0
      %1105 = vmatpush1.bf16.msra.mxu0 %v1087
      %1106 = vmatprep.subr.bf16.mxu0 0
      %1107 = vmatpush1.bf16.msra.mxu0 %v1088
      %1108 = vmatprep.subr.bf16.mxu0 0
      %1109 = vmatpush1.bf16.msra.mxu0 %v1089
      %1110 = vmatprep.subr.bf16.mxu0 0
      %1111 = vmatpush1.bf16.msra.mxu0 %v1090
      %1112 = vmatprep.subr.bf16.mxu0 0
      %1113 = vmatpush1.bf16.msra.mxu0 %v1091
      %1114 = vmatprep.subr.bf16.mxu0 0
      %1115 = vmatpush1.bf16.msra.mxu0 %v1092
      %1116 = vmatprep.subr.bf16.mxu0 0
      %1117 = vmatpush1.bf16.msra.mxu0 %v1093
      %1118 = vmatprep.subr.bf16.mxu0 0
      %1119 = vmatpush1.bf16.msra.mxu0 0
      %1120 = vmatprep.subr.bf16.mxu0 0
      %1121 = vmatpush1.bf16.msra.mxu0 0
      %1122 = vmatprep.subr.bf16.mxu0 0
      %1123 = vmatpush1.bf16.msra.mxu0 0
      %1124 = vmatprep.subr.bf16.mxu0 0
      %1125 = vmatpush1.bf16.msra.mxu0 0
      %1126 = vmatprep.subr.bf16.mxu0 0
      %1127 = vmatpush1.bf16.msra.mxu0 0
      %1128 = vmatprep.subr.bf16.mxu0 0
      %1129 = vmatpush1.bf16.msra.mxu0 0
      %1130 = vmatprep.subr.bf16.mxu0 0
      %1131 = vmatpush1.bf16.msra.mxu0 0
      %1132 = vmatprep.subr.bf16.mxu0 0
      %1133 = vmatpush1.bf16.msra.mxu0 0
      %1134 = vmatprep.mubr.bf16.mxu0 0
      %1135 = vmatmul.mubr.bf16.gmra.mrb[0].mxu0 %v1022
      %v1136 = vpop.f32.mrb[0].mxu0
      %v1137 = vadd.f32 %v832, %v1136
      %v1138 = vpop.f32.mrb[0].mxu0
      %v1139 = vpop.f32.mrb[0].mxu0
      %v1140 = vadd.f32 %v835, %v1139
      %v1141 = vpop.f32.mrb[0].mxu0
      %1142 = vmatprep.mubr.bf16.mxu0 0
      %1143 = vmatmul.mubr.bf16.gmra.mrb[0].mxu0 %v1023
      %v1144 = vpop.f32.mrb[0].mxu0
      %v1145 = vadd.f32 %v840, %v1144
      %v1146 = vpop.f32.mrb[0].mxu0
      %v1147 = vpop.f32.mrb[0].mxu0
      %v1148 = vadd.f32 %v843, %v1147
      %v1149 = vpop.f32.mrb[0].mxu0
      %1150 = vmatprep.mubr.bf16.mxu0 0
      %1151 = vmatmul.mubr.bf16.gmra.mrb[0].mxu0 %v1024
      %v1152 = vpop.f32.mrb[0].mxu0
      %v1153 = vadd.f32 %v848, %v1152
      %v1154 = vpop.f32.mrb[0].mxu0
      %v1155 = vpop.f32.mrb[0].mxu0
      %v1156 = vadd.f32 %v851, %v1155
      %v1157 = vpop.f32.mrb[0].mxu0
      %1158 = vmatprep.mubr.bf16.mxu0 0
      %1159 = vmatmul.mubr.bf16.gmra.mrb[0].mxu0 %v1025
      %v1160 = vpop.f32.mrb[0].mxu0
      %v1161 = vadd.f32 %v856, %v1160
      %v1162 = vpop.f32.mrb[0].mxu0
      %v1163 = vpop.f32.mrb[0].mxu0
      %v1164 = vadd.f32 %v859, %v1163
      %v1165 = vpop.f32.mrb[0].mxu0
      %1166 = vmatprep.mubr.bf16.mxu0 0
      %1167 = vmatmul.mubr.bf16.gmra.mrb[0].mxu0 %v1026
      %v1168 = vpop.f32.mrb[0].mxu0
      %v1169 = vadd.f32 %v864, %v1168
      %v1170 = vpop.f32.mrb[0].mxu0
      %v1171 = vpop.f32.mrb[0].mxu0
      %v1172 = vadd.f32 %v867, %v1171
      %v1173 = vpop.f32.mrb[0].mxu0
      %1174 = vmatprep.mubr.bf16.mxu0 0
      %1175 = vmatmul.mubr.bf16.gmra.mrb[0].mxu0 %v1027
      %v1176 = vpop.f32.mrb[0].mxu0
      %v1177 = vadd.f32 %v872, %v1176
      %v1178 = vpop.f32.mrb[0].mxu0
      %v1179 = vpop.f32.mrb[0].mxu0
      %v1180 = vadd.f32 %v875, %v1179
      %v1181 = vpop.f32.mrb[0].mxu0
      %1182 = vmatprep.mubr.bf16.mxu0 0
      %1183 = vmatmul.mubr.bf16.gmra.mrb[0].mxu0 %v1028
      %v1184 = vpop.f32.mrb[0].mxu0
      %v1185 = vadd.f32 %v880, %v1184
      %v1186 = vpop.f32.mrb[0].mxu0
      %v1187 = vpop.f32.mrb[0].mxu0
      %v1188 = vadd.f32 %v883, %v1187
      %v1189 = vpop.f32.mrb[0].mxu0
      %1190 = vmatprep.mubr.bf16.mxu0 0
      %1191 = vmatmul.mubr.bf16.gmra.mrb[0].mxu0 %v1029
      %v1192 = vpop.f32.mrb[0].mxu0
      %v1193 = vadd.f32 %v888, %v1192
      %v1194 = vpop.f32.mrb[0].mxu0
      %v1195 = vpop.f32.mrb[0].mxu0
      %v1196 = vadd.f32 %v891, %v1195
      %v1197 = vpop.f32.mrb[0].mxu0
      %1198 = vmatprep.mubr.bf16.mxu0 0
      %1199 = vmatmul.mubr.bf16.gmra.mrb[0].mxu0 %v1030
      %v1200 = vpop.f32.mrb[0].mxu0
      %v1201 = vadd.f32 %v896, %v1200
      %v1202 = vpop.f32.mrb[0].mxu0
      %v1203 = vpop.f32.mrb[0].mxu0
      %v1204 = vadd.f32 %v899, %v1203
      %v1205 = vpop.f32.mrb[0].mxu0
      %1206 = vmatprep.mubr.bf16.mxu0 0
      %1207 = vmatmul.mubr.bf16.gmra.mrb[0].mxu0 %v1031
      %v1208 = vpop.f32.mrb[0].mxu0
      %v1209 = vadd.f32 %v904, %v1208
      %v1210 = vpop.f32.mrb[0].mxu0
      %v1211 = vpop.f32.mrb[0].mxu0
      %v1212 = vadd.f32 %v907, %v1211
      %v1213 = vpop.f32.mrb[0].mxu0
      %1214 = vmatprep.mubr.bf16.mxu0 0
      %1215 = vmatmul.mubr.bf16.gmra.mrb[0].mxu0 %v1032
      %v1216 = vpop.f32.mrb[0].mxu0
      %v1217 = vadd.f32 %v912, %v1216
      %v1218 = vpop.f32.mrb[0].mxu0
      %v1219 = vpop.f32.mrb[0].mxu0
      %v1220 = vadd.f32 %v915, %v1219
      %v1221 = vpop.f32.mrb[0].mxu0
      %1222 = vmatprep.mubr.bf16.mxu0 0
      %1223 = vmatmul.mubr.bf16.gmra.mrb[0].mxu0 %v1033
      %v1224 = vpop.f32.mrb[0].mxu0
      %v1225 = vadd.f32 %v920, %v1224
      %v1226 = vpop.f32.mrb[0].mxu0
      %v1227 = vpop.f32.mrb[0].mxu0
      %v1228 = vadd.f32 %v923, %v1227
      %v1229 = vpop.f32.mrb[0].mxu0
      %1230 = vmatprep.mubr.bf16.mxu0 0
      %1231 = vmatmul.mubr.bf16.gmra.mrb[0].mxu0 %v1034
      %v1232 = vpop.f32.mrb[0].mxu0
      %v1233 = vadd.f32 %v928, %v1232
      %v1234 = vpop.f32.mrb[0].mxu0
      %v1235 = vpop.f32.mrb[0].mxu0
      %v1236 = vadd.f32 %v931, %v1235
      %v1237 = vpop.f32.mrb[0].mxu0
      %1238 = vmatprep.mubr.bf16.mxu0 0
      %1239 = vmatmul.mubr.bf16.gmra.mrb[0].mxu0 %v1035
      %v1240 = vpop.f32.mrb[0].mxu0
      %v1241 = vadd.f32 %v936, %v1240
      %v1242 = vpop.f32.mrb[0].mxu0
      %v1243 = vpop.f32.mrb[0].mxu0
      %v1244 = vadd.f32 %v939, %v1243
      %v1245 = vpop.f32.mrb[0].mxu0
      %1246 = vmatprep.mubr.bf16.mxu0 0
      %1247 = vmatmul.mubr.bf16.gmra.mrb[0].mxu0 %v1036
      %v1248 = vpop.f32.mrb[0].mxu0
      %v1249 = vadd.f32 %v944, %v1248
      %v1250 = vpop.f32.mrb[0].mxu0
      %v1251 = vpop.f32.mrb[0].mxu0
      %v1252 = vadd.f32 %v947, %v1251
      %v1253 = vpop.f32.mrb[0].mxu0
      %1254 = vmatprep.mubr.bf16.mxu0 0
      %1255 = vmatmul.mubr.bf16.gmra.mrb[0].mxu0 %v1037
      %v1256 = vpop.f32.mrb[0].mxu0
      %v1257 = vadd.f32 %v952, %v1256
      %v1258 = vpop.f32.mrb[0].mxu0
      %v1259 = vpop.f32.mrb[0].mxu0
      %v1260 = vadd.f32 %v955, %v1259
      %v1261 = vpop.f32.mrb[0].mxu0
      %1262 = vdwg.mxu0
      %v1263 = vld [vmem:[%s216] sm:$0xe]
      %v1264 = vld [vmem:[%s216 + $0xc] sm:$0xe]
      %v1265 = vld [vmem:[%s216 + $0x18] sm:$0xe]
      %v1266 = vld [vmem:[%s216 + $0x24] sm:$0xe]
      %v1267 = vld [vmem:[%s216 + $0x30] sm:$0xe]
      %v1268 = vld [vmem:[%s216 + $0x3c] sm:$0xe]
      %v1269 = vld [vmem:[%s216 + $0x48] sm:$0xe]
      %v1270 = vld [vmem:[%s216 + $0x54] sm:$0xe]
      %v1271 = vld [vmem:[%s216 + $0x60] sm:$0xe]
      %v1272 = vld [vmem:[%s216 + $0x6c] sm:$0xe]
      %v1273 = vld [vmem:[%s216 + $0x78] sm:$0xe]
      %v1274 = vld [vmem:[%s216 + $0x84] sm:$0xe]
      %v1275 = vld [vmem:[%s216 + $0x90] sm:$0xe]
      %v1276 = vld [vmem:[%s216 + $0x9c] sm:$0xe]
      %v1277 = vld [vmem:[%s216 + $0xa8] sm:$0xe]
      %v1278 = vld [vmem:[%s216 + $0xb4] sm:$0xe]
      %vm1311 = vcmask 1042432
      %vm1312 = vcmask 1046532
      %vm1313 = vmor %vm1311, %vm1312
      %v1314 = vrot.slane %v1263, 5
      %v1315 = vrot.slane %v1314, 4
      %v1316 = vrot.slane %v218, 5
      %v1317 = vsel %vm1313, %v1315, %v1316
      %v1318 = vrot.slane %v1316, 4
      %v1319 = vrot.slane %v265, 5
      %v1320 = vsel %vm1313, %v1318, %v1319
      %v1321 = vrot.slane %v1264, 5
      %v1322 = vrot.slane %v1321, 4
      %v1323 = vrot.slane %v220, 5
      %v1324 = vsel %vm1313, %v1322, %v1323
      %v1325 = vrot.slane %v1323, 4
      %v1326 = vrot.slane %v266, 5
      %v1327 = vsel %vm1313, %v1325, %v1326
      %v1328 = vrot.slane %v1265, 5
      %v1329 = vrot.slane %v1328, 4
      %v1330 = vrot.slane %v222, 5
      %v1331 = vsel %vm1313, %v1329, %v1330
      %v1332 = vrot.slane %v1330, 4
      %v1333 = vrot.slane %v267, 5
      %v1334 = vsel %vm1313, %v1332, %v1333
      %v1335 = vrot.slane %v1266, 5
      %v1336 = vrot.slane %v1335, 4
      %v1337 = vrot.slane %v224, 5
      %v1338 = vsel %vm1313, %v1336, %v1337
      %v1339 = vrot.slane %v1337, 4
      %v1340 = vrot.slane %v268, 5
      %v1341 = vsel %vm1313, %v1339, %v1340
      %v1342 = vrot.slane %v1267, 5
      %v1343 = vrot.slane %v1342, 4
      %v1344 = vrot.slane %v226, 5
      %v1345 = vsel %vm1313, %v1343, %v1344
      %v1346 = vrot.slane %v1344, 4
      %v1347 = vrot.slane %v269, 5
      %v1348 = vsel %vm1313, %v1346, %v1347
      %v1349 = vrot.slane %v1268, 5
      %v1350 = vrot.slane %v1349, 4
      %v1351 = vrot.slane %v228, 5
      %v1352 = vsel %vm1313, %v1350, %v1351
      %v1353 = vrot.slane %v1351, 4
      %v1354 = vrot.slane %v270, 5
      %v1355 = vsel %vm1313, %v1353, %v1354
      %v1356 = vrot.slane %v1269, 5
      %v1357 = vrot.slane %v1356, 4
      %v1358 = vrot.slane %v230, 5
      %v1359 = vsel %vm1313, %v1357, %v1358
      %v1360 = vrot.slane %v1358, 4
      %v1361 = vrot.slane %v271, 5
      %v1362 = vsel %vm1313, %v1360, %v1361
      %v1363 = vrot.slane %v1270, 5
      %v1364 = vrot.slane %v1363, 4
      %v1365 = vrot.slane %v232, 5
      %v1366 = vsel %vm1313, %v1364, %v1365
      %v1367 = vrot.slane %v1365, 4
      %v1368 = vrot.slane %v272, 5
      %v1369 = vsel %vm1313, %v1367, %v1368
      %v1370 = vrot.slane %v1271, 5
      %v1371 = vrot.slane %v1370, 4
      %v1372 = vrot.slane %v234, 5
      %v1373 = vsel %vm1313, %v1371, %v1372
      %v1374 = vrot.slane %v1372, 4
      %v1375 = vrot.slane %v273, 5
      %v1376 = vsel %vm1313, %v1374, %v1375
      %v1377 = vrot.slane %v1272, 5
      %v1378 = vrot.slane %v1377, 4
      %v1379 = vrot.slane %v236, 5
      %v1380 = vsel %vm1313, %v1378, %v1379
      %v1381 = vrot.slane %v1379, 4
      %v1382 = vrot.slane %v274, 5
      %v1383 = vsel %vm1313, %v1381, %v1382
      %v1384 = vrot.slane %v1273, 5
      %v1385 = vrot.slane %v1384, 4
      %v1386 = vrot.slane %v238, 5
      %v1387 = vsel %vm1313, %v1385, %v1386
      %v1388 = vrot.slane %v1386, 4
      %v1389 = vrot.slane %v275, 5
      %v1390 = vsel %vm1313, %v1388, %v1389
      %v1391 = vrot.slane %v1274, 5
      %v1392 = vrot.slane %v1391, 4
      %v1393 = vrot.slane %v240, 5
      %v1394 = vsel %vm1313, %v1392, %v1393
      %v1395 = vrot.slane %v1393, 4
      %v1396 = vrot.slane %v276, 5
      %v1397 = vsel %vm1313, %v1395, %v1396
      %v1398 = vrot.slane %v1275, 5
      %v1399 = vrot.slane %v1398, 4
      %v1400 = vrot.slane %v242, 5
      %v1401 = vsel %vm1313, %v1399, %v1400
      %v1402 = vrot.slane %v1400, 4
      %v1403 = vrot.slane %v277, 5
      %v1404 = vsel %vm1313, %v1402, %v1403
      %v1405 = vrot.slane %v1276, 5
      %v1406 = vrot.slane %v1405, 4
      %v1407 = vrot.slane %v244, 5
      %v1408 = vsel %vm1313, %v1406, %v1407
      %v1409 = vrot.slane %v1407, 4
      %v1410 = vrot.slane %v278, 5
      %v1411 = vsel %vm1313, %v1409, %v1410
      %v1412 = vrot.slane %v1277, 5
      %v1413 = vrot.slane %v1412, 4
      %v1414 = vrot.slane %v246, 5
      %v1415 = vsel %vm1313, %v1413, %v1414
      %v1416 = vrot.slane %v1414, 4
      %v1417 = vrot.slane %v279, 5
      %v1418 = vsel %vm1313, %v1416, %v1417
      %v1419 = vrot.slane %v1278, 5
      %v1420 = vrot.slane %v1419, 4
      %v1421 = vrot.slane %v248, 5
      %v1422 = vsel %vm1313, %v1420, %v1421
      %v1423 = vrot.slane %v1421, 4
      %v1424 = vrot.slane %v280, 5
      %v1425 = vsel %vm1313, %v1423, %v1424
      %s1426 = scalar_lea.vmem %s1, 128
      %v1427 = vld [vmem:[%s1426] sm:$0xf]
      %v1428 = vld [vmem:[%s1426 + $0x4] sm:$0xf]
      %v1429 = vld [vmem:[%s1426 + $0x8] sm:$0xf]
      %v1430 = vld [vmem:[%s1426 + $0xc] sm:$0xf]
      %v1431 = vld [vmem:[%s1426 + $0x10] sm:$0xf]
      %v1432 = vld [vmem:[%s1426 + $0x14] sm:$0xf]
      %v1433 = vld [vmem:[%s1426 + $0x18] sm:$0xf]
      %v1434 = vld [vmem:[%s1426 + $0x1c] sm:$0xf]
      %v1435 = vld [vmem:[%s1426 + $0x20] sm:$0xf]
      %v1436 = vld [vmem:[%s1426 + $0x24] sm:$0xf]
      %v1437 = vld [vmem:[%s1426 + $0x28] sm:$0xf]
      %v1438 = vld [vmem:[%s1426 + $0x2c] sm:$0xf]
      %v1439 = vld [vmem:[%s1426 + $0x30] sm:$0xf]
      %v1440 = vld [vmem:[%s1426 + $0x34] sm:$0xf]
      %v1441 = vld [vmem:[%s1426 + $0x38] sm:$0xf]
      %v1442 = vld [vmem:[%s1426 + $0x3c] sm:$0xf]
      %v1443 = vunpack.c.l.b16 %v1317
      %v1444 = vunpack.c.l.b16 %v1320
      %v1445 = vunpack.c.l.b16 %v1324
      %v1446 = vunpack.c.l.b16 %v1327
      %v1447 = vunpack.c.l.b16 %v1331
      %v1448 = vunpack.c.l.b16 %v1334
      %v1449 = vunpack.c.l.b16 %v1338
      %v1450 = vunpack.c.l.b16 %v1341
      %v1451 = vunpack.c.l.b16 %v1345
      %v1452 = vunpack.c.l.b16 %v1348
      %v1453 = vunpack.c.l.b16 %v1352
      %v1454 = vunpack.c.l.b16 %v1355
      %v1455 = vunpack.c.l.b16 %v1359
      %v1456 = vunpack.c.l.b16 %v1362
      %v1457 = vunpack.c.l.b16 %v1366
      %v1458 = vunpack.c.l.b16 %v1369
      %v1459 = vunpack.c.l.b16 %v1373
      %v1460 = vunpack.c.l.b16 %v1376
      %v1461 = vunpack.c.l.b16 %v1380
      %v1462 = vunpack.c.l.b16 %v1383
      %v1463 = vunpack.c.l.b16 %v1387
      %v1464 = vunpack.c.l.b16 %v1390
      %v1465 = vunpack.c.l.b16 %v1394
      %v1466 = vunpack.c.l.b16 %v1397
      %v1467 = vunpack.c.l.b16 %v1401
      %v1468 = vunpack.c.l.b16 %v1404
      %v1469 = vunpack.c.l.b16 %v1408
      %v1470 = vunpack.c.l.b16 %v1411
      %v1471 = vunpack.c.l.b16 %v1415
      %v1472 = vunpack.c.l.b16 %v1418
      %v1473 = vunpack.c.l.b16 %v1422
      %v1474 = vunpack.c.l.b16 %v1425
      %v1475 = vpack.c.b16 %v1444, %v1443
      %v1476 = vpack.c.b16 %v1446, %v1445
      %v1477 = vpack.c.b16 %v1448, %v1447
      %v1478 = vpack.c.b16 %v1450, %v1449
      %v1479 = vpack.c.b16 %v1452, %v1451
      %v1480 = vpack.c.b16 %v1454, %v1453
      %v1481 = vpack.c.b16 %v1456, %v1455
      %v1482 = vpack.c.b16 %v1458, %v1457
      %v1483 = vpack.c.b16 %v1460, %v1459
      %v1484 = vpack.c.b16 %v1462, %v1461
      %v1485 = vpack.c.b16 %v1464, %v1463
      %v1486 = vpack.c.b16 %v1466, %v1465
      %v1487 = vpack.c.b16 %v1468, %v1467
      %v1488 = vpack.c.b16 %v1470, %v1469
      %v1489 = vpack.c.b16 %v1472, %v1471
      %v1490 = vpack.c.b16 %v1474, %v1473
      %v1523 = vunpack.c.l.b16 %v1427
      %v1524 = vunpack.c.l.b16 %v1428
      %v1525 = vunpack.c.l.b16 %v1429
      %v1526 = vunpack.c.l.b16 %v1430
      %v1527 = vunpack.c.l.b16 %v1431
      %v1528 = vunpack.c.l.b16 %v1432
      %v1529 = vunpack.c.l.b16 %v1433
      %v1530 = vunpack.c.l.b16 %v1434
      %v1531 = vunpack.c.l.b16 %v1435
      %v1532 = vunpack.c.l.b16 %v1436
      %v1533 = vunpack.c.l.b16 %v1437
      %v1534 = vunpack.c.l.b16 %v1438
      %v1535 = vunpack.c.l.b16 %v1439
      %v1536 = vunpack.c.l.b16 %v1440
      %v1537 = vunpack.c.l.b16 %v1441
      %v1538 = vunpack.c.l.b16 %v1442
      %v1539 = vpack.c.b16 %v1524, %v1523
      %v1540 = vpack.c.b16 %v1526, %v1525
      %v1541 = vpack.c.b16 %v1528, %v1527
      %v1542 = vpack.c.b16 %v1530, %v1529
      %v1543 = vpack.c.b16 %v1532, %v1531
      %v1544 = vpack.c.b16 %v1534, %v1533
      %v1545 = vpack.c.b16 %v1536, %v1535
      %v1546 = vpack.c.b16 %v1538, %v1537
      %1555 = vmatprep.subr.bf16.mxu0 0
      %1556 = vmatpush1.bf16.msra.mxu0 %v1539
      %1557 = vmatprep.subr.bf16.mxu0 0
      %1558 = vmatpush1.bf16.msra.mxu0 %v1540
      %1559 = vmatprep.subr.bf16.mxu0 0
      %1560 = vmatpush1.bf16.msra.mxu0 %v1541
      %1561 = vmatprep.subr.bf16.mxu0 0
      %1562 = vmatpush1.bf16.msra.mxu0 %v1542
      %1563 = vmatprep.subr.bf16.mxu0 0
      %1564 = vmatpush1.bf16.msra.mxu0 %v1543
      %1565 = vmatprep.subr.bf16.mxu0 0
      %1566 = vmatpush1.bf16.msra.mxu0 %v1544
      %1567 = vmatprep.subr.bf16.mxu0 0
      %1568 = vmatpush1.bf16.msra.mxu0 %v1545
      %1569 = vmatprep.subr.bf16.mxu0 0
      %1570 = vmatpush1.bf16.msra.mxu0 %v1546
      %1571 = vmatprep.subr.bf16.mxu0 0
      %1572 = vmatpush1.bf16.msra.mxu0 0
      %1573 = vmatprep.subr.bf16.mxu0 0
      %1574 = vmatpush1.bf16.msra.mxu0 0
      %1575 = vmatprep.subr.bf16.mxu0 0
      %1576 = vmatpush1.bf16.msra.mxu0 0
      %1577 = vmatprep.subr.bf16.mxu0 0
      %1578 = vmatpush1.bf16.msra.mxu0 0
      %1579 = vmatprep.subr.bf16.mxu0 0
      %1580 = vmatpush1.bf16.msra.mxu0 0
      %1581 = vmatprep.subr.bf16.mxu0 0
      %1582 = vmatpush1.bf16.msra.mxu0 0
      %1583 = vmatprep.subr.bf16.mxu0 0
      %1584 = vmatpush1.bf16.msra.mxu0 0
      %1585 = vmatprep.subr.bf16.mxu0 0
      %1586 = vmatpush1.bf16.msra.mxu0 0
      %1587 = vmatprep.mubr.bf16.mxu0 0
      %1588 = vmatmul.mubr.bf16.gmra.mrb[0].mxu0 %v1475
      %v1589 = vpop.f32.mrb[0].mxu0
      %v1590 = vadd.f32 0.0, %v1589
      %v1591 = vpop.f32.mrb[0].mxu0
      %v1592 = vpop.f32.mrb[0].mxu0
      %v1593 = vadd.f32 0.0, %v1592
      %v1594 = vpop.f32.mrb[0].mxu0
      %1595 = vmatprep.mubr.bf16.mxu0 0
      %1596 = vmatmul.mubr.bf16.gmra.mrb[0].mxu0 %v1476
      %v1597 = vpop.f32.mrb[0].mxu0
      %v1598 = vadd.f32 0.0, %v1597
      %v1599 = vpop.f32.mrb[0].mxu0
      %v1600 = vpop.f32.mrb[0].mxu0
      %v1601 = vadd.f32 0.0, %v1600
      %v1602 = vpop.f32.mrb[0].mxu0
      %1603 = vmatprep.mubr.bf16.mxu0 0
      %1604 = vmatmul.mubr.bf16.gmra.mrb[0].mxu0 %v1477
      %v1605 = vpop.f32.mrb[0].mxu0
      %v1606 = vadd.f32 0.0, %v1605
      %v1607 = vpop.f32.mrb[0].mxu0
      %v1608 = vpop.f32.mrb[0].mxu0
      %v1609 = vadd.f32 0.0, %v1608
      %v1610 = vpop.f32.mrb[0].mxu0
      %1611 = vmatprep.mubr.bf16.mxu0 0
      %1612 = vmatmul.mubr.bf16.gmra.mrb[0].mxu0 %v1478
      %v1613 = vpop.f32.mrb[0].mxu0
      %v1614 = vadd.f32 0.0, %v1613
      %v1615 = vpop.f32.mrb[0].mxu0
      %v1616 = vpop.f32.mrb[0].mxu0
      %v1617 = vadd.f32 0.0, %v1616
      %v1618 = vpop.f32.mrb[0].mxu0
      %1619 = vmatprep.mubr.bf16.mxu0 0
      %1620 = vmatmul.mubr.bf16.gmra.mrb[0].mxu0 %v1479
      %v1621 = vpop.f32.mrb[0].mxu0
      %v1622 = vadd.f32 0.0, %v1621
      %v1623 = vpop.f32.mrb[0].mxu0
      %v1624 = vpop.f32.mrb[0].mxu0
      %v1625 = vadd.f32 0.0, %v1624
      %v1626 = vpop.f32.mrb[0].mxu0
      %1627 = vmatprep.mubr.bf16.mxu0 0
      %1628 = vmatmul.mubr.bf16.gmra.mrb[0].mxu0 %v1480
      %v1629 = vpop.f32.mrb[0].mxu0
      %v1630 = vadd.f32 0.0, %v1629
      %v1631 = vpop.f32.mrb[0].mxu0
      %v1632 = vpop.f32.mrb[0].mxu0
      %v1633 = vadd.f32 0.0, %v1632
      %v1634 = vpop.f32.mrb[0].mxu0
      %1635 = vmatprep.mubr.bf16.mxu0 0
      %1636 = vmatmul.mubr.bf16.gmra.mrb[0].mxu0 %v1481
      %v1637 = vpop.f32.mrb[0].mxu0
      %v1638 = vadd.f32 0.0, %v1637
      %v1639 = vpop.f32.mrb[0].mxu0
      %v1640 = vpop.f32.mrb[0].mxu0
      %v1641 = vadd.f32 0.0, %v1640
      %v1642 = vpop.f32.mrb[0].mxu0
      %1643 = vmatprep.mubr.bf16.mxu0 0
      %1644 = vmatmul.mubr.bf16.gmra.mrb[0].mxu0 %v1482
      %v1645 = vpop.f32.mrb[0].mxu0
      %v1646 = vadd.f32 0.0, %v1645
      %v1647 = vpop.f32.mrb[0].mxu0
      %v1648 = vpop.f32.mrb[0].mxu0
      %v1649 = vadd.f32 0.0, %v1648
      %v1650 = vpop.f32.mrb[0].mxu0
      %1651 = vmatprep.mubr.bf16.mxu0 0
      %1652 = vmatmul.mubr.bf16.gmra.mrb[0].mxu0 %v1483
      %v1653 = vpop.f32.mrb[0].mxu0
      %v1654 = vadd.f32 0.0, %v1653
      %v1655 = vpop.f32.mrb[0].mxu0
      %v1656 = vpop.f32.mrb[0].mxu0
      %v1657 = vadd.f32 0.0, %v1656
      %v1658 = vpop.f32.mrb[0].mxu0
      %1659 = vmatprep.mubr.bf16.mxu0 0
      %1660 = vmatmul.mubr.bf16.gmra.mrb[0].mxu0 %v1484
      %v1661 = vpop.f32.mrb[0].mxu0
      %v1662 = vadd.f32 0.0, %v1661
      %v1663 = vpop.f32.mrb[0].mxu0
      %v1664 = vpop.f32.mrb[0].mxu0
      %v1665 = vadd.f32 0.0, %v1664
      %v1666 = vpop.f32.mrb[0].mxu0
      %1667 = vmatprep.mubr.bf16.mxu0 0
      %1668 = vmatmul.mubr.bf16.gmra.mrb[0].mxu0 %v1485
      %v1669 = vpop.f32.mrb[0].mxu0
      %v1670 = vadd.f32 0.0, %v1669
      %v1671 = vpop.f32.mrb[0].mxu0
      %v1672 = vpop.f32.mrb[0].mxu0
      %v1673 = vadd.f32 0.0, %v1672
      %v1674 = vpop.f32.mrb[0].mxu0
      %1675 = vmatprep.mubr.bf16.mxu0 0
      %1676 = vmatmul.mubr.bf16.gmra.mrb[0].mxu0 %v1486
      %v1677 = vpop.f32.mrb[0].mxu0
      %v1678 = vadd.f32 0.0, %v1677
      %v1679 = vpop.f32.mrb[0].mxu0
      %v1680 = vpop.f32.mrb[0].mxu0
      %v1681 = vadd.f32 0.0, %v1680
      %v1682 = vpop.f32.mrb[0].mxu0
      %1683 = vmatprep.mubr.bf16.mxu0 0
      %1684 = vmatmul.mubr.bf16.gmra.mrb[0].mxu0 %v1487
      %v1685 = vpop.f32.mrb[0].mxu0
      %v1686 = vadd.f32 0.0, %v1685
      %v1687 = vpop.f32.mrb[0].mxu0
      %v1688 = vpop.f32.mrb[0].mxu0
      %v1689 = vadd.f32 0.0, %v1688
      %v1690 = vpop.f32.mrb[0].mxu0
      %1691 = vmatprep.mubr.bf16.mxu0 0
      %1692 = vmatmul.mubr.bf16.gmra.mrb[0].mxu0 %v1488
      %v1693 = vpop.f32.mrb[0].mxu0
      %v1694 = vadd.f32 0.0, %v1693
      %v1695 = vpop.f32.mrb[0].mxu0
      %v1696 = vpop.f32.mrb[0].mxu0
      %v1697 = vadd.f32 0.0, %v1696
      %v1698 = vpop.f32.mrb[0].mxu0
      %1699 = vmatprep.mubr.bf16.mxu0 0
      %1700 = vmatmul.mubr.bf16.gmra.mrb[0].mxu0 %v1489
      %v1701 = vpop.f32.mrb[0].mxu0
      %v1702 = vadd.f32 0.0, %v1701
      %v1703 = vpop.f32.mrb[0].mxu0
      %v1704 = vpop.f32.mrb[0].mxu0
      %v1705 = vadd.f32 0.0, %v1704
      %v1706 = vpop.f32.mrb[0].mxu0
      %1707 = vmatprep.mubr.bf16.mxu0 0
      %1708 = vmatmul.mubr.bf16.gmra.mrb[0].mxu0 %v1490
      %v1709 = vpop.f32.mrb[0].mxu0
      %v1710 = vadd.f32 0.0, %v1709
      %v1711 = vpop.f32.mrb[0].mxu0
      %v1712 = vpop.f32.mrb[0].mxu0
      %v1713 = vadd.f32 0.0, %v1712
      %v1714 = vpop.f32.mrb[0].mxu0
      %1715 = vdwg.mxu0
      %v1716 = vadd.f32 %v1137, %v1590
      %v1717 = vadd.f32 %v1140, %v1593
      %v1718 = vadd.f32 %v1145, %v1598
      %v1719 = vadd.f32 %v1148, %v1601
      %v1720 = vadd.f32 %v1153, %v1606
      %v1721 = vadd.f32 %v1156, %v1609
      %v1722 = vadd.f32 %v1161, %v1614
      %v1723 = vadd.f32 %v1164, %v1617
      %v1724 = vadd.f32 %v1169, %v1622
      %v1725 = vadd.f32 %v1172, %v1625
      %v1726 = vadd.f32 %v1177, %v1630
      %v1727 = vadd.f32 %v1180, %v1633
      %v1728 = vadd.f32 %v1185, %v1638
      %v1729 = vadd.f32 %v1188, %v1641
      %v1730 = vadd.f32 %v1193, %v1646
      %v1731 = vadd.f32 %v1196, %v1649
      %v1732 = vadd.f32 %v1201, %v1654
      %v1733 = vadd.f32 %v1204, %v1657
      %v1734 = vadd.f32 %v1209, %v1662
      %v1735 = vadd.f32 %v1212, %v1665
      %v1736 = vadd.f32 %v1217, %v1670
      %v1737 = vadd.f32 %v1220, %v1673
      %v1738 = vadd.f32 %v1225, %v1678
      %v1739 = vadd.f32 %v1228, %v1681
      %v1740 = vadd.f32 %v1233, %v1686
      %v1741 = vadd.f32 %v1236, %v1689
      %v1742 = vadd.f32 %v1241, %v1694
      %v1743 = vadd.f32 %v1244, %v1697
      %v1744 = vadd.f32 %v1249, %v1702
      %v1745 = vadd.f32 %v1252, %v1705
      %v1746 = vadd.f32 %v1257, %v1710
      %v1747 = vadd.f32 %v1260, %v1713
      %s1748 = sadd.s32 %s213, 1
      %s1749 = smul.u32 %s1748, 3
      %s1750 = smul.addr %s1749, 4
      %s1751 = scalar_lea.vmem %s195, %s1750
      %v1752 = vld [vmem:[%s1751] sm:$0xf]
      %v1753 = vld [vmem:[%s1751 + $0x4] sm:$0xf]
      %v1754 = vld [vmem:[%s1751 + $0xc] sm:$0xf]
      %v1755 = vld [vmem:[%s1751 + $0x10] sm:$0xf]
      %v1756 = vld [vmem:[%s1751 + $0x18] sm:$0xf]
      %v1757 = vld [vmem:[%s1751 + $0x1c] sm:$0xf]
      %v1758 = vld [vmem:[%s1751 + $0x24] sm:$0xf]
      %v1759 = vld [vmem:[%s1751 + $0x28] sm:$0xf]
      %v1760 = vld [vmem:[%s1751 + $0x30] sm:$0xf]
      %v1761 = vld [vmem:[%s1751 + $0x34] sm:$0xf]
      %v1762 = vld [vmem:[%s1751 + $0x3c] sm:$0xf]
      %v1763 = vld [vmem:[%s1751 + $0x40] sm:$0xf]
      %v1764 = vld [vmem:[%s1751 + $0x48] sm:$0xf]
      %v1765 = vld [vmem:[%s1751 + $0x4c] sm:$0xf]
      %v1766 = vld [vmem:[%s1751 + $0x54] sm:$0xf]
      %v1767 = vld [vmem:[%s1751 + $0x58] sm:$0xf]
      %v1768 = vld [vmem:[%s1751 + $0x60] sm:$0xf]
      %v1769 = vld [vmem:[%s1751 + $0x64] sm:$0xf]
      %v1770 = vld [vmem:[%s1751 + $0x6c] sm:$0xf]
      %v1771 = vld [vmem:[%s1751 + $0x70] sm:$0xf]
      %v1772 = vld [vmem:[%s1751 + $0x78] sm:$0xf]
      %v1773 = vld [vmem:[%s1751 + $0x7c] sm:$0xf]
      %v1774 = vld [vmem:[%s1751 + $0x84] sm:$0xf]
      %v1775 = vld [vmem:[%s1751 + $0x88] sm:$0xf]
      %v1776 = vld [vmem:[%s1751 + $0x90] sm:$0xf]
      %v1777 = vld [vmem:[%s1751 + $0x94] sm:$0xf]
      %v1778 = vld [vmem:[%s1751 + $0x9c] sm:$0xf]
      %v1779 = vld [vmem:[%s1751 + $0xa0] sm:$0xf]
      %v1780 = vld [vmem:[%s1751 + $0xa8] sm:$0xf]
      %v1781 = vld [vmem:[%s1751 + $0xac] sm:$0xf]
      %v1782 = vld [vmem:[%s1751 + $0xb4] sm:$0xf]
      %v1783 = vld [vmem:[%s1751 + $0xb8] sm:$0xf]
      %s1784 = scalar_lea.vmem %s1, 192
      %v1785 = vld [vmem:[%s1784] sm:$0xf]
      %v1786 = vld [vmem:[%s1784 + $0x4] sm:$0xf]
      %v1787 = vld [vmem:[%s1784 + $0x8] sm:$0xf]
      %v1788 = vld [vmem:[%s1784 + $0xc] sm:$0xf]
      %v1789 = vld [vmem:[%s1784 + $0x10] sm:$0xf]
      %v1790 = vld [vmem:[%s1784 + $0x14] sm:$0xf]
      %v1791 = vld [vmem:[%s1784 + $0x18] sm:$0xf]
      %v1792 = vld [vmem:[%s1784 + $0x1c] sm:$0xf]
      %v1793 = vld [vmem:[%s1784 + $0x20] sm:$0xf]
      %v1794 = vld [vmem:[%s1784 + $0x24] sm:$0xf]
      %v1795 = vld [vmem:[%s1784 + $0x28] sm:$0xf]
      %v1796 = vld [vmem:[%s1784 + $0x2c] sm:$0xf]
      %v1797 = vld [vmem:[%s1784 + $0x30] sm:$0xf]
      %v1798 = vld [vmem:[%s1784 + $0x34] sm:$0xf]
      %v1799 = vld [vmem:[%s1784 + $0x38] sm:$0xf]
      %v1800 = vld [vmem:[%s1784 + $0x3c] sm:$0xf]
      %v1833 = vunpack.c.l.b16 %v1752
      %v1834 = vunpack.c.l.b16 %v1753
      %v1835 = vunpack.c.l.b16 %v1754
      %v1836 = vunpack.c.l.b16 %v1755
      %v1837 = vunpack.c.l.b16 %v1756
      %v1838 = vunpack.c.l.b16 %v1757
      %v1839 = vunpack.c.l.b16 %v1758
      %v1840 = vunpack.c.l.b16 %v1759
      %v1841 = vunpack.c.l.b16 %v1760
      %v1842 = vunpack.c.l.b16 %v1761
      %v1843 = vunpack.c.l.b16 %v1762
      %v1844 = vunpack.c.l.b16 %v1763
      %v1845 = vunpack.c.l.b16 %v1764
      %v1846 = vunpack.c.l.b16 %v1765
      %v1847 = vunpack.c.l.b16 %v1766
      %v1848 = vunpack.c.l.b16 %v1767
      %v1849 = vunpack.c.l.b16 %v1768
      %v1850 = vunpack.c.l.b16 %v1769
      %v1851 = vunpack.c.l.b16 %v1770
      %v1852 = vunpack.c.l.b16 %v1771
      %v1853 = vunpack.c.l.b16 %v1772
      %v1854 = vunpack.c.l.b16 %v1773
      %v1855 = vunpack.c.l.b16 %v1774
      %v1856 = vunpack.c.l.b16 %v1775
      %v1857 = vunpack.c.l.b16 %v1776
      %v1858 = vunpack.c.l.b16 %v1777
      %v1859 = vunpack.c.l.b16 %v1778
      %v1860 = vunpack.c.l.b16 %v1779
      %v1861 = vunpack.c.l.b16 %v1780
      %v1862 = vunpack.c.l.b16 %v1781
      %v1863 = vunpack.c.l.b16 %v1782
      %v1864 = vunpack.c.l.b16 %v1783
      %v1865 = vpack.c.b16 %v1834, %v1833
      %v1866 = vpack.c.b16 %v1836, %v1835
      %v1867 = vpack.c.b16 %v1838, %v1837
      %v1868 = vpack.c.b16 %v1840, %v1839
      %v1869 = vpack.c.b16 %v1842, %v1841
      %v1870 = vpack.c.b16 %v1844, %v1843
      %v1871 = vpack.c.b16 %v1846, %v1845
      %v1872 = vpack.c.b16 %v1848, %v1847
      %v1873 = vpack.c.b16 %v1850, %v1849
      %v1874 = vpack.c.b16 %v1852, %v1851
      %v1875 = vpack.c.b16 %v1854, %v1853
      %v1876 = vpack.c.b16 %v1856, %v1855
      %v1877 = vpack.c.b16 %v1858, %v1857
      %v1878 = vpack.c.b16 %v1860, %v1859
      %v1879 = vpack.c.b16 %v1862, %v1861
      %v1880 = vpack.c.b16 %v1864, %v1863
      %v1913 = vunpack.c.l.b16 %v1785
      %v1914 = vunpack.c.l.b16 %v1786
      %v1915 = vunpack.c.l.b16 %v1787
      %v1916 = vunpack.c.l.b16 %v1788
      %v1917 = vunpack.c.l.b16 %v1789
      %v1918 = vunpack.c.l.b16 %v1790
      %v1919 = vunpack.c.l.b16 %v1791
      %v1920 = vunpack.c.l.b16 %v1792
      %v1921 = vunpack.c.l.b16 %v1793
      %v1922 = vunpack.c.l.b16 %v1794
      %v1923 = vunpack.c.l.b16 %v1795
      %v1924 = vunpack.c.l.b16 %v1796
      %v1925 = vunpack.c.l.b16 %v1797
      %v1926 = vunpack.c.l.b16 %v1798
      %v1927 = vunpack.c.l.b16 %v1799
      %v1928 = vunpack.c.l.b16 %v1800
      %v1929 = vpack.c.b16 %v1914, %v1913
      %v1930 = vpack.c.b16 %v1916, %v1915
      %v1931 = vpack.c.b16 %v1918, %v1917
      %v1932 = vpack.c.b16 %v1920, %v1919
      %v1933 = vpack.c.b16 %v1922, %v1921
      %v1934 = vpack.c.b16 %v1924, %v1923
      %v1935 = vpack.c.b16 %v1926, %v1925
      %v1936 = vpack.c.b16 %v1928, %v1927
      %1945 = vmatprep.subr.bf16.mxu0 0
      %1946 = vmatpush1.bf16.msra.mxu0 %v1929
      %1947 = vmatprep.subr.bf16.mxu0 0
      %1948 = vmatpush1.bf16.msra.mxu0 %v1930
      %1949 = vmatprep.subr.bf16.mxu0 0
      %1950 = vmatpush1.bf16.msra.mxu0 %v1931
      %1951 = vmatprep.subr.bf16.mxu0 0
      %1952 = vmatpush1.bf16.msra.mxu0 %v1932
      %1953 = vmatprep.subr.bf16.mxu0 0
      %1954 = vmatpush1.bf16.msra.mxu0 %v1933
      %1955 = vmatprep.subr.bf16.mxu0 0
      %1956 = vmatpush1.bf16.msra.mxu0 %v1934
      %1957 = vmatprep.subr.bf16.mxu0 0
      %1958 = vmatpush1.bf16.msra.mxu0 %v1935
      %1959 = vmatprep.subr.bf16.mxu0 0
      %1960 = vmatpush1.bf16.msra.mxu0 %v1936
      %1961 = vmatprep.subr.bf16.mxu0 0
      %1962 = vmatpush1.bf16.msra.mxu0 0
      %1963 = vmatprep.subr.bf16.mxu0 0
      %1964 = vmatpush1.bf16.msra.mxu0 0
      %1965 = vmatprep.subr.bf16.mxu0 0
      %1966 = vmatpush1.bf16.msra.mxu0 0
      %1967 = vmatprep.subr.bf16.mxu0 0
      %1968 = vmatpush1.bf16.msra.mxu0 0
      %1969 = vmatprep.subr.bf16.mxu0 0
      %1970 = vmatpush1.bf16.msra.mxu0 0
      %1971 = vmatprep.subr.bf16.mxu0 0
      %1972 = vmatpush1.bf16.msra.mxu0 0
      %1973 = vmatprep.subr.bf16.mxu0 0
      %1974 = vmatpush1.bf16.msra.mxu0 0
      %1975 = vmatprep.subr.bf16.mxu0 0
      %1976 = vmatpush1.bf16.msra.mxu0 0
      %1977 = vmatprep.mubr.bf16.mxu0 0
      %1978 = vmatmul.mubr.bf16.gmra.mrb[0].mxu0 %v1865
      %v1979 = vpop.f32.mrb[0].mxu0
      %v1980 = vadd.f32 0.0, %v1979
      %v1981 = vpop.f32.mrb[0].mxu0
      %v1982 = vpop.f32.mrb[0].mxu0
      %v1983 = vadd.f32 0.0, %v1982
      %v1984 = vpop.f32.mrb[0].mxu0
      %1985 = vmatprep.mubr.bf16.mxu0 0
      %1986 = vmatmul.mubr.bf16.gmra.mrb[0].mxu0 %v1866
      %v1987 = vpop.f32.mrb[0].mxu0
      %v1988 = vadd.f32 0.0, %v1987
      %v1989 = vpop.f32.mrb[0].mxu0
      %v1990 = vpop.f32.mrb[0].mxu0
      %v1991 = vadd.f32 0.0, %v1990
      %v1992 = vpop.f32.mrb[0].mxu0
      %1993 = vmatprep.mubr.bf16.mxu0 0
      %1994 = vmatmul.mubr.bf16.gmra.mrb[0].mxu0 %v1867
      %v1995 = vpop.f32.mrb[0].mxu0
      %v1996 = vadd.f32 0.0, %v1995
      %v1997 = vpop.f32.mrb[0].mxu0
      %v1998 = vpop.f32.mrb[0].mxu0
      %v1999 = vadd.f32 0.0, %v1998
      %v2000 = vpop.f32.mrb[0].mxu0
      %2001 = vmatprep.mubr.bf16.mxu0 0
      %2002 = vmatmul.mubr.bf16.gmra.mrb[0].mxu0 %v1868
      %v2003 = vpop.f32.mrb[0].mxu0
      %v2004 = vadd.f32 0.0, %v2003
      %v2005 = vpop.f32.mrb[0].mxu0
      %v2006 = vpop.f32.mrb[0].mxu0
      %v2007 = vadd.f32 0.0, %v2006
      %v2008 = vpop.f32.mrb[0].mxu0
      %2009 = vmatprep.mubr.bf16.mxu0 0
      %2010 = vmatmul.mubr.bf16.gmra.mrb[0].mxu0 %v1869
      %v2011 = vpop.f32.mrb[0].mxu0
      %v2012 = vadd.f32 0.0, %v2011
      %v2013 = vpop.f32.mrb[0].mxu0
      %v2014 = vpop.f32.mrb[0].mxu0
      %v2015 = vadd.f32 0.0, %v2014
      %v2016 = vpop.f32.mrb[0].mxu0
      %2017 = vmatprep.mubr.bf16.mxu0 0
      %2018 = vmatmul.mubr.bf16.gmra.mrb[0].mxu0 %v1870
      %v2019 = vpop.f32.mrb[0].mxu0
      %v2020 = vadd.f32 0.0, %v2019
      %v2021 = vpop.f32.mrb[0].mxu0
      %v2022 = vpop.f32.mrb[0].mxu0
      %v2023 = vadd.f32 0.0, %v2022
      %v2024 = vpop.f32.mrb[0].mxu0
      %2025 = vmatprep.mubr.bf16.mxu0 0
      %2026 = vmatmul.mubr.bf16.gmra.mrb[0].mxu0 %v1871
      %v2027 = vpop.f32.mrb[0].mxu0
      %v2028 = vadd.f32 0.0, %v2027
      %v2029 = vpop.f32.mrb[0].mxu0
      %v2030 = vpop.f32.mrb[0].mxu0
      %v2031 = vadd.f32 0.0, %v2030
      %v2032 = vpop.f32.mrb[0].mxu0
      %2033 = vmatprep.mubr.bf16.mxu0 0
      %2034 = vmatmul.mubr.bf16.gmra.mrb[0].mxu0 %v1872
      %v2035 = vpop.f32.mrb[0].mxu0
      %v2036 = vadd.f32 0.0, %v2035
      %v2037 = vpop.f32.mrb[0].mxu0
      %v2038 = vpop.f32.mrb[0].mxu0
      %v2039 = vadd.f32 0.0, %v2038
      %v2040 = vpop.f32.mrb[0].mxu0
      %2041 = vmatprep.mubr.bf16.mxu0 0
      %2042 = vmatmul.mubr.bf16.gmra.mrb[0].mxu0 %v1873
      %v2043 = vpop.f32.mrb[0].mxu0
      %v2044 = vadd.f32 0.0, %v2043
      %v2045 = vpop.f32.mrb[0].mxu0
      %v2046 = vpop.f32.mrb[0].mxu0
      %v2047 = vadd.f32 0.0, %v2046
      %v2048 = vpop.f32.mrb[0].mxu0
      %2049 = vmatprep.mubr.bf16.mxu0 0
      %2050 = vmatmul.mubr.bf16.gmra.mrb[0].mxu0 %v1874
      %v2051 = vpop.f32.mrb[0].mxu0
      %v2052 = vadd.f32 0.0, %v2051
      %v2053 = vpop.f32.mrb[0].mxu0
      %v2054 = vpop.f32.mrb[0].mxu0
      %v2055 = vadd.f32 0.0, %v2054
      %v2056 = vpop.f32.mrb[0].mxu0
      %2057 = vmatprep.mubr.bf16.mxu0 0
      %2058 = vmatmul.mubr.bf16.gmra.mrb[0].mxu0 %v1875
      %v2059 = vpop.f32.mrb[0].mxu0
      %v2060 = vadd.f32 0.0, %v2059
      %v2061 = vpop.f32.mrb[0].mxu0
      %v2062 = vpop.f32.mrb[0].mxu0
      %v2063 = vadd.f32 0.0, %v2062
      %v2064 = vpop.f32.mrb[0].mxu0
      %2065 = vmatprep.mubr.bf16.mxu0 0
      %2066 = vmatmul.mubr.bf16.gmra.mrb[0].mxu0 %v1876
      %v2067 = vpop.f32.mrb[0].mxu0
      %v2068 = vadd.f32 0.0, %v2067
      %v2069 = vpop.f32.mrb[0].mxu0
      %v2070 = vpop.f32.mrb[0].mxu0
      %v2071 = vadd.f32 0.0, %v2070
      %v2072 = vpop.f32.mrb[0].mxu0
      %2073 = vmatprep.mubr.bf16.mxu0 0
      %2074 = vmatmul.mubr.bf16.gmra.mrb[0].mxu0 %v1877
      %v2075 = vpop.f32.mrb[0].mxu0
      %v2076 = vadd.f32 0.0, %v2075
      %v2077 = vpop.f32.mrb[0].mxu0
      %v2078 = vpop.f32.mrb[0].mxu0
      %v2079 = vadd.f32 0.0, %v2078
      %v2080 = vpop.f32.mrb[0].mxu0
      %2081 = vmatprep.mubr.bf16.mxu0 0
      %2082 = vmatmul.mubr.bf16.gmra.mrb[0].mxu0 %v1878
      %v2083 = vpop.f32.mrb[0].mxu0
      %v2084 = vadd.f32 0.0, %v2083
      %v2085 = vpop.f32.mrb[0].mxu0
      %v2086 = vpop.f32.mrb[0].mxu0
      %v2087 = vadd.f32 0.0, %v2086
      %v2088 = vpop.f32.mrb[0].mxu0
      %2089 = vmatprep.mubr.bf16.mxu0 0
      %2090 = vmatmul.mubr.bf16.gmra.mrb[0].mxu0 %v1879
      %v2091 = vpop.f32.mrb[0].mxu0
      %v2092 = vadd.f32 0.0, %v2091
      %v2093 = vpop.f32.mrb[0].mxu0
      %v2094 = vpop.f32.mrb[0].mxu0
      %v2095 = vadd.f32 0.0, %v2094
      %v2096 = vpop.f32.mrb[0].mxu0
      %2097 = vmatprep.mubr.bf16.mxu0 0
      %2098 = vmatmul.mubr.bf16.gmra.mrb[0].mxu0 %v1880
      %v2099 = vpop.f32.mrb[0].mxu0
      %v2100 = vadd.f32 0.0, %v2099
      %v2101 = vpop.f32.mrb[0].mxu0
      %v2102 = vpop.f32.mrb[0].mxu0
      %v2103 = vadd.f32 0.0, %v2102
      %v2104 = vpop.f32.mrb[0].mxu0
      %2105 = vdwg.mxu0
      %v2106 = vadd.f32 %v1716, %v1980
      %v2107 = vadd.f32 %v1717, %v1983
      %v2108 = vadd.f32 %v1718, %v1988
      %v2109 = vadd.f32 %v1719, %v1991
      %v2110 = vadd.f32 %v1720, %v1996
      %v2111 = vadd.f32 %v1721, %v1999
      %v2112 = vadd.f32 %v1722, %v2004
      %v2113 = vadd.f32 %v1723, %v2007
      %v2114 = vadd.f32 %v1724, %v2012
      %v2115 = vadd.f32 %v1725, %v2015
      %v2116 = vadd.f32 %v1726, %v2020
      %v2117 = vadd.f32 %v1727, %v2023
      %v2118 = vadd.f32 %v1728, %v2028
      %v2119 = vadd.f32 %v1729, %v2031
      %v2120 = vadd.f32 %v1730, %v2036
      %v2121 = vadd.f32 %v1731, %v2039
      %v2122 = vadd.f32 %v1732, %v2044
      %v2123 = vadd.f32 %v1733, %v2047
      %v2124 = vadd.f32 %v1734, %v2052
      %v2125 = vadd.f32 %v1735, %v2055
      %v2126 = vadd.f32 %v1736, %v2060
      %v2127 = vadd.f32 %v1737, %v2063
      %v2128 = vadd.f32 %v1738, %v2068
      %v2129 = vadd.f32 %v1739, %v2071
      %v2130 = vadd.f32 %v1740, %v2076
      %v2131 = vadd.f32 %v1741, %v2079
      %v2132 = vadd.f32 %v1742, %v2084
      %v2133 = vadd.f32 %v1743, %v2087
      %v2134 = vadd.f32 %v1744, %v2092
      %v2135 = vadd.f32 %v1745, %v2095
      %v2136 = vadd.f32 %v1746, %v2100
      %v2137 = vadd.f32 %v1747, %v2103
      %v2138 = vld [vmem:[%s1751] sm:$0xf]
      %v2139 = vld [vmem:[%s1751 + $0x4] sm:$0xf]
      %v2140 = vld [vmem:[%s1751 + $0x8] sm:$0x1]
      %v2141 = vld [vmem:[%s1751 + $0xc] sm:$0xf]
      %v2142 = vld [vmem:[%s1751 + $0x10] sm:$0xf]
      %v2143 = vld [vmem:[%s1751 + $0x14] sm:$0x1]
      %v2144 = vld [vmem:[%s1751 + $0x18] sm:$0xf]
      %v2145 = vld [vmem:[%s1751 + $0x1c] sm:$0xf]
      %v2146 = vld [vmem:[%s1751 + $0x20] sm:$0x1]
      %v2147 = vld [vmem:[%s1751 + $0x24] sm:$0xf]
      %v2148 = vld [vmem:[%s1751 + $0x28] sm:$0xf]
      %v2149 = vld [vmem:[%s1751 + $0x2c] sm:$0x1]
      %v2150 = vld [vmem:[%s1751 + $0x30] sm:$0xf]
      %v2151 = vld [vmem:[%s1751 + $0x34] sm:$0xf]
      %v2152 = vld [vmem:[%s1751 + $0x38] sm:$0x1]
      %v2153 = vld [vmem:[%s1751 + $0x3c] sm:$0xf]
      %v2154 = vld [vmem:[%s1751 + $0x40] sm:$0xf]
      %v2155 = vld [vmem:[%s1751 + $0x44] sm:$0x1]
      %v2156 = vld [vmem:[%s1751 + $0x48] sm:$0xf]
      %v2157 = vld [vmem:[%s1751 + $0x4c] sm:$0xf]
      %v2158 = vld [vmem:[%s1751 + $0x50] sm:$0x1]
      %v2159 = vld [vmem:[%s1751 + $0x54] sm:$0xf]
      %v2160 = vld [vmem:[%s1751 + $0x58] sm:$0xf]
      %v2161 = vld [vmem:[%s1751 + $0x5c] sm:$0x1]
      %v2162 = vld [vmem:[%s1751 + $0x60] sm:$0xf]
      %v2163 = vld [vmem:[%s1751 + $0x64] sm:$0xf]
      %v2164 = vld [vmem:[%s1751 + $0x68] sm:$0x1]
      %v2165 = vld [vmem:[%s1751 + $0x6c] sm:$0xf]
      %v2166 = vld [vmem:[%s1751 + $0x70] sm:$0xf]
      %v2167 = vld [vmem:[%s1751 + $0x74] sm:$0x1]
      %v2168 = vld [vmem:[%s1751 + $0x78] sm:$0xf]
      %v2169 = vld [vmem:[%s1751 + $0x7c] sm:$0xf]
      %v2170 = vld [vmem:[%s1751 + $0x80] sm:$0x1]
      %v2171 = vld [vmem:[%s1751 + $0x84] sm:$0xf]
      %v2172 = vld [vmem:[%s1751 + $0x88] sm:$0xf]
      %v2173 = vld [vmem:[%s1751 + $0x8c] sm:$0x1]
      %v2174 = vld [vmem:[%s1751 + $0x90] sm:$0xf]
      %v2175 = vld [vmem:[%s1751 + $0x94] sm:$0xf]
      %v2176 = vld [vmem:[%s1751 + $0x98] sm:$0x1]
      %v2177 = vld [vmem:[%s1751 + $0x9c] sm:$0xf]
      %v2178 = vld [vmem:[%s1751 + $0xa0] sm:$0xf]
      %v2179 = vld [vmem:[%s1751 + $0xa4] sm:$0x1]
      %v2180 = vld [vmem:[%s1751 + $0xa8] sm:$0xf]
      %v2181 = vld [vmem:[%s1751 + $0xac] sm:$0xf]
      %v2182 = vld [vmem:[%s1751 + $0xb0] sm:$0x1]
      %v2183 = vld [vmem:[%s1751 + $0xb4] sm:$0xf]
      %v2184 = vld [vmem:[%s1751 + $0xb8] sm:$0xf]
      %v2185 = vld [vmem:[%s1751 + $0xbc] sm:$0x1]
      %v2187 = vshrl.u32 %v2138, 16
      %v2189 = vrot.slane %v2187, 4
      %v2190 = vshll.u32 %v2138, 16
      %v2192 = vrot.slane %v2190, 5
      %v2193 = vor.u32 %v2189, %v2192
      %v2194 = vrot.slane %v2193, 4
      %v2196 = vshll.u32 %v2139, 16
      %v2198 = vrot.slane %v2196, 5
      %v2199 = vsel %vm283, %v2194, %v2198
      %v2200 = vshrl.u32 %v2139, 16
      %v2202 = vrot.slane %v2200, 4
      %v2203 = vor.u32 %v2202, %v2198
      %v2204 = vrot.slane %v2203, 4
      %v2206 = vshll.u32 %v2140, 16
      %v2208 = vrot.slane %v2206, 5
      %v2209 = vsel %vm283, %v2204, %v2208
      %v2211 = vshrl.u32 %v2141, 16
      %v2213 = vrot.slane %v2211, 4
      %v2214 = vshll.u32 %v2141, 16
      %v2216 = vrot.slane %v2214, 5
      %v2217 = vor.u32 %v2213, %v2216
      %v2218 = vrot.slane %v2217, 4
      %v2220 = vshll.u32 %v2142, 16
      %v2222 = vrot.slane %v2220, 5
      %v2223 = vsel %vm283, %v2218, %v2222
      %v2224 = vshrl.u32 %v2142, 16
      %v2226 = vrot.slane %v2224, 4
      %v2227 = vor.u32 %v2226, %v2222
      %v2228 = vrot.slane %v2227, 4
      %v2230 = vshll.u32 %v2143, 16
      %v2232 = vrot.slane %v2230, 5
      %v2233 = vsel %vm283, %v2228, %v2232
      %v2235 = vshrl.u32 %v2144, 16
      %v2237 = vrot.slane %v2235, 4
      %v2238 = vshll.u32 %v2144, 16
      %v2240 = vrot.slane %v2238, 5
      %v2241 = vor.u32 %v2237, %v2240
      %v2242 = vrot.slane %v2241, 4
      %v2244 = vshll.u32 %v2145, 16
      %v2246 = vrot.slane %v2244, 5
      %v2247 = vsel %vm283, %v2242, %v2246
      %v2248 = vshrl.u32 %v2145, 16
      %v2250 = vrot.slane %v2248, 4
      %v2251 = vor.u32 %v2250, %v2246
      %v2252 = vrot.slane %v2251, 4
      %v2254 = vshll.u32 %v2146, 16
      %v2256 = vrot.slane %v2254, 5
      %v2257 = vsel %vm283, %v2252, %v2256
      %v2259 = vshrl.u32 %v2147, 16
      %v2261 = vrot.slane %v2259, 4
      %v2262 = vshll.u32 %v2147, 16
      %v2264 = vrot.slane %v2262, 5
      %v2265 = vor.u32 %v2261, %v2264
      %v2266 = vrot.slane %v2265, 4
      %v2268 = vshll.u32 %v2148, 16
      %v2270 = vrot.slane %v2268, 5
      %v2271 = vsel %vm283, %v2266, %v2270
      %v2272 = vshrl.u32 %v2148, 16
      %v2274 = vrot.slane %v2272, 4
      %v2275 = vor.u32 %v2274, %v2270
      %v2276 = vrot.slane %v2275, 4
      %v2278 = vshll.u32 %v2149, 16
      %v2280 = vrot.slane %v2278, 5
      %v2281 = vsel %vm283, %v2276, %v2280
      %v2283 = vshrl.u32 %v2150, 16
      %v2285 = vrot.slane %v2283, 4
      %v2286 = vshll.u32 %v2150, 16
      %v2288 = vrot.slane %v2286, 5
      %v2289 = vor.u32 %v2285, %v2288
      %v2290 = vrot.slane %v2289, 4
      %v2292 = vshll.u32 %v2151, 16
      %v2294 = vrot.slane %v2292, 5
      %v2295 = vsel %vm283, %v2290, %v2294
      %v2296 = vshrl.u32 %v2151, 16
      %v2298 = vrot.slane %v2296, 4
      %v2299 = vor.u32 %v2298, %v2294
      %v2300 = vrot.slane %v2299, 4
      %v2302 = vshll.u32 %v2152, 16
      %v2304 = vrot.slane %v2302, 5
      %v2305 = vsel %vm283, %v2300, %v2304
      %v2307 = vshrl.u32 %v2153, 16
      %v2309 = vrot.slane %v2307, 4
      %v2310 = vshll.u32 %v2153, 16
      %v2312 = vrot.slane %v2310, 5
      %v2313 = vor.u32 %v2309, %v2312
      %v2314 = vrot.slane %v2313, 4
      %v2316 = vshll.u32 %v2154, 16
      %v2318 = vrot.slane %v2316, 5
      %v2319 = vsel %vm283, %v2314, %v2318
      %v2320 = vshrl.u32 %v2154, 16
      %v2322 = vrot.slane %v2320, 4
      %v2323 = vor.u32 %v2322, %v2318
      %v2324 = vrot.slane %v2323, 4
      %v2326 = vshll.u32 %v2155, 16
      %v2328 = vrot.slane %v2326, 5
      %v2329 = vsel %vm283, %v2324, %v2328
      %v2331 = vshrl.u32 %v2156, 16
      %v2333 = vrot.slane %v2331, 4
      %v2334 = vshll.u32 %v2156, 16
      %v2336 = vrot.slane %v2334, 5
      %v2337 = vor.u32 %v2333, %v2336
      %v2338 = vrot.slane %v2337, 4
      %v2340 = vshll.u32 %v2157, 16
      %v2342 = vrot.slane %v2340, 5
      %v2343 = vsel %vm283, %v2338, %v2342
      %v2344 = vshrl.u32 %v2157, 16
      %v2346 = vrot.slane %v2344, 4
      %v2347 = vor.u32 %v2346, %v2342
      %v2348 = vrot.slane %v2347, 4
      %v2350 = vshll.u32 %v2158, 16
      %v2352 = vrot.slane %v2350, 5
      %v2353 = vsel %vm283, %v2348, %v2352
      %v2355 = vshrl.u32 %v2159, 16
      %v2357 = vrot.slane %v2355, 4
      %v2358 = vshll.u32 %v2159, 16
      %v2360 = vrot.slane %v2358, 5
      %v2361 = vor.u32 %v2357, %v2360
      %v2362 = vrot.slane %v2361, 4
      %v2364 = vshll.u32 %v2160, 16
      %v2366 = vrot.slane %v2364, 5
      %v2367 = vsel %vm283, %v2362, %v2366
      %v2368 = vshrl.u32 %v2160, 16
      %v2370 = vrot.slane %v2368, 4
      %v2371 = vor.u32 %v2370, %v2366
      %v2372 = vrot.slane %v2371, 4
      %v2374 = vshll.u32 %v2161, 16
      %v2376 = vrot.slane %v2374, 5
      %v2377 = vsel %vm283, %v2372, %v2376
      %v2379 = vshrl.u32 %v2162, 16
      %v2381 = vrot.slane %v2379, 4
      %v2382 = vshll.u32 %v2162, 16
      %v2384 = vrot.slane %v2382, 5
      %v2385 = vor.u32 %v2381, %v2384
      %v2386 = vrot.slane %v2385, 4
      %v2388 = vshll.u32 %v2163, 16
      %v2390 = vrot.slane %v2388, 5
      %v2391 = vsel %vm283, %v2386, %v2390
      %v2392 = vshrl.u32 %v2163, 16
      %v2394 = vrot.slane %v2392, 4
      %v2395 = vor.u32 %v2394, %v2390
      %v2396 = vrot.slane %v2395, 4
      %v2398 = vshll.u32 %v2164, 16
      %v2400 = vrot.slane %v2398, 5
      %v2401 = vsel %vm283, %v2396, %v2400
      %v2403 = vshrl.u32 %v2165, 16
      %v2405 = vrot.slane %v2403, 4
      %v2406 = vshll.u32 %v2165, 16
      %v2408 = vrot.slane %v2406, 5
      %v2409 = vor.u32 %v2405, %v2408
      %v2410 = vrot.slane %v2409, 4
      %v2412 = vshll.u32 %v2166, 16
      %v2414 = vrot.slane %v2412, 5
      %v2415 = vsel %vm283, %v2410, %v2414
      %v2416 = vshrl.u32 %v2166, 16
      %v2418 = vrot.slane %v2416, 4
      %v2419 = vor.u32 %v2418, %v2414
      %v2420 = vrot.slane %v2419, 4
      %v2422 = vshll.u32 %v2167, 16
      %v2424 = vrot.slane %v2422, 5
      %v2425 = vsel %vm283, %v2420, %v2424
      %v2427 = vshrl.u32 %v2168, 16
      %v2429 = vrot.slane %v2427, 4
      %v2430 = vshll.u32 %v2168, 16
      %v2432 = vrot.slane %v2430, 5
      %v2433 = vor.u32 %v2429, %v2432
      %v2434 = vrot.slane %v2433, 4
      %v2436 = vshll.u32 %v2169, 16
      %v2438 = vrot.slane %v2436, 5
      %v2439 = vsel %vm283, %v2434, %v2438
      %v2440 = vshrl.u32 %v2169, 16
      %v2442 = vrot.slane %v2440, 4
      %v2443 = vor.u32 %v2442, %v2438
      %v2444 = vrot.slane %v2443, 4
      %v2446 = vshll.u32 %v2170, 16
      %v2448 = vrot.slane %v2446, 5
      %v2449 = vsel %vm283, %v2444, %v2448
      %v2451 = vshrl.u32 %v2171, 16
      %v2453 = vrot.slane %v2451, 4
      %v2454 = vshll.u32 %v2171, 16
      %v2456 = vrot.slane %v2454, 5
      %v2457 = vor.u32 %v2453, %v2456
      %v2458 = vrot.slane %v2457, 4
      %v2460 = vshll.u32 %v2172, 16
      %v2462 = vrot.slane %v2460, 5
      %v2463 = vsel %vm283, %v2458, %v2462
      %v2464 = vshrl.u32 %v2172, 16
      %v2466 = vrot.slane %v2464, 4
      %v2467 = vor.u32 %v2466, %v2462
      %v2468 = vrot.slane %v2467, 4
      %v2470 = vshll.u32 %v2173, 16
      %v2472 = vrot.slane %v2470, 5
      %v2473 = vsel %vm283, %v2468, %v2472
      %v2475 = vshrl.u32 %v2174, 16
      %v2477 = vrot.slane %v2475, 4
      %v2478 = vshll.u32 %v2174, 16
      %v2480 = vrot.slane %v2478, 5
      %v2481 = vor.u32 %v2477, %v2480
      %v2482 = vrot.slane %v2481, 4
      %v2484 = vshll.u32 %v2175, 16
      %v2486 = vrot.slane %v2484, 5
      %v2487 = vsel %vm283, %v2482, %v2486
      %v2488 = vshrl.u32 %v2175, 16
      %v2490 = vrot.slane %v2488, 4
      %v2491 = vor.u32 %v2490, %v2486
      %v2492 = vrot.slane %v2491, 4
      %v2494 = vshll.u32 %v2176, 16
      %v2496 = vrot.slane %v2494, 5
      %v2497 = vsel %vm283, %v2492, %v2496
      %v2499 = vshrl.u32 %v2177, 16
      %v2501 = vrot.slane %v2499, 4
      %v2502 = vshll.u32 %v2177, 16
      %v2504 = vrot.slane %v2502, 5
      %v2505 = vor.u32 %v2501, %v2504
      %v2506 = vrot.slane %v2505, 4
      %v2508 = vshll.u32 %v2178, 16
      %v2510 = vrot.slane %v2508, 5
      %v2511 = vsel %vm283, %v2506, %v2510
      %v2512 = vshrl.u32 %v2178, 16
      %v2514 = vrot.slane %v2512, 4
      %v2515 = vor.u32 %v2514, %v2510
      %v2516 = vrot.slane %v2515, 4
      %v2518 = vshll.u32 %v2179, 16
      %v2520 = vrot.slane %v2518, 5
      %v2521 = vsel %vm283, %v2516, %v2520
      %v2523 = vshrl.u32 %v2180, 16
      %v2525 = vrot.slane %v2523, 4
      %v2526 = vshll.u32 %v2180, 16
      %v2528 = vrot.slane %v2526, 5
      %v2529 = vor.u32 %v2525, %v2528
      %v2530 = vrot.slane %v2529, 4
      %v2532 = vshll.u32 %v2181, 16
      %v2534 = vrot.slane %v2532, 5
      %v2535 = vsel %vm283, %v2530, %v2534
      %v2536 = vshrl.u32 %v2181, 16
      %v2538 = vrot.slane %v2536, 4
      %v2539 = vor.u32 %v2538, %v2534
      %v2540 = vrot.slane %v2539, 4
      %v2542 = vshll.u32 %v2182, 16
      %v2544 = vrot.slane %v2542, 5
      %v2545 = vsel %vm283, %v2540, %v2544
      %v2547 = vshrl.u32 %v2183, 16
      %v2549 = vrot.slane %v2547, 4
      %v2550 = vshll.u32 %v2183, 16
      %v2552 = vrot.slane %v2550, 5
      %v2553 = vor.u32 %v2549, %v2552
      %v2554 = vrot.slane %v2553, 4
      %v2556 = vshll.u32 %v2184, 16
      %v2558 = vrot.slane %v2556, 5
      %v2559 = vsel %vm283, %v2554, %v2558
      %v2560 = vshrl.u32 %v2184, 16
      %v2562 = vrot.slane %v2560, 4
      %v2563 = vor.u32 %v2562, %v2558
      %v2564 = vrot.slane %v2563, 4
      %v2566 = vshll.u32 %v2185, 16
      %v2568 = vrot.slane %v2566, 5
      %v2569 = vsel %vm283, %v2564, %v2568
      %s2570 = scalar_lea.vmem %s1, 256
      %v2571 = vld [vmem:[%s2570] sm:$0xf]
      %v2572 = vld [vmem:[%s2570 + $0x4] sm:$0xf]
      %v2573 = vld [vmem:[%s2570 + $0x8] sm:$0xf]
      %v2574 = vld [vmem:[%s2570 + $0xc] sm:$0xf]
      %v2575 = vld [vmem:[%s2570 + $0x10] sm:$0xf]
      %v2576 = vld [vmem:[%s2570 + $0x14] sm:$0xf]
      %v2577 = vld [vmem:[%s2570 + $0x18] sm:$0xf]
      %v2578 = vld [vmem:[%s2570 + $0x1c] sm:$0xf]
      %v2579 = vld [vmem:[%s2570 + $0x20] sm:$0xf]
      %v2580 = vld [vmem:[%s2570 + $0x24] sm:$0xf]
      %v2581 = vld [vmem:[%s2570 + $0x28] sm:$0xf]
      %v2582 = vld [vmem:[%s2570 + $0x2c] sm:$0xf]
      %v2583 = vld [vmem:[%s2570 + $0x30] sm:$0xf]
      %v2584 = vld [vmem:[%s2570 + $0x34] sm:$0xf]
      %v2585 = vld [vmem:[%s2570 + $0x38] sm:$0xf]
      %v2586 = vld [vmem:[%s2570 + $0x3c] sm:$0xf]
      %v2587 = vunpack.c.l.b16 %v2199
      %v2588 = vunpack.c.l.b16 %v2209
      %v2589 = vunpack.c.l.b16 %v2223
      %v2590 = vunpack.c.l.b16 %v2233
      %v2591 = vunpack.c.l.b16 %v2247
      %v2592 = vunpack.c.l.b16 %v2257
      %v2593 = vunpack.c.l.b16 %v2271
      %v2594 = vunpack.c.l.b16 %v2281
      %v2595 = vunpack.c.l.b16 %v2295
      %v2596 = vunpack.c.l.b16 %v2305
      %v2597 = vunpack.c.l.b16 %v2319
      %v2598 = vunpack.c.l.b16 %v2329
      %v2599 = vunpack.c.l.b16 %v2343
      %v2600 = vunpack.c.l.b16 %v2353
      %v2601 = vunpack.c.l.b16 %v2367
      %v2602 = vunpack.c.l.b16 %v2377
      %v2603 = vunpack.c.l.b16 %v2391
      %v2604 = vunpack.c.l.b16 %v2401
      %v2605 = vunpack.c.l.b16 %v2415
      %v2606 = vunpack.c.l.b16 %v2425
      %v2607 = vunpack.c.l.b16 %v2439
      %v2608 = vunpack.c.l.b16 %v2449
      %v2609 = vunpack.c.l.b16 %v2463
      %v2610 = vunpack.c.l.b16 %v2473
      %v2611 = vunpack.c.l.b16 %v2487
      %v2612 = vunpack.c.l.b16 %v2497
      %v2613 = vunpack.c.l.b16 %v2511
      %v2614 = vunpack.c.l.b16 %v2521
      %v2615 = vunpack.c.l.b16 %v2535
      %v2616 = vunpack.c.l.b16 %v2545
      %v2617 = vunpack.c.l.b16 %v2559
      %v2618 = vunpack.c.l.b16 %v2569
      %v2619 = vpack.c.b16 %v2588, %v2587
      %v2620 = vpack.c.b16 %v2590, %v2589
      %v2621 = vpack.c.b16 %v2592, %v2591
      %v2622 = vpack.c.b16 %v2594, %v2593
      %v2623 = vpack.c.b16 %v2596, %v2595
      %v2624 = vpack.c.b16 %v2598, %v2597
      %v2625 = vpack.c.b16 %v2600, %v2599
      %v2626 = vpack.c.b16 %v2602, %v2601
      %v2627 = vpack.c.b16 %v2604, %v2603
      %v2628 = vpack.c.b16 %v2606, %v2605
      %v2629 = vpack.c.b16 %v2608, %v2607
      %v2630 = vpack.c.b16 %v2610, %v2609
      %v2631 = vpack.c.b16 %v2612, %v2611
      %v2632 = vpack.c.b16 %v2614, %v2613
      %v2633 = vpack.c.b16 %v2616, %v2615
      %v2634 = vpack.c.b16 %v2618, %v2617
      %v2667 = vunpack.c.l.b16 %v2571
      %v2668 = vunpack.c.l.b16 %v2572
      %v2669 = vunpack.c.l.b16 %v2573
      %v2670 = vunpack.c.l.b16 %v2574
      %v2671 = vunpack.c.l.b16 %v2575
      %v2672 = vunpack.c.l.b16 %v2576
      %v2673 = vunpack.c.l.b16 %v2577
      %v2674 = vunpack.c.l.b16 %v2578
      %v2675 = vunpack.c.l.b16 %v2579
      %v2676 = vunpack.c.l.b16 %v2580
      %v2677 = vunpack.c.l.b16 %v2581
      %v2678 = vunpack.c.l.b16 %v2582
      %v2679 = vunpack.c.l.b16 %v2583
      %v2680 = vunpack.c.l.b16 %v2584
      %v2681 = vunpack.c.l.b16 %v2585
      %v2682 = vunpack.c.l.b16 %v2586
      %v2683 = vpack.c.b16 %v2668, %v2667
      %v2684 = vpack.c.b16 %v2670, %v2669
      %v2685 = vpack.c.b16 %v2672, %v2671
      %v2686 = vpack.c.b16 %v2674, %v2673
      %v2687 = vpack.c.b16 %v2676, %v2675
      %v2688 = vpack.c.b16 %v2678, %v2677
      %v2689 = vpack.c.b16 %v2680, %v2679
      %v2690 = vpack.c.b16 %v2682, %v2681
      %2699 = vmatprep.subr.bf16.mxu0 0
      %2700 = vmatpush1.bf16.msra.mxu0 %v2683
      %2701 = vmatprep.subr.bf16.mxu0 0
      %2702 = vmatpush1.bf16.msra.mxu0 %v2684
      %2703 = vmatprep.subr.bf16.mxu0 0
      %2704 = vmatpush1.bf16.msra.mxu0 %v2685
      %2705 = vmatprep.subr.bf16.mxu0 0
      %2706 = vmatpush1.bf16.msra.mxu0 %v2686
      %2707 = vmatprep.subr.bf16.mxu0 0
      %2708 = vmatpush1.bf16.msra.mxu0 %v2687
      %2709 = vmatprep.subr.bf16.mxu0 0
      %2710 = vmatpush1.bf16.msra.mxu0 %v2688
      %2711 = vmatprep.subr.bf16.mxu0 0
      %2712 = vmatpush1.bf16.msra.mxu0 %v2689
      %2713 = vmatprep.subr.bf16.mxu0 0
      %2714 = vmatpush1.bf16.msra.mxu0 %v2690
      %2715 = vmatprep.subr.bf16.mxu0 0
      %2716 = vmatpush1.bf16.msra.mxu0 0
      %2717 = vmatprep.subr.bf16.mxu0 0
      %2718 = vmatpush1.bf16.msra.mxu0 0
      %2719 = vmatprep.subr.bf16.mxu0 0
      %2720 = vmatpush1.bf16.msra.mxu0 0
      %2721 = vmatprep.subr.bf16.mxu0 0
      %2722 = vmatpush1.bf16.msra.mxu0 0
      %2723 = vmatprep.subr.bf16.mxu0 0
      %2724 = vmatpush1.bf16.msra.mxu0 0
      %2725 = vmatprep.subr.bf16.mxu0 0
      %2726 = vmatpush1.bf16.msra.mxu0 0
      %2727 = vmatprep.subr.bf16.mxu0 0
      %2728 = vmatpush1.bf16.msra.mxu0 0
      %2729 = vmatprep.subr.bf16.mxu0 0
      %2730 = vmatpush1.bf16.msra.mxu0 0
      %2731 = vmatprep.mubr.bf16.mxu0 0
      %2732 = vmatmul.mubr.bf16.gmra.mrb[0].mxu0 %v2619
      %v2733 = vpop.f32.mrb[0].mxu0
      %v2734 = vadd.f32 0.0, %v2733
      %v2735 = vpop.f32.mrb[0].mxu0
      %v2736 = vpop.f32.mrb[0].mxu0
      %v2737 = vadd.f32 0.0, %v2736
      %v2738 = vpop.f32.mrb[0].mxu0
      %2739 = vmatprep.mubr.bf16.mxu0 0
      %2740 = vmatmul.mubr.bf16.gmra.mrb[0].mxu0 %v2620
      %v2741 = vpop.f32.mrb[0].mxu0
      %v2742 = vadd.f32 0.0, %v2741
      %v2743 = vpop.f32.mrb[0].mxu0
      %v2744 = vpop.f32.mrb[0].mxu0
      %v2745 = vadd.f32 0.0, %v2744
      %v2746 = vpop.f32.mrb[0].mxu0
      %2747 = vmatprep.mubr.bf16.mxu0 0
      %2748 = vmatmul.mubr.bf16.gmra.mrb[0].mxu0 %v2621
      %v2749 = vpop.f32.mrb[0].mxu0
      %v2750 = vadd.f32 0.0, %v2749
      %v2751 = vpop.f32.mrb[0].mxu0
      %v2752 = vpop.f32.mrb[0].mxu0
      %v2753 = vadd.f32 0.0, %v2752
      %v2754 = vpop.f32.mrb[0].mxu0
      %2755 = vmatprep.mubr.bf16.mxu0 0
      %2756 = vmatmul.mubr.bf16.gmra.mrb[0].mxu0 %v2622
      %v2757 = vpop.f32.mrb[0].mxu0
      %v2758 = vadd.f32 0.0, %v2757
      %v2759 = vpop.f32.mrb[0].mxu0
      %v2760 = vpop.f32.mrb[0].mxu0
      %v2761 = vadd.f32 0.0, %v2760
      %v2762 = vpop.f32.mrb[0].mxu0
      %2763 = vmatprep.mubr.bf16.mxu0 0
      %2764 = vmatmul.mubr.bf16.gmra.mrb[0].mxu0 %v2623
      %v2765 = vpop.f32.mrb[0].mxu0
      %v2766 = vadd.f32 0.0, %v2765
      %v2767 = vpop.f32.mrb[0].mxu0
      %v2768 = vpop.f32.mrb[0].mxu0
      %v2769 = vadd.f32 0.0, %v2768
      %v2770 = vpop.f32.mrb[0].mxu0
      %2771 = vmatprep.mubr.bf16.mxu0 0
      %2772 = vmatmul.mubr.bf16.gmra.mrb[0].mxu0 %v2624
      %v2773 = vpop.f32.mrb[0].mxu0
      %v2774 = vadd.f32 0.0, %v2773
      %v2775 = vpop.f32.mrb[0].mxu0
      %v2776 = vpop.f32.mrb[0].mxu0
      %v2777 = vadd.f32 0.0, %v2776
      %v2778 = vpop.f32.mrb[0].mxu0
      %2779 = vmatprep.mubr.bf16.mxu0 0
      %2780 = vmatmul.mubr.bf16.gmra.mrb[0].mxu0 %v2625
      %v2781 = vpop.f32.mrb[0].mxu0
      %v2782 = vadd.f32 0.0, %v2781
      %v2783 = vpop.f32.mrb[0].mxu0
      %v2784 = vpop.f32.mrb[0].mxu0
      %v2785 = vadd.f32 0.0, %v2784
      %v2786 = vpop.f32.mrb[0].mxu0
      %2787 = vmatprep.mubr.bf16.mxu0 0
      %2788 = vmatmul.mubr.bf16.gmra.mrb[0].mxu0 %v2626
      %v2789 = vpop.f32.mrb[0].mxu0
      %v2790 = vadd.f32 0.0, %v2789
      %v2791 = vpop.f32.mrb[0].mxu0
      %v2792 = vpop.f32.mrb[0].mxu0
      %v2793 = vadd.f32 0.0, %v2792
      %v2794 = vpop.f32.mrb[0].mxu0
      %2795 = vmatprep.mubr.bf16.mxu0 0
      %2796 = vmatmul.mubr.bf16.gmra.mrb[0].mxu0 %v2627
      %v2797 = vpop.f32.mrb[0].mxu0
      %v2798 = vadd.f32 0.0, %v2797
      %v2799 = vpop.f32.mrb[0].mxu0
      %v2800 = vpop.f32.mrb[0].mxu0
      %v2801 = vadd.f32 0.0, %v2800
      %v2802 = vpop.f32.mrb[0].mxu0
      %2803 = vmatprep.mubr.bf16.mxu0 0
      %2804 = vmatmul.mubr.bf16.gmra.mrb[0].mxu0 %v2628
      %v2805 = vpop.f32.mrb[0].mxu0
      %v2806 = vadd.f32 0.0, %v2805
      %v2807 = vpop.f32.mrb[0].mxu0
      %v2808 = vpop.f32.mrb[0].mxu0
      %v2809 = vadd.f32 0.0, %v2808
      %v2810 = vpop.f32.mrb[0].mxu0
      %2811 = vmatprep.mubr.bf16.mxu0 0
      %2812 = vmatmul.mubr.bf16.gmra.mrb[0].mxu0 %v2629
      %v2813 = vpop.f32.mrb[0].mxu0
      %v2814 = vadd.f32 0.0, %v2813
      %v2815 = vpop.f32.mrb[0].mxu0
      %v2816 = vpop.f32.mrb[0].mxu0
      %v2817 = vadd.f32 0.0, %v2816
      %v2818 = vpop.f32.mrb[0].mxu0
      %2819 = vmatprep.mubr.bf16.mxu0 0
      %2820 = vmatmul.mubr.bf16.gmra.mrb[0].mxu0 %v2630
      %v2821 = vpop.f32.mrb[0].mxu0
      %v2822 = vadd.f32 0.0, %v2821
      %v2823 = vpop.f32.mrb[0].mxu0
      %v2824 = vpop.f32.mrb[0].mxu0
      %v2825 = vadd.f32 0.0, %v2824
      %v2826 = vpop.f32.mrb[0].mxu0
      %2827 = vmatprep.mubr.bf16.mxu0 0
      %2828 = vmatmul.mubr.bf16.gmra.mrb[0].mxu0 %v2631
      %v2829 = vpop.f32.mrb[0].mxu0
      %v2830 = vadd.f32 0.0, %v2829
      %v2831 = vpop.f32.mrb[0].mxu0
      %v2832 = vpop.f32.mrb[0].mxu0
      %v2833 = vadd.f32 0.0, %v2832
      %v2834 = vpop.f32.mrb[0].mxu0
      %2835 = vmatprep.mubr.bf16.mxu0 0
      %2836 = vmatmul.mubr.bf16.gmra.mrb[0].mxu0 %v2632
      %v2837 = vpop.f32.mrb[0].mxu0
      %v2838 = vadd.f32 0.0, %v2837
      %v2839 = vpop.f32.mrb[0].mxu0
      %v2840 = vpop.f32.mrb[0].mxu0
      %v2841 = vadd.f32 0.0, %v2840
      %v2842 = vpop.f32.mrb[0].mxu0
      %2843 = vmatprep.mubr.bf16.mxu0 0
      %2844 = vmatmul.mubr.bf16.gmra.mrb[0].mxu0 %v2633
      %v2845 = vpop.f32.mrb[0].mxu0
      %v2846 = vadd.f32 0.0, %v2845
      %v2847 = vpop.f32.mrb[0].mxu0
      %v2848 = vpop.f32.mrb[0].mxu0
      %v2849 = vadd.f32 0.0, %v2848
      %v2850 = vpop.f32.mrb[0].mxu0
      %2851 = vmatprep.mubr.bf16.mxu0 0
      %2852 = vmatmul.mubr.bf16.gmra.mrb[0].mxu0 %v2634
      %v2853 = vpop.f32.mrb[0].mxu0
      %v2854 = vadd.f32 0.0, %v2853
      %v2855 = vpop.f32.mrb[0].mxu0
      %v2856 = vpop.f32.mrb[0].mxu0
      %v2857 = vadd.f32 0.0, %v2856
      %v2858 = vpop.f32.mrb[0].mxu0
      %2859 = vdwg.mxu0
      %v2860 = vadd.f32 %v2106, %v2734
      %v2861 = vadd.f32 %v2107, %v2737
      %v2862 = vadd.f32 %v2108, %v2742
      %v2863 = vadd.f32 %v2109, %v2745
      %v2864 = vadd.f32 %v2110, %v2750
      %v2865 = vadd.f32 %v2111, %v2753
      %v2866 = vadd.f32 %v2112, %v2758
      %v2867 = vadd.f32 %v2113, %v2761
      %v2868 = vadd.f32 %v2114, %v2766
      %v2869 = vadd.f32 %v2115, %v2769
      %v2870 = vadd.f32 %v2116, %v2774
      %v2871 = vadd.f32 %v2117, %v2777
      %v2872 = vadd.f32 %v2118, %v2782
      %v2873 = vadd.f32 %v2119, %v2785
      %v2874 = vadd.f32 %v2120, %v2790
      %v2875 = vadd.f32 %v2121, %v2793
      %v2876 = vadd.f32 %v2122, %v2798
      %v2877 = vadd.f32 %v2123, %v2801
      %v2878 = vadd.f32 %v2124, %v2806
      %v2879 = vadd.f32 %v2125, %v2809
      %v2880 = vadd.f32 %v2126, %v2814
      %v2881 = vadd.f32 %v2127, %v2817
      %v2882 = vadd.f32 %v2128, %v2822
      %v2883 = vadd.f32 %v2129, %v2825
      %v2884 = vadd.f32 %v2130, %v2830
      %v2885 = vadd.f32 %v2131, %v2833
      %v2886 = vadd.f32 %v2132, %v2838
      %v2887 = vadd.f32 %v2133, %v2841
      %v2888 = vadd.f32 %v2134, %v2846
      %v2889 = vadd.f32 %v2135, %v2849
      %v2890 = vadd.f32 %v2136, %v2854
      %v2891 = vadd.f32 %v2137, %v2857
      %v2892 = vld [vmem:[%s1751] sm:$0xe]
      %v2893 = vld [vmem:[%s1751 + $0xc] sm:$0xe]
      %v2894 = vld [vmem:[%s1751 + $0x18] sm:$0xe]
      %v2895 = vld [vmem:[%s1751 + $0x24] sm:$0xe]
      %v2896 = vld [vmem:[%s1751 + $0x30] sm:$0xe]
      %v2897 = vld [vmem:[%s1751 + $0x3c] sm:$0xe]
      %v2898 = vld [vmem:[%s1751 + $0x48] sm:$0xe]
      %v2899 = vld [vmem:[%s1751 + $0x54] sm:$0xe]
      %v2900 = vld [vmem:[%s1751 + $0x60] sm:$0xe]
      %v2901 = vld [vmem:[%s1751 + $0x6c] sm:$0xe]
      %v2902 = vld [vmem:[%s1751 + $0x78] sm:$0xe]
      %v2903 = vld [vmem:[%s1751 + $0x84] sm:$0xe]
      %v2904 = vld [vmem:[%s1751 + $0x90] sm:$0xe]
      %v2905 = vld [vmem:[%s1751 + $0x9c] sm:$0xe]
      %v2906 = vld [vmem:[%s1751 + $0xa8] sm:$0xe]
      %v2907 = vld [vmem:[%s1751 + $0xb4] sm:$0xe]
      %v2956 = vrot.slane %v2892, 5
      %v2957 = vrot.slane %v2956, 4
      %v2958 = vrot.slane %v2139, 5
      %v2959 = vsel %vm1313, %v2957, %v2958
      %v2960 = vrot.slane %v2958, 4
      %v2961 = vrot.slane %v2140, 5
      %v2962 = vsel %vm1313, %v2960, %v2961
      %v2963 = vrot.slane %v2893, 5
      %v2964 = vrot.slane %v2963, 4
      %v2965 = vrot.slane %v2142, 5
      %v2966 = vsel %vm1313, %v2964, %v2965
      %v2967 = vrot.slane %v2965, 4
      %v2968 = vrot.slane %v2143, 5
      %v2969 = vsel %vm1313, %v2967, %v2968
      %v2970 = vrot.slane %v2894, 5
      %v2971 = vrot.slane %v2970, 4
      %v2972 = vrot.slane %v2145, 5
      %v2973 = vsel %vm1313, %v2971, %v2972
      %v2974 = vrot.slane %v2972, 4
      %v2975 = vrot.slane %v2146, 5
      %v2976 = vsel %vm1313, %v2974, %v2975
      %v2977 = vrot.slane %v2895, 5
      %v2978 = vrot.slane %v2977, 4
      %v2979 = vrot.slane %v2148, 5
      %v2980 = vsel %vm1313, %v2978, %v2979
      %v2981 = vrot.slane %v2979, 4
      %v2982 = vrot.slane %v2149, 5
      %v2983 = vsel %vm1313, %v2981, %v2982
      %v2984 = vrot.slane %v2896, 5
      %v2985 = vrot.slane %v2984, 4
      %v2986 = vrot.slane %v2151, 5
      %v2987 = vsel %vm1313, %v2985, %v2986
      %v2988 = vrot.slane %v2986, 4
      %v2989 = vrot.slane %v2152, 5
      %v2990 = vsel %vm1313, %v2988, %v2989
      %v2991 = vrot.slane %v2897, 5
      %v2992 = vrot.slane %v2991, 4
      %v2993 = vrot.slane %v2154, 5
      %v2994 = vsel %vm1313, %v2992, %v2993
      %v2995 = vrot.slane %v2993, 4
      %v2996 = vrot.slane %v2155, 5
      %v2997 = vsel %vm1313, %v2995, %v2996
      %v2998 = vrot.slane %v2898, 5
      %v2999 = vrot.slane %v2998, 4
      %v3000 = vrot.slane %v2157, 5
      %v3001 = vsel %vm1313, %v2999, %v3000
      %v3002 = vrot.slane %v3000, 4
      %v3003 = vrot.slane %v2158, 5
      %v3004 = vsel %vm1313, %v3002, %v3003
      %v3005 = vrot.slane %v2899, 5
      %v3006 = vrot.slane %v3005, 4
      %v3007 = vrot.slane %v2160, 5
      %v3008 = vsel %vm1313, %v3006, %v3007
      %v3009 = vrot.slane %v3007, 4
      %v3010 = vrot.slane %v2161, 5
      %v3011 = vsel %vm1313, %v3009, %v3010
      %v3012 = vrot.slane %v2900, 5
      %v3013 = vrot.slane %v3012, 4
      %v3014 = vrot.slane %v2163, 5
      %v3015 = vsel %vm1313, %v3013, %v3014
      %v3016 = vrot.slane %v3014, 4
      %v3017 = vrot.slane %v2164, 5
      %v3018 = vsel %vm1313, %v3016, %v3017
      %v3019 = vrot.slane %v2901, 5
      %v3020 = vrot.slane %v3019, 4
      %v3021 = vrot.slane %v2166, 5
      %v3022 = vsel %vm1313, %v3020, %v3021
      %v3023 = vrot.slane %v3021, 4
      %v3024 = vrot.slane %v2167, 5
      %v3025 = vsel %vm1313, %v3023, %v3024
      %v3026 = vrot.slane %v2902, 5
      %v3027 = vrot.slane %v3026, 4
      %v3028 = vrot.slane %v2169, 5
      %v3029 = vsel %vm1313, %v3027, %v3028
      %v3030 = vrot.slane %v3028, 4
      %v3031 = vrot.slane %v2170, 5
      %v3032 = vsel %vm1313, %v3030, %v3031
      %v3033 = vrot.slane %v2903, 5
      %v3034 = vrot.slane %v3033, 4
      %v3035 = vrot.slane %v2172, 5
      %v3036 = vsel %vm1313, %v3034, %v3035
      %v3037 = vrot.slane %v3035, 4
      %v3038 = vrot.slane %v2173, 5
      %v3039 = vsel %vm1313, %v3037, %v3038
      %v3040 = vrot.slane %v2904, 5
      %v3041 = vrot.slane %v3040, 4
      %v3042 = vrot.slane %v2175, 5
      %v3043 = vsel %vm1313, %v3041, %v3042
      %v3044 = vrot.slane %v3042, 4
      %v3045 = vrot.slane %v2176, 5
      %v3046 = vsel %vm1313, %v3044, %v3045
      %v3047 = vrot.slane %v2905, 5
      %v3048 = vrot.slane %v3047, 4
      %v3049 = vrot.slane %v2178, 5
      %v3050 = vsel %vm1313, %v3048, %v3049
      %v3051 = vrot.slane %v3049, 4
      %v3052 = vrot.slane %v2179, 5
      %v3053 = vsel %vm1313, %v3051, %v3052
      %v3054 = vrot.slane %v2906, 5
      %v3055 = vrot.slane %v3054, 4
      %v3056 = vrot.slane %v2181, 5
      %v3057 = vsel %vm1313, %v3055, %v3056
      %v3058 = vrot.slane %v3056, 4
      %v3059 = vrot.slane %v2182, 5
      %v3060 = vsel %vm1313, %v3058, %v3059
      %v3061 = vrot.slane %v2907, 5
      %v3062 = vrot.slane %v3061, 4
      %v3063 = vrot.slane %v2184, 5
      %v3064 = vsel %vm1313, %v3062, %v3063
      %v3065 = vrot.slane %v3063, 4
      %v3066 = vrot.slane %v2185, 5
      %v3067 = vsel %vm1313, %v3065, %v3066
      %s3068 = scalar_lea.vmem %s1, 320
      %v3069 = vld [vmem:[%s3068] sm:$0xf]
      %v3070 = vld [vmem:[%s3068 + $0x4] sm:$0xf]
      %v3071 = vld [vmem:[%s3068 + $0x8] sm:$0xf]
      %v3072 = vld [vmem:[%s3068 + $0xc] sm:$0xf]
      %v3073 = vld [vmem:[%s3068 + $0x10] sm:$0xf]
      %v3074 = vld [vmem:[%s3068 + $0x14] sm:$0xf]
      %v3075 = vld [vmem:[%s3068 + $0x18] sm:$0xf]
      %v3076 = vld [vmem:[%s3068 + $0x1c] sm:$0xf]
      %v3077 = vld [vmem:[%s3068 + $0x20] sm:$0xf]
      %v3078 = vld [vmem:[%s3068 + $0x24] sm:$0xf]
      %v3079 = vld [vmem:[%s3068 + $0x28] sm:$0xf]
      %v3080 = vld [vmem:[%s3068 + $0x2c] sm:$0xf]
      %v3081 = vld [vmem:[%s3068 + $0x30] sm:$0xf]
      %v3082 = vld [vmem:[%s3068 + $0x34] sm:$0xf]
      %v3083 = vld [vmem:[%s3068 + $0x38] sm:$0xf]
      %v3084 = vld [vmem:[%s3068 + $0x3c] sm:$0xf]
      %v3085 = vunpack.c.l.b16 %v2959
      %v3086 = vunpack.c.l.b16 %v2962
      %v3087 = vunpack.c.l.b16 %v2966
      %v3088 = vunpack.c.l.b16 %v2969
      %v3089 = vunpack.c.l.b16 %v2973
      %v3090 = vunpack.c.l.b16 %v2976
      %v3091 = vunpack.c.l.b16 %v2980
      %v3092 = vunpack.c.l.b16 %v2983
      %v3093 = vunpack.c.l.b16 %v2987
      %v3094 = vunpack.c.l.b16 %v2990
      %v3095 = vunpack.c.l.b16 %v2994
      %v3096 = vunpack.c.l.b16 %v2997
      %v3097 = vunpack.c.l.b16 %v3001
      %v3098 = vunpack.c.l.b16 %v3004
      %v3099 = vunpack.c.l.b16 %v3008
      %v3100 = vunpack.c.l.b16 %v3011
      %v3101 = vunpack.c.l.b16 %v3015
      %v3102 = vunpack.c.l.b16 %v3018
      %v3103 = vunpack.c.l.b16 %v3022
      %v3104 = vunpack.c.l.b16 %v3025
      %v3105 = vunpack.c.l.b16 %v3029
      %v3106 = vunpack.c.l.b16 %v3032
      %v3107 = vunpack.c.l.b16 %v3036
      %v3108 = vunpack.c.l.b16 %v3039
      %v3109 = vunpack.c.l.b16 %v3043
      %v3110 = vunpack.c.l.b16 %v3046
      %v3111 = vunpack.c.l.b16 %v3050
      %v3112 = vunpack.c.l.b16 %v3053
      %v3113 = vunpack.c.l.b16 %v3057
      %v3114 = vunpack.c.l.b16 %v3060
      %v3115 = vunpack.c.l.b16 %v3064
      %v3116 = vunpack.c.l.b16 %v3067
      %v3117 = vpack.c.b16 %v3086, %v3085
      %v3118 = vpack.c.b16 %v3088, %v3087
      %v3119 = vpack.c.b16 %v3090, %v3089
      %v3120 = vpack.c.b16 %v3092, %v3091
      %v3121 = vpack.c.b16 %v3094, %v3093
      %v3122 = vpack.c.b16 %v3096, %v3095
      %v3123 = vpack.c.b16 %v3098, %v3097
      %v3124 = vpack.c.b16 %v3100, %v3099
      %v3125 = vpack.c.b16 %v3102, %v3101
      %v3126 = vpack.c.b16 %v3104, %v3103
      %v3127 = vpack.c.b16 %v3106, %v3105
      %v3128 = vpack.c.b16 %v3108, %v3107
      %v3129 = vpack.c.b16 %v3110, %v3109
      %v3130 = vpack.c.b16 %v3112, %v3111
      %v3131 = vpack.c.b16 %v3114, %v3113
      %v3132 = vpack.c.b16 %v3116, %v3115
      %v3165 = vunpack.c.l.b16 %v3069
      %v3166 = vunpack.c.l.b16 %v3070
      %v3167 = vunpack.c.l.b16 %v3071
      %v3168 = vunpack.c.l.b16 %v3072
      %v3169 = vunpack.c.l.b16 %v3073
      %v3170 = vunpack.c.l.b16 %v3074
      %v3171 = vunpack.c.l.b16 %v3075
      %v3172 = vunpack.c.l.b16 %v3076
      %v3173 = vunpack.c.l.b16 %v3077
      %v3174 = vunpack.c.l.b16 %v3078
      %v3175 = vunpack.c.l.b16 %v3079
      %v3176 = vunpack.c.l.b16 %v3080
      %v3177 = vunpack.c.l.b16 %v3081
      %v3178 = vunpack.c.l.b16 %v3082
      %v3179 = vunpack.c.l.b16 %v3083
      %v3180 = vunpack.c.l.b16 %v3084
      %v3181 = vpack.c.b16 %v3166, %v3165
      %v3182 = vpack.c.b16 %v3168, %v3167
      %v3183 = vpack.c.b16 %v3170, %v3169
      %v3184 = vpack.c.b16 %v3172, %v3171
      %v3185 = vpack.c.b16 %v3174, %v3173
      %v3186 = vpack.c.b16 %v3176, %v3175
      %v3187 = vpack.c.b16 %v3178, %v3177
      %v3188 = vpack.c.b16 %v3180, %v3179
      %3197 = vmatprep.subr.bf16.mxu0 0
      %3198 = vmatpush1.bf16.msra.mxu0 %v3181
      %3199 = vmatprep.subr.bf16.mxu0 0
      %3200 = vmatpush1.bf16.msra.mxu0 %v3182
      %3201 = vmatprep.subr.bf16.mxu0 0
      %3202 = vmatpush1.bf16.msra.mxu0 %v3183
      %3203 = vmatprep.subr.bf16.mxu0 0
      %3204 = vmatpush1.bf16.msra.mxu0 %v3184
      %3205 = vmatprep.subr.bf16.mxu0 0
      %3206 = vmatpush1.bf16.msra.mxu0 %v3185
      %3207 = vmatprep.subr.bf16.mxu0 0
      %3208 = vmatpush1.bf16.msra.mxu0 %v3186
      %3209 = vmatprep.subr.bf16.mxu0 0
      %3210 = vmatpush1.bf16.msra.mxu0 %v3187
      %3211 = vmatprep.subr.bf16.mxu0 0
      %3212 = vmatpush1.bf16.msra.mxu0 %v3188
      %3213 = vmatprep.subr.bf16.mxu0 0
      %3214 = vmatpush1.bf16.msra.mxu0 0
      %3215 = vmatprep.subr.bf16.mxu0 0
      %3216 = vmatpush1.bf16.msra.mxu0 0
      %3217 = vmatprep.subr.bf16.mxu0 0
      %3218 = vmatpush1.bf16.msra.mxu0 0
      %3219 = vmatprep.subr.bf16.mxu0 0
      %3220 = vmatpush1.bf16.msra.mxu0 0
      %3221 = vmatprep.subr.bf16.mxu0 0
      %3222 = vmatpush1.bf16.msra.mxu0 0
      %3223 = vmatprep.subr.bf16.mxu0 0
      %3224 = vmatpush1.bf16.msra.mxu0 0
      %3225 = vmatprep.subr.bf16.mxu0 0
      %3226 = vmatpush1.bf16.msra.mxu0 0
      %3227 = vmatprep.subr.bf16.mxu0 0
      %3228 = vmatpush1.bf16.msra.mxu0 0
      %3229 = vmatprep.mubr.bf16.mxu0 0
      %3230 = vmatmul.mubr.bf16.gmra.mrb[0].mxu0 %v3117
      %v3231 = vpop.f32.mrb[0].mxu0
      %v3232 = vadd.f32 0.0, %v3231
      %v3233 = vpop.f32.mrb[0].mxu0
      %v3234 = vpop.f32.mrb[0].mxu0
      %v3235 = vadd.f32 0.0, %v3234
      %v3236 = vpop.f32.mrb[0].mxu0
      %3237 = vmatprep.mubr.bf16.mxu0 0
      %3238 = vmatmul.mubr.bf16.gmra.mrb[0].mxu0 %v3118
      %v3239 = vpop.f32.mrb[0].mxu0
      %v3240 = vadd.f32 0.0, %v3239
      %v3241 = vpop.f32.mrb[0].mxu0
      %v3242 = vpop.f32.mrb[0].mxu0
      %v3243 = vadd.f32 0.0, %v3242
      %v3244 = vpop.f32.mrb[0].mxu0
      %3245 = vmatprep.mubr.bf16.mxu0 0
      %3246 = vmatmul.mubr.bf16.gmra.mrb[0].mxu0 %v3119
      %v3247 = vpop.f32.mrb[0].mxu0
      %v3248 = vadd.f32 0.0, %v3247
      %v3249 = vpop.f32.mrb[0].mxu0
      %v3250 = vpop.f32.mrb[0].mxu0
      %v3251 = vadd.f32 0.0, %v3250
      %v3252 = vpop.f32.mrb[0].mxu0
      %3253 = vmatprep.mubr.bf16.mxu0 0
      %3254 = vmatmul.mubr.bf16.gmra.mrb[0].mxu0 %v3120
      %v3255 = vpop.f32.mrb[0].mxu0
      %v3256 = vadd.f32 0.0, %v3255
      %v3257 = vpop.f32.mrb[0].mxu0
      %v3258 = vpop.f32.mrb[0].mxu0
      %v3259 = vadd.f32 0.0, %v3258
      %v3260 = vpop.f32.mrb[0].mxu0
      %3261 = vmatprep.mubr.bf16.mxu0 0
      %3262 = vmatmul.mubr.bf16.gmra.mrb[0].mxu0 %v3121
      %v3263 = vpop.f32.mrb[0].mxu0
      %v3264 = vadd.f32 0.0, %v3263
      %v3265 = vpop.f32.mrb[0].mxu0
      %v3266 = vpop.f32.mrb[0].mxu0
      %v3267 = vadd.f32 0.0, %v3266
      %v3268 = vpop.f32.mrb[0].mxu0
      %3269 = vmatprep.mubr.bf16.mxu0 0
      %3270 = vmatmul.mubr.bf16.gmra.mrb[0].mxu0 %v3122
      %v3271 = vpop.f32.mrb[0].mxu0
      %v3272 = vadd.f32 0.0, %v3271
      %v3273 = vpop.f32.mrb[0].mxu0
      %v3274 = vpop.f32.mrb[0].mxu0
      %v3275 = vadd.f32 0.0, %v3274
      %v3276 = vpop.f32.mrb[0].mxu0
      %3277 = vmatprep.mubr.bf16.mxu0 0
      %3278 = vmatmul.mubr.bf16.gmra.mrb[0].mxu0 %v3123
      %v3279 = vpop.f32.mrb[0].mxu0
      %v3280 = vadd.f32 0.0, %v3279
      %v3281 = vpop.f32.mrb[0].mxu0
      %v3282 = vpop.f32.mrb[0].mxu0
      %v3283 = vadd.f32 0.0, %v3282
      %v3284 = vpop.f32.mrb[0].mxu0
      %3285 = vmatprep.mubr.bf16.mxu0 0
      %3286 = vmatmul.mubr.bf16.gmra.mrb[0].mxu0 %v3124
      %v3287 = vpop.f32.mrb[0].mxu0
      %v3288 = vadd.f32 0.0, %v3287
      %v3289 = vpop.f32.mrb[0].mxu0
      %v3290 = vpop.f32.mrb[0].mxu0
      %v3291 = vadd.f32 0.0, %v3290
      %v3292 = vpop.f32.mrb[0].mxu0
      %3293 = vmatprep.mubr.bf16.mxu0 0
      %3294 = vmatmul.mubr.bf16.gmra.mrb[0].mxu0 %v3125
      %v3295 = vpop.f32.mrb[0].mxu0
      %v3296 = vadd.f32 0.0, %v3295
      %v3297 = vpop.f32.mrb[0].mxu0
      %v3298 = vpop.f32.mrb[0].mxu0
      %v3299 = vadd.f32 0.0, %v3298
      %v3300 = vpop.f32.mrb[0].mxu0
      %3301 = vmatprep.mubr.bf16.mxu0 0
      %3302 = vmatmul.mubr.bf16.gmra.mrb[0].mxu0 %v3126
      %v3303 = vpop.f32.mrb[0].mxu0
      %v3304 = vadd.f32 0.0, %v3303
      %v3305 = vpop.f32.mrb[0].mxu0
      %v3306 = vpop.f32.mrb[0].mxu0
      %v3307 = vadd.f32 0.0, %v3306
      %v3308 = vpop.f32.mrb[0].mxu0
      %3309 = vmatprep.mubr.bf16.mxu0 0
      %3310 = vmatmul.mubr.bf16.gmra.mrb[0].mxu0 %v3127
      %v3311 = vpop.f32.mrb[0].mxu0
      %v3312 = vadd.f32 0.0, %v3311
      %v3313 = vpop.f32.mrb[0].mxu0
      %v3314 = vpop.f32.mrb[0].mxu0
      %v3315 = vadd.f32 0.0, %v3314
      %v3316 = vpop.f32.mrb[0].mxu0
      %3317 = vmatprep.mubr.bf16.mxu0 0
      %3318 = vmatmul.mubr.bf16.gmra.mrb[0].mxu0 %v3128
      %v3319 = vpop.f32.mrb[0].mxu0
      %v3320 = vadd.f32 0.0, %v3319
      %v3321 = vpop.f32.mrb[0].mxu0
      %v3322 = vpop.f32.mrb[0].mxu0
      %v3323 = vadd.f32 0.0, %v3322
      %v3324 = vpop.f32.mrb[0].mxu0
      %3325 = vmatprep.mubr.bf16.mxu0 0
      %3326 = vmatmul.mubr.bf16.gmra.mrb[0].mxu0 %v3129
      %v3327 = vpop.f32.mrb[0].mxu0
      %v3328 = vadd.f32 0.0, %v3327
      %v3329 = vpop.f32.mrb[0].mxu0
      %v3330 = vpop.f32.mrb[0].mxu0
      %v3331 = vadd.f32 0.0, %v3330
      %v3332 = vpop.f32.mrb[0].mxu0
      %3333 = vmatprep.mubr.bf16.mxu0 0
      %3334 = vmatmul.mubr.bf16.gmra.mrb[0].mxu0 %v3130
      %v3335 = vpop.f32.mrb[0].mxu0
      %v3336 = vadd.f32 0.0, %v3335
      %v3337 = vpop.f32.mrb[0].mxu0
      %v3338 = vpop.f32.mrb[0].mxu0
      %v3339 = vadd.f32 0.0, %v3338
      %v3340 = vpop.f32.mrb[0].mxu0
      %3341 = vmatprep.mubr.bf16.mxu0 0
      %3342 = vmatmul.mubr.bf16.gmra.mrb[0].mxu0 %v3131
      %v3343 = vpop.f32.mrb[0].mxu0
      %v3344 = vadd.f32 0.0, %v3343
      %v3345 = vpop.f32.mrb[0].mxu0
      %v3346 = vpop.f32.mrb[0].mxu0
      %v3347 = vadd.f32 0.0, %v3346
      %v3348 = vpop.f32.mrb[0].mxu0
      %3349 = vmatprep.mubr.bf16.mxu0 0
      %3350 = vmatmul.mubr.bf16.gmra.mrb[0].mxu0 %v3132
      %v3351 = vpop.f32.mrb[0].mxu0
      %v3352 = vadd.f32 0.0, %v3351
      %v3353 = vpop.f32.mrb[0].mxu0
      %v3354 = vpop.f32.mrb[0].mxu0
      %v3355 = vadd.f32 0.0, %v3354
      %v3356 = vpop.f32.mrb[0].mxu0
      %3357 = vdwg.mxu0
      %v3358 = vadd.f32 %v2860, %v3232
      %v3359 = vadd.f32 %v2861, %v3235
      %v3360 = vadd.f32 %v2862, %v3240
      %v3361 = vadd.f32 %v2863, %v3243
      %v3362 = vadd.f32 %v2864, %v3248
      %v3363 = vadd.f32 %v2865, %v3251
      %v3364 = vadd.f32 %v2866, %v3256
      %v3365 = vadd.f32 %v2867, %v3259
      %v3366 = vadd.f32 %v2868, %v3264
      %v3367 = vadd.f32 %v2869, %v3267
      %v3368 = vadd.f32 %v2870, %v3272
      %v3369 = vadd.f32 %v2871, %v3275
      %v3370 = vadd.f32 %v2872, %v3280
      %v3371 = vadd.f32 %v2873, %v3283
      %v3372 = vadd.f32 %v2874, %v3288
      %v3373 = vadd.f32 %v2875, %v3291
      %v3374 = vadd.f32 %v2876, %v3296
      %v3375 = vadd.f32 %v2877, %v3299
      %v3376 = vadd.f32 %v2878, %v3304
      %v3377 = vadd.f32 %v2879, %v3307
      %v3378 = vadd.f32 %v2880, %v3312
      %v3379 = vadd.f32 %v2881, %v3315
      %v3380 = vadd.f32 %v2882, %v3320
      %v3381 = vadd.f32 %v2883, %v3323
      %v3382 = vadd.f32 %v2884, %v3328
      %v3383 = vadd.f32 %v2885, %v3331
      %v3384 = vadd.f32 %v2886, %v3336
      %v3385 = vadd.f32 %v2887, %v3339
      %v3386 = vadd.f32 %v2888, %v3344
      %v3387 = vadd.f32 %v2889, %v3347
      %v3388 = vadd.f32 %v2890, %v3352
      %v3389 = vadd.f32 %v2891, %v3355
      %s3390 = sadd.s32 %s213, 2
      %s3391 = smul.u32 %s3390, 3
      %s3392 = smul.addr %s3391, 4
      %s3393 = scalar_lea.vmem %s195, %s3392
      %v3394 = vld [vmem:[%s3393] sm:$0xf]
      %v3395 = vld [vmem:[%s3393 + $0x4] sm:$0xf]
      %v3396 = vld [vmem:[%s3393 + $0xc] sm:$0xf]
      %v3397 = vld [vmem:[%s3393 + $0x10] sm:$0xf]
      %v3398 = vld [vmem:[%s3393 + $0x18] sm:$0xf]
      %v3399 = vld [vmem:[%s3393 + $0x1c] sm:$0xf]
      %v3400 = vld [vmem:[%s3393 + $0x24] sm:$0xf]
      %v3401 = vld [vmem:[%s3393 + $0x28] sm:$0xf]
      %v3402 = vld [vmem:[%s3393 + $0x30] sm:$0xf]
      %v3403 = vld [vmem:[%s3393 + $0x34] sm:$0xf]
      %v3404 = vld [vmem:[%s3393 + $0x3c] sm:$0xf]
      %v3405 = vld [vmem:[%s3393 + $0x40] sm:$0xf]
      %v3406 = vld [vmem:[%s3393 + $0x48] sm:$0xf]
      %v3407 = vld [vmem:[%s3393 + $0x4c] sm:$0xf]
      %v3408 = vld [vmem:[%s3393 + $0x54] sm:$0xf]
      %v3409 = vld [vmem:[%s3393 + $0x58] sm:$0xf]
      %v3410 = vld [vmem:[%s3393 + $0x60] sm:$0xf]
      %v3411 = vld [vmem:[%s3393 + $0x64] sm:$0xf]
      %v3412 = vld [vmem:[%s3393 + $0x6c] sm:$0xf]
      %v3413 = vld [vmem:[%s3393 + $0x70] sm:$0xf]
      %v3414 = vld [vmem:[%s3393 + $0x78] sm:$0xf]
      %v3415 = vld [vmem:[%s3393 + $0x7c] sm:$0xf]
      %v3416 = vld [vmem:[%s3393 + $0x84] sm:$0xf]
      %v3417 = vld [vmem:[%s3393 + $0x88] sm:$0xf]
      %v3418 = vld [vmem:[%s3393 + $0x90] sm:$0xf]
      %v3419 = vld [vmem:[%s3393 + $0x94] sm:$0xf]
      %v3420 = vld [vmem:[%s3393 + $0x9c] sm:$0xf]
      %v3421 = vld [vmem:[%s3393 + $0xa0] sm:$0xf]
      %v3422 = vld [vmem:[%s3393 + $0xa8] sm:$0xf]
      %v3423 = vld [vmem:[%s3393 + $0xac] sm:$0xf]
      %v3424 = vld [vmem:[%s3393 + $0xb4] sm:$0xf]
      %v3425 = vld [vmem:[%s3393 + $0xb8] sm:$0xf]
      %s3426 = scalar_lea.vmem %s1, 384
      %v3427 = vld [vmem:[%s3426] sm:$0xf]
      %v3428 = vld [vmem:[%s3426 + $0x4] sm:$0xf]
      %v3429 = vld [vmem:[%s3426 + $0x8] sm:$0xf]
      %v3430 = vld [vmem:[%s3426 + $0xc] sm:$0xf]
      %v3431 = vld [vmem:[%s3426 + $0x10] sm:$0xf]
      %v3432 = vld [vmem:[%s3426 + $0x14] sm:$0xf]
      %v3433 = vld [vmem:[%s3426 + $0x18] sm:$0xf]
      %v3434 = vld [vmem:[%s3426 + $0x1c] sm:$0xf]
      %v3435 = vld [vmem:[%s3426 + $0x20] sm:$0xf]
      %v3436 = vld [vmem:[%s3426 + $0x24] sm:$0xf]
      %v3437 = vld [vmem:[%s3426 + $0x28] sm:$0xf]
      %v3438 = vld [vmem:[%s3426 + $0x2c] sm:$0xf]
      %v3439 = vld [vmem:[%s3426 + $0x30] sm:$0xf]
      %v3440 = vld [vmem:[%s3426 + $0x34] sm:$0xf]
      %v3441 = vld [vmem:[%s3426 + $0x38] sm:$0xf]
      %v3442 = vld [vmem:[%s3426 + $0x3c] sm:$0xf]
      %v3475 = vunpack.c.l.b16 %v3394
      %v3476 = vunpack.c.l.b16 %v3395
      %v3477 = vunpack.c.l.b16 %v3396
      %v3478 = vunpack.c.l.b16 %v3397
      %v3479 = vunpack.c.l.b16 %v3398
      %v3480 = vunpack.c.l.b16 %v3399
      %v3481 = vunpack.c.l.b16 %v3400
      %v3482 = vunpack.c.l.b16 %v3401
      %v3483 = vunpack.c.l.b16 %v3402
      %v3484 = vunpack.c.l.b16 %v3403
      %v3485 = vunpack.c.l.b16 %v3404
      %v3486 = vunpack.c.l.b16 %v3405
      %v3487 = vunpack.c.l.b16 %v3406
      %v3488 = vunpack.c.l.b16 %v3407
      %v3489 = vunpack.c.l.b16 %v3408
      %v3490 = vunpack.c.l.b16 %v3409
      %v3491 = vunpack.c.l.b16 %v3410
      %v3492 = vunpack.c.l.b16 %v3411
      %v3493 = vunpack.c.l.b16 %v3412
      %v3494 = vunpack.c.l.b16 %v3413
      %v3495 = vunpack.c.l.b16 %v3414
      %v3496 = vunpack.c.l.b16 %v3415
      %v3497 = vunpack.c.l.b16 %v3416
      %v3498 = vunpack.c.l.b16 %v3417
      %v3499 = vunpack.c.l.b16 %v3418
      %v3500 = vunpack.c.l.b16 %v3419
      %v3501 = vunpack.c.l.b16 %v3420
      %v3502 = vunpack.c.l.b16 %v3421
      %v3503 = vunpack.c.l.b16 %v3422
      %v3504 = vunpack.c.l.b16 %v3423
      %v3505 = vunpack.c.l.b16 %v3424
      %v3506 = vunpack.c.l.b16 %v3425
      %v3507 = vpack.c.b16 %v3476, %v3475
      %v3508 = vpack.c.b16 %v3478, %v3477
      %v3509 = vpack.c.b16 %v3480, %v3479
      %v3510 = vpack.c.b16 %v3482, %v3481
      %v3511 = vpack.c.b16 %v3484, %v3483
      %v3512 = vpack.c.b16 %v3486, %v3485
      %v3513 = vpack.c.b16 %v3488, %v3487
      %v3514 = vpack.c.b16 %v3490, %v3489
      %v3515 = vpack.c.b16 %v3492, %v3491
      %v3516 = vpack.c.b16 %v3494, %v3493
      %v3517 = vpack.c.b16 %v3496, %v3495
      %v3518 = vpack.c.b16 %v3498, %v3497
      %v3519 = vpack.c.b16 %v3500, %v3499
      %v3520 = vpack.c.b16 %v3502, %v3501
      %v3521 = vpack.c.b16 %v3504, %v3503
      %v3522 = vpack.c.b16 %v3506, %v3505
      %v3555 = vunpack.c.l.b16 %v3427
      %v3556 = vunpack.c.l.b16 %v3428
      %v3557 = vunpack.c.l.b16 %v3429
      %v3558 = vunpack.c.l.b16 %v3430
      %v3559 = vunpack.c.l.b16 %v3431
      %v3560 = vunpack.c.l.b16 %v3432
      %v3561 = vunpack.c.l.b16 %v3433
      %v3562 = vunpack.c.l.b16 %v3434
      %v3563 = vunpack.c.l.b16 %v3435
      %v3564 = vunpack.c.l.b16 %v3436
      %v3565 = vunpack.c.l.b16 %v3437
      %v3566 = vunpack.c.l.b16 %v3438
      %v3567 = vunpack.c.l.b16 %v3439
      %v3568 = vunpack.c.l.b16 %v3440
      %v3569 = vunpack.c.l.b16 %v3441
      %v3570 = vunpack.c.l.b16 %v3442
      %v3571 = vpack.c.b16 %v3556, %v3555
      %v3572 = vpack.c.b16 %v3558, %v3557
      %v3573 = vpack.c.b16 %v3560, %v3559
      %v3574 = vpack.c.b16 %v3562, %v3561
      %v3575 = vpack.c.b16 %v3564, %v3563
      %v3576 = vpack.c.b16 %v3566, %v3565
      %v3577 = vpack.c.b16 %v3568, %v3567
      %v3578 = vpack.c.b16 %v3570, %v3569
      %3587 = vmatprep.subr.bf16.mxu0 0
      %3588 = vmatpush1.bf16.msra.mxu0 %v3571
      %3589 = vmatprep.subr.bf16.mxu0 0
      %3590 = vmatpush1.bf16.msra.mxu0 %v3572
      %3591 = vmatprep.subr.bf16.mxu0 0
      %3592 = vmatpush1.bf16.msra.mxu0 %v3573
      %3593 = vmatprep.subr.bf16.mxu0 0
      %3594 = vmatpush1.bf16.msra.mxu0 %v3574
      %3595 = vmatprep.subr.bf16.mxu0 0
      %3596 = vmatpush1.bf16.msra.mxu0 %v3575
      %3597 = vmatprep.subr.bf16.mxu0 0
      %3598 = vmatpush1.bf16.msra.mxu0 %v3576
      %3599 = vmatprep.subr.bf16.mxu0 0
      %3600 = vmatpush1.bf16.msra.mxu0 %v3577
      %3601 = vmatprep.subr.bf16.mxu0 0
      %3602 = vmatpush1.bf16.msra.mxu0 %v3578
      %3603 = vmatprep.subr.bf16.mxu0 0
      %3604 = vmatpush1.bf16.msra.mxu0 0
      %3605 = vmatprep.subr.bf16.mxu0 0
      %3606 = vmatpush1.bf16.msra.mxu0 0
      %3607 = vmatprep.subr.bf16.mxu0 0
      %3608 = vmatpush1.bf16.msra.mxu0 0
      %3609 = vmatprep.subr.bf16.mxu0 0
      %3610 = vmatpush1.bf16.msra.mxu0 0
      %3611 = vmatprep.subr.bf16.mxu0 0
      %3612 = vmatpush1.bf16.msra.mxu0 0
      %3613 = vmatprep.subr.bf16.mxu0 0
      %3614 = vmatpush1.bf16.msra.mxu0 0
      %3615 = vmatprep.subr.bf16.mxu0 0
      %3616 = vmatpush1.bf16.msra.mxu0 0
      %3617 = vmatprep.subr.bf16.mxu0 0
      %3618 = vmatpush1.bf16.msra.mxu0 0
      %3619 = vmatprep.mubr.bf16.mxu0 0
      %3620 = vmatmul.mubr.bf16.gmra.mrb[0].mxu0 %v3507
      %v3621 = vpop.f32.mrb[0].mxu0
      %v3622 = vadd.f32 0.0, %v3621
      %v3623 = vpop.f32.mrb[0].mxu0
      %v3624 = vpop.f32.mrb[0].mxu0
      %v3625 = vadd.f32 0.0, %v3624
      %v3626 = vpop.f32.mrb[0].mxu0
      %3627 = vmatprep.mubr.bf16.mxu0 0
      %3628 = vmatmul.mubr.bf16.gmra.mrb[0].mxu0 %v3508
      %v3629 = vpop.f32.mrb[0].mxu0
      %v3630 = vadd.f32 0.0, %v3629
      %v3631 = vpop.f32.mrb[0].mxu0
      %v3632 = vpop.f32.mrb[0].mxu0
      %v3633 = vadd.f32 0.0, %v3632
      %v3634 = vpop.f32.mrb[0].mxu0
      %3635 = vmatprep.mubr.bf16.mxu0 0
      %3636 = vmatmul.mubr.bf16.gmra.mrb[0].mxu0 %v3509
      %v3637 = vpop.f32.mrb[0].mxu0
      %v3638 = vadd.f32 0.0, %v3637
      %v3639 = vpop.f32.mrb[0].mxu0
      %v3640 = vpop.f32.mrb[0].mxu0
      %v3641 = vadd.f32 0.0, %v3640
      %v3642 = vpop.f32.mrb[0].mxu0
      %3643 = vmatprep.mubr.bf16.mxu0 0
      %3644 = vmatmul.mubr.bf16.gmra.mrb[0].mxu0 %v3510
      %v3645 = vpop.f32.mrb[0].mxu0
      %v3646 = vadd.f32 0.0, %v3645
      %v3647 = vpop.f32.mrb[0].mxu0
      %v3648 = vpop.f32.mrb[0].mxu0
      %v3649 = vadd.f32 0.0, %v3648
      %v3650 = vpop.f32.mrb[0].mxu0
      %3651 = vmatprep.mubr.bf16.mxu0 0
      %3652 = vmatmul.mubr.bf16.gmra.mrb[0].mxu0 %v3511
      %v3653 = vpop.f32.mrb[0].mxu0
      %v3654 = vadd.f32 0.0, %v3653
      %v3655 = vpop.f32.mrb[0].mxu0
      %v3656 = vpop.f32.mrb[0].mxu0
      %v3657 = vadd.f32 0.0, %v3656
      %v3658 = vpop.f32.mrb[0].mxu0
      %3659 = vmatprep.mubr.bf16.mxu0 0
      %3660 = vmatmul.mubr.bf16.gmra.mrb[0].mxu0 %v3512
      %v3661 = vpop.f32.mrb[0].mxu0
      %v3662 = vadd.f32 0.0, %v3661
      %v3663 = vpop.f32.mrb[0].mxu0
      %v3664 = vpop.f32.mrb[0].mxu0
      %v3665 = vadd.f32 0.0, %v3664
      %v3666 = vpop.f32.mrb[0].mxu0
      %3667 = vmatprep.mubr.bf16.mxu0 0
      %3668 = vmatmul.mubr.bf16.gmra.mrb[0].mxu0 %v3513
      %v3669 = vpop.f32.mrb[0].mxu0
      %v3670 = vadd.f32 0.0, %v3669
      %v3671 = vpop.f32.mrb[0].mxu0
      %v3672 = vpop.f32.mrb[0].mxu0
      %v3673 = vadd.f32 0.0, %v3672
      %v3674 = vpop.f32.mrb[0].mxu0
      %3675 = vmatprep.mubr.bf16.mxu0 0
      %3676 = vmatmul.mubr.bf16.gmra.mrb[0].mxu0 %v3514
      %v3677 = vpop.f32.mrb[0].mxu0
      %v3678 = vadd.f32 0.0, %v3677
      %v3679 = vpop.f32.mrb[0].mxu0
      %v3680 = vpop.f32.mrb[0].mxu0
      %v3681 = vadd.f32 0.0, %v3680
      %v3682 = vpop.f32.mrb[0].mxu0
      %3683 = vmatprep.mubr.bf16.mxu0 0
      %3684 = vmatmul.mubr.bf16.gmra.mrb[0].mxu0 %v3515
      %v3685 = vpop.f32.mrb[0].mxu0
      %v3686 = vadd.f32 0.0, %v3685
      %v3687 = vpop.f32.mrb[0].mxu0
      %v3688 = vpop.f32.mrb[0].mxu0
      %v3689 = vadd.f32 0.0, %v3688
      %v3690 = vpop.f32.mrb[0].mxu0
      %3691 = vmatprep.mubr.bf16.mxu0 0
      %3692 = vmatmul.mubr.bf16.gmra.mrb[0].mxu0 %v3516
      %v3693 = vpop.f32.mrb[0].mxu0
      %v3694 = vadd.f32 0.0, %v3693
      %v3695 = vpop.f32.mrb[0].mxu0
      %v3696 = vpop.f32.mrb[0].mxu0
      %v3697 = vadd.f32 0.0, %v3696
      %v3698 = vpop.f32.mrb[0].mxu0
      %3699 = vmatprep.mubr.bf16.mxu0 0
      %3700 = vmatmul.mubr.bf16.gmra.mrb[0].mxu0 %v3517
      %v3701 = vpop.f32.mrb[0].mxu0
      %v3702 = vadd.f32 0.0, %v3701
      %v3703 = vpop.f32.mrb[0].mxu0
      %v3704 = vpop.f32.mrb[0].mxu0
      %v3705 = vadd.f32 0.0, %v3704
      %v3706 = vpop.f32.mrb[0].mxu0
      %3707 = vmatprep.mubr.bf16.mxu0 0
      %3708 = vmatmul.mubr.bf16.gmra.mrb[0].mxu0 %v3518
      %v3709 = vpop.f32.mrb[0].mxu0
      %v3710 = vadd.f32 0.0, %v3709
      %v3711 = vpop.f32.mrb[0].mxu0
      %v3712 = vpop.f32.mrb[0].mxu0
      %v3713 = vadd.f32 0.0, %v3712
      %v3714 = vpop.f32.mrb[0].mxu0
      %3715 = vmatprep.mubr.bf16.mxu0 0
      %3716 = vmatmul.mubr.bf16.gmra.mrb[0].mxu0 %v3519
      %v3717 = vpop.f32.mrb[0].mxu0
      %v3718 = vadd.f32 0.0, %v3717
      %v3719 = vpop.f32.mrb[0].mxu0
      %v3720 = vpop.f32.mrb[0].mxu0
      %v3721 = vadd.f32 0.0, %v3720
      %v3722 = vpop.f32.mrb[0].mxu0
      %3723 = vmatprep.mubr.bf16.mxu0 0
      %3724 = vmatmul.mubr.bf16.gmra.mrb[0].mxu0 %v3520
      %v3725 = vpop.f32.mrb[0].mxu0
      %v3726 = vadd.f32 0.0, %v3725
      %v3727 = vpop.f32.mrb[0].mxu0
      %v3728 = vpop.f32.mrb[0].mxu0
      %v3729 = vadd.f32 0.0, %v3728
      %v3730 = vpop.f32.mrb[0].mxu0
      %3731 = vmatprep.mubr.bf16.mxu0 0
      %3732 = vmatmul.mubr.bf16.gmra.mrb[0].mxu0 %v3521
      %v3733 = vpop.f32.mrb[0].mxu0
      %v3734 = vadd.f32 0.0, %v3733
      %v3735 = vpop.f32.mrb[0].mxu0
      %v3736 = vpop.f32.mrb[0].mxu0
      %v3737 = vadd.f32 0.0, %v3736
      %v3738 = vpop.f32.mrb[0].mxu0
      %3739 = vmatprep.mubr.bf16.mxu0 0
      %3740 = vmatmul.mubr.bf16.gmra.mrb[0].mxu0 %v3522
      %v3741 = vpop.f32.mrb[0].mxu0
      %v3742 = vadd.f32 0.0, %v3741
      %v3743 = vpop.f32.mrb[0].mxu0
      %v3744 = vpop.f32.mrb[0].mxu0
      %v3745 = vadd.f32 0.0, %v3744
      %v3746 = vpop.f32.mrb[0].mxu0
      %3747 = vdwg.mxu0
      %v3748 = vadd.f32 %v3358, %v3622
      %v3749 = vadd.f32 %v3359, %v3625
      %v3750 = vadd.f32 %v3360, %v3630
      %v3751 = vadd.f32 %v3361, %v3633
      %v3752 = vadd.f32 %v3362, %v3638
      %v3753 = vadd.f32 %v3363, %v3641
      %v3754 = vadd.f32 %v3364, %v3646
      %v3755 = vadd.f32 %v3365, %v3649
      %v3756 = vadd.f32 %v3366, %v3654
      %v3757 = vadd.f32 %v3367, %v3657
      %v3758 = vadd.f32 %v3368, %v3662
      %v3759 = vadd.f32 %v3369, %v3665
      %v3760 = vadd.f32 %v3370, %v3670
      %v3761 = vadd.f32 %v3371, %v3673
      %v3762 = vadd.f32 %v3372, %v3678
      %v3763 = vadd.f32 %v3373, %v3681
      %v3764 = vadd.f32 %v3374, %v3686
      %v3765 = vadd.f32 %v3375, %v3689
      %v3766 = vadd.f32 %v3376, %v3694
      %v3767 = vadd.f32 %v3377, %v3697
      %v3768 = vadd.f32 %v3378, %v3702
      %v3769 = vadd.f32 %v3379, %v3705
      %v3770 = vadd.f32 %v3380, %v3710
      %v3771 = vadd.f32 %v3381, %v3713
      %v3772 = vadd.f32 %v3382, %v3718
      %v3773 = vadd.f32 %v3383, %v3721
      %v3774 = vadd.f32 %v3384, %v3726
      %v3775 = vadd.f32 %v3385, %v3729
      %v3776 = vadd.f32 %v3386, %v3734
      %v3777 = vadd.f32 %v3387, %v3737
      %v3778 = vadd.f32 %v3388, %v3742
      %v3779 = vadd.f32 %v3389, %v3745
      %v3780 = vld [vmem:[%s3393] sm:$0xf]
      %v3781 = vld [vmem:[%s3393 + $0x4] sm:$0xf]
      %v3782 = vld [vmem:[%s3393 + $0x8] sm:$0x1]
      %v3783 = vld [vmem:[%s3393 + $0xc] sm:$0xf]
      %v3784 = vld [vmem:[%s3393 + $0x10] sm:$0xf]
      %v3785 = vld [vmem:[%s3393 + $0x14] sm:$0x1]
      %v3786 = vld [vmem:[%s3393 + $0x18] sm:$0xf]
      %v3787 = vld [vmem:[%s3393 + $0x1c] sm:$0xf]
      %v3788 = vld [vmem:[%s3393 + $0x20] sm:$0x1]
      %v3789 = vld [vmem:[%s3393 + $0x24] sm:$0xf]
      %v3790 = vld [vmem:[%s3393 + $0x28] sm:$0xf]
      %v3791 = vld [vmem:[%s3393 + $0x2c] sm:$0x1]
      %v3792 = vld [vmem:[%s3393 + $0x30] sm:$0xf]
      %v3793 = vld [vmem:[%s3393 + $0x34] sm:$0xf]
      %v3794 = vld [vmem:[%s3393 + $0x38] sm:$0x1]
      %v3795 = vld [vmem:[%s3393 + $0x3c] sm:$0xf]
      %v3796 = vld [vmem:[%s3393 + $0x40] sm:$0xf]
      %v3797 = vld [vmem:[%s3393 + $0x44] sm:$0x1]
      %v3798 = vld [vmem:[%s3393 + $0x48] sm:$0xf]
      %v3799 = vld [vmem:[%s3393 + $0x4c] sm:$0xf]
      %v3800 = vld [vmem:[%s3393 + $0x50] sm:$0x1]
      %v3801 = vld [vmem:[%s3393 + $0x54] sm:$0xf]
      %v3802 = vld [vmem:[%s3393 + $0x58] sm:$0xf]
      %v3803 = vld [vmem:[%s3393 + $0x5c] sm:$0x1]
      %v3804 = vld [vmem:[%s3393 + $0x60] sm:$0xf]
      %v3805 = vld [vmem:[%s3393 + $0x64] sm:$0xf]
      %v3806 = vld [vmem:[%s3393 + $0x68] sm:$0x1]
      %v3807 = vld [vmem:[%s3393 + $0x6c] sm:$0xf]
      %v3808 = vld [vmem:[%s3393 + $0x70] sm:$0xf]
      %v3809 = vld [vmem:[%s3393 + $0x74] sm:$0x1]
      %v3810 = vld [vmem:[%s3393 + $0x78] sm:$0xf]
      %v3811 = vld [vmem:[%s3393 + $0x7c] sm:$0xf]
      %v3812 = vld [vmem:[%s3393 + $0x80] sm:$0x1]
      %v3813 = vld [vmem:[%s3393 + $0x84] sm:$0xf]
      %v3814 = vld [vmem:[%s3393 + $0x88] sm:$0xf]
      %v3815 = vld [vmem:[%s3393 + $0x8c] sm:$0x1]
      %v3816 = vld [vmem:[%s3393 + $0x90] sm:$0xf]
      %v3817 = vld [vmem:[%s3393 + $0x94] sm:$0xf]
      %v3818 = vld [vmem:[%s3393 + $0x98] sm:$0x1]
      %v3819 = vld [vmem:[%s3393 + $0x9c] sm:$0xf]
      %v3820 = vld [vmem:[%s3393 + $0xa0] sm:$0xf]
      %v3821 = vld [vmem:[%s3393 + $0xa4] sm:$0x1]
      %v3822 = vld [vmem:[%s3393 + $0xa8] sm:$0xf]
      %v3823 = vld [vmem:[%s3393 + $0xac] sm:$0xf]
      %v3824 = vld [vmem:[%s3393 + $0xb0] sm:$0x1]
      %v3825 = vld [vmem:[%s3393 + $0xb4] sm:$0xf]
      %v3826 = vld [vmem:[%s3393 + $0xb8] sm:$0xf]
      %v3827 = vld [vmem:[%s3393 + $0xbc] sm:$0x1]
      %v3829 = vshrl.u32 %v3780, 16
      %v3831 = vrot.slane %v3829, 4
      %v3832 = vshll.u32 %v3780, 16
      %v3834 = vrot.slane %v3832, 5
      %v3835 = vor.u32 %v3831, %v3834
      %v3836 = vrot.slane %v3835, 4
      %v3838 = vshll.u32 %v3781, 16
      %v3840 = vrot.slane %v3838, 5
      %v3841 = vsel %vm283, %v3836, %v3840
      %v3842 = vshrl.u32 %v3781, 16
      %v3844 = vrot.slane %v3842, 4
      %v3845 = vor.u32 %v3844, %v3840
      %v3846 = vrot.slane %v3845, 4
      %v3848 = vshll.u32 %v3782, 16
      %v3850 = vrot.slane %v3848, 5
      %v3851 = vsel %vm283, %v3846, %v3850
      %v3853 = vshrl.u32 %v3783, 16
      %v3855 = vrot.slane %v3853, 4
      %v3856 = vshll.u32 %v3783, 16
      %v3858 = vrot.slane %v3856, 5
      %v3859 = vor.u32 %v3855, %v3858
      %v3860 = vrot.slane %v3859, 4
      %v3862 = vshll.u32 %v3784, 16
      %v3864 = vrot.slane %v3862, 5
      %v3865 = vsel %vm283, %v3860, %v3864
      %v3866 = vshrl.u32 %v3784, 16
      %v3868 = vrot.slane %v3866, 4
      %v3869 = vor.u32 %v3868, %v3864
      %v3870 = vrot.slane %v3869, 4
      %v3872 = vshll.u32 %v3785, 16
      %v3874 = vrot.slane %v3872, 5
      %v3875 = vsel %vm283, %v3870, %v3874
      %v3877 = vshrl.u32 %v3786, 16
      %v3879 = vrot.slane %v3877, 4
      %v3880 = vshll.u32 %v3786, 16
      %v3882 = vrot.slane %v3880, 5
      %v3883 = vor.u32 %v3879, %v3882
      %v3884 = vrot.slane %v3883, 4
      %v3886 = vshll.u32 %v3787, 16
      %v3888 = vrot.slane %v3886, 5
      %v3889 = vsel %vm283, %v3884, %v3888
      %v3890 = vshrl.u32 %v3787, 16
      %v3892 = vrot.slane %v3890, 4
      %v3893 = vor.u32 %v3892, %v3888
      %v3894 = vrot.slane %v3893, 4
      %v3896 = vshll.u32 %v3788, 16
      %v3898 = vrot.slane %v3896, 5
      %v3899 = vsel %vm283, %v3894, %v3898
      %v3901 = vshrl.u32 %v3789, 16
      %v3903 = vrot.slane %v3901, 4
      %v3904 = vshll.u32 %v3789, 16
      %v3906 = vrot.slane %v3904, 5
      %v3907 = vor.u32 %v3903, %v3906
      %v3908 = vrot.slane %v3907, 4
      %v3910 = vshll.u32 %v3790, 16
      %v3912 = vrot.slane %v3910, 5
      %v3913 = vsel %vm283, %v3908, %v3912
      %v3914 = vshrl.u32 %v3790, 16
      %v3916 = vrot.slane %v3914, 4
      %v3917 = vor.u32 %v3916, %v3912
      %v3918 = vrot.slane %v3917, 4
      %v3920 = vshll.u32 %v3791, 16
      %v3922 = vrot.slane %v3920, 5
      %v3923 = vsel %vm283, %v3918, %v3922
      %v3925 = vshrl.u32 %v3792, 16
      %v3927 = vrot.slane %v3925, 4
      %v3928 = vshll.u32 %v3792, 16
      %v3930 = vrot.slane %v3928, 5
      %v3931 = vor.u32 %v3927, %v3930
      %v3932 = vrot.slane %v3931, 4
      %v3934 = vshll.u32 %v3793, 16
      %v3936 = vrot.slane %v3934, 5
      %v3937 = vsel %vm283, %v3932, %v3936
      %v3938 = vshrl.u32 %v3793, 16
      %v3940 = vrot.slane %v3938, 4
      %v3941 = vor.u32 %v3940, %v3936
      %v3942 = vrot.slane %v3941, 4
      %v3944 = vshll.u32 %v3794, 16
      %v3946 = vrot.slane %v3944, 5
      %v3947 = vsel %vm283, %v3942, %v3946
      %v3949 = vshrl.u32 %v3795, 16
      %v3951 = vrot.slane %v3949, 4
      %v3952 = vshll.u32 %v3795, 16
      %v3954 = vrot.slane %v3952, 5
      %v3955 = vor.u32 %v3951, %v3954
      %v3956 = vrot.slane %v3955, 4
      %v3958 = vshll.u32 %v3796, 16
      %v3960 = vrot.slane %v3958, 5
      %v3961 = vsel %vm283, %v3956, %v3960
      %v3962 = vshrl.u32 %v3796, 16
      %v3964 = vrot.slane %v3962, 4
      %v3965 = vor.u32 %v3964, %v3960
      %v3966 = vrot.slane %v3965, 4
      %v3968 = vshll.u32 %v3797, 16
      %v3970 = vrot.slane %v3968, 5
      %v3971 = vsel %vm283, %v3966, %v3970
      %v3973 = vshrl.u32 %v3798, 16
      %v3975 = vrot.slane %v3973, 4
      %v3976 = vshll.u32 %v3798, 16
      %v3978 = vrot.slane %v3976, 5
      %v3979 = vor.u32 %v3975, %v3978
      %v3980 = vrot.slane %v3979, 4
      %v3982 = vshll.u32 %v3799, 16
      %v3984 = vrot.slane %v3982, 5
      %v3985 = vsel %vm283, %v3980, %v3984
      %v3986 = vshrl.u32 %v3799, 16
      %v3988 = vrot.slane %v3986, 4
      %v3989 = vor.u32 %v3988, %v3984
      %v3990 = vrot.slane %v3989, 4
      %v3992 = vshll.u32 %v3800, 16
      %v3994 = vrot.slane %v3992, 5
      %v3995 = vsel %vm283, %v3990, %v3994
      %v3997 = vshrl.u32 %v3801, 16
      %v3999 = vrot.slane %v3997, 4
      %v4000 = vshll.u32 %v3801, 16
      %v4002 = vrot.slane %v4000, 5
      %v4003 = vor.u32 %v3999, %v4002
      %v4004 = vrot.slane %v4003, 4
      %v4006 = vshll.u32 %v3802, 16
      %v4008 = vrot.slane %v4006, 5
      %v4009 = vsel %vm283, %v4004, %v4008
      %v4010 = vshrl.u32 %v3802, 16
      %v4012 = vrot.slane %v4010, 4
      %v4013 = vor.u32 %v4012, %v4008
      %v4014 = vrot.slane %v4013, 4
      %v4016 = vshll.u32 %v3803, 16
      %v4018 = vrot.slane %v4016, 5
      %v4019 = vsel %vm283, %v4014, %v4018
      %v4021 = vshrl.u32 %v3804, 16
      %v4023 = vrot.slane %v4021, 4
      %v4024 = vshll.u32 %v3804, 16
      %v4026 = vrot.slane %v4024, 5
      %v4027 = vor.u32 %v4023, %v4026
      %v4028 = vrot.slane %v4027, 4
      %v4030 = vshll.u32 %v3805, 16
      %v4032 = vrot.slane %v4030, 5
      %v4033 = vsel %vm283, %v4028, %v4032
      %v4034 = vshrl.u32 %v3805, 16
      %v4036 = vrot.slane %v4034, 4
      %v4037 = vor.u32 %v4036, %v4032
      %v4038 = vrot.slane %v4037, 4
      %v4040 = vshll.u32 %v3806, 16
      %v4042 = vrot.slane %v4040, 5
      %v4043 = vsel %vm283, %v4038, %v4042
      %v4045 = vshrl.u32 %v3807, 16
      %v4047 = vrot.slane %v4045, 4
      %v4048 = vshll.u32 %v3807, 16
      %v4050 = vrot.slane %v4048, 5
      %v4051 = vor.u32 %v4047, %v4050
      %v4052 = vrot.slane %v4051, 4
      %v4054 = vshll.u32 %v3808, 16
      %v4056 = vrot.slane %v4054, 5
      %v4057 = vsel %vm283, %v4052, %v4056
      %v4058 = vshrl.u32 %v3808, 16
      %v4060 = vrot.slane %v4058, 4
      %v4061 = vor.u32 %v4060, %v4056
      %v4062 = vrot.slane %v4061, 4
      %v4064 = vshll.u32 %v3809, 16
      %v4066 = vrot.slane %v4064, 5
      %v4067 = vsel %vm283, %v4062, %v4066
      %v4069 = vshrl.u32 %v3810, 16
      %v4071 = vrot.slane %v4069, 4
      %v4072 = vshll.u32 %v3810, 16
      %v4074 = vrot.slane %v4072, 5
      %v4075 = vor.u32 %v4071, %v4074
      %v4076 = vrot.slane %v4075, 4
      %v4078 = vshll.u32 %v3811, 16
      %v4080 = vrot.slane %v4078, 5
      %v4081 = vsel %vm283, %v4076, %v4080
      %v4082 = vshrl.u32 %v3811, 16
      %v4084 = vrot.slane %v4082, 4
      %v4085 = vor.u32 %v4084, %v4080
      %v4086 = vrot.slane %v4085, 4
      %v4088 = vshll.u32 %v3812, 16
      %v4090 = vrot.slane %v4088, 5
      %v4091 = vsel %vm283, %v4086, %v4090
      %v4093 = vshrl.u32 %v3813, 16
      %v4095 = vrot.slane %v4093, 4
      %v4096 = vshll.u32 %v3813, 16
      %v4098 = vrot.slane %v4096, 5
      %v4099 = vor.u32 %v4095, %v4098
      %v4100 = vrot.slane %v4099, 4
      %v4102 = vshll.u32 %v3814, 16
      %v4104 = vrot.slane %v4102, 5
      %v4105 = vsel %vm283, %v4100, %v4104
      %v4106 = vshrl.u32 %v3814, 16
      %v4108 = vrot.slane %v4106, 4
      %v4109 = vor.u32 %v4108, %v4104
      %v4110 = vrot.slane %v4109, 4
      %v4112 = vshll.u32 %v3815, 16
      %v4114 = vrot.slane %v4112, 5
      %v4115 = vsel %vm283, %v4110, %v4114
      %v4117 = vshrl.u32 %v3816, 16
      %v4119 = vrot.slane %v4117, 4
      %v4120 = vshll.u32 %v3816, 16
      %v4122 = vrot.slane %v4120, 5
      %v4123 = vor.u32 %v4119, %v4122
      %v4124 = vrot.slane %v4123, 4
      %v4126 = vshll.u32 %v3817, 16
      %v4128 = vrot.slane %v4126, 5
      %v4129 = vsel %vm283, %v4124, %v4128
      %v4130 = vshrl.u32 %v3817, 16
      %v4132 = vrot.slane %v4130, 4
      %v4133 = vor.u32 %v4132, %v4128
      %v4134 = vrot.slane %v4133, 4
      %v4136 = vshll.u32 %v3818, 16
      %v4138 = vrot.slane %v4136, 5
      %v4139 = vsel %vm283, %v4134, %v4138
      %v4141 = vshrl.u32 %v3819, 16
      %v4143 = vrot.slane %v4141, 4
      %v4144 = vshll.u32 %v3819, 16
      %v4146 = vrot.slane %v4144, 5
      %v4147 = vor.u32 %v4143, %v4146
      %v4148 = vrot.slane %v4147, 4
      %v4150 = vshll.u32 %v3820, 16
      %v4152 = vrot.slane %v4150, 5
      %v4153 = vsel %vm283, %v4148, %v4152
      %v4154 = vshrl.u32 %v3820, 16
      %v4156 = vrot.slane %v4154, 4
      %v4157 = vor.u32 %v4156, %v4152
      %v4158 = vrot.slane %v4157, 4
      %v4160 = vshll.u32 %v3821, 16
      %v4162 = vrot.slane %v4160, 5
      %v4163 = vsel %vm283, %v4158, %v4162
      %v4165 = vshrl.u32 %v3822, 16
      %v4167 = vrot.slane %v4165, 4
      %v4168 = vshll.u32 %v3822, 16
      %v4170 = vrot.slane %v4168, 5
      %v4171 = vor.u32 %v4167, %v4170
      %v4172 = vrot.slane %v4171, 4
      %v4174 = vshll.u32 %v3823, 16
      %v4176 = vrot.slane %v4174, 5
      %v4177 = vsel %vm283, %v4172, %v4176
      %v4178 = vshrl.u32 %v3823, 16
      %v4180 = vrot.slane %v4178, 4
      %v4181 = vor.u32 %v4180, %v4176
      %v4182 = vrot.slane %v4181, 4
      %v4184 = vshll.u32 %v3824, 16
      %v4186 = vrot.slane %v4184, 5
      %v4187 = vsel %vm283, %v4182, %v4186
      %v4189 = vshrl.u32 %v3825, 16
      %v4191 = vrot.slane %v4189, 4
      %v4192 = vshll.u32 %v3825, 16
      %v4194 = vrot.slane %v4192, 5
      %v4195 = vor.u32 %v4191, %v4194
      %v4196 = vrot.slane %v4195, 4
      %v4198 = vshll.u32 %v3826, 16
      %v4200 = vrot.slane %v4198, 5
      %v4201 = vsel %vm283, %v4196, %v4200
      %v4202 = vshrl.u32 %v3826, 16
      %v4204 = vrot.slane %v4202, 4
      %v4205 = vor.u32 %v4204, %v4200
      %v4206 = vrot.slane %v4205, 4
      %v4208 = vshll.u32 %v3827, 16
      %v4210 = vrot.slane %v4208, 5
      %v4211 = vsel %vm283, %v4206, %v4210
      %s4212 = scalar_lea.vmem %s1, 448
      %v4213 = vld [vmem:[%s4212] sm:$0xf]
      %v4214 = vld [vmem:[%s4212 + $0x4] sm:$0xf]
      %v4215 = vld [vmem:[%s4212 + $0x8] sm:$0xf]
      %v4216 = vld [vmem:[%s4212 + $0xc] sm:$0xf]
      %v4217 = vld [vmem:[%s4212 + $0x10] sm:$0xf]
      %v4218 = vld [vmem:[%s4212 + $0x14] sm:$0xf]
      %v4219 = vld [vmem:[%s4212 + $0x18] sm:$0xf]
      %v4220 = vld [vmem:[%s4212 + $0x1c] sm:$0xf]
      %v4221 = vld [vmem:[%s4212 + $0x20] sm:$0xf]
      %v4222 = vld [vmem:[%s4212 + $0x24] sm:$0xf]
      %v4223 = vld [vmem:[%s4212 + $0x28] sm:$0xf]
      %v4224 = vld [vmem:[%s4212 + $0x2c] sm:$0xf]
      %v4225 = vld [vmem:[%s4212 + $0x30] sm:$0xf]
      %v4226 = vld [vmem:[%s4212 + $0x34] sm:$0xf]
      %v4227 = vld [vmem:[%s4212 + $0x38] sm:$0xf]
      %v4228 = vld [vmem:[%s4212 + $0x3c] sm:$0xf]
      %v4229 = vunpack.c.l.b16 %v3841
      %v4230 = vunpack.c.l.b16 %v3851
      %v4231 = vunpack.c.l.b16 %v3865
      %v4232 = vunpack.c.l.b16 %v3875
      %v4233 = vunpack.c.l.b16 %v3889
      %v4234 = vunpack.c.l.b16 %v3899
      %v4235 = vunpack.c.l.b16 %v3913
      %v4236 = vunpack.c.l.b16 %v3923
      %v4237 = vunpack.c.l.b16 %v3937
      %v4238 = vunpack.c.l.b16 %v3947
      %v4239 = vunpack.c.l.b16 %v3961
      %v4240 = vunpack.c.l.b16 %v3971
      %v4241 = vunpack.c.l.b16 %v3985
      %v4242 = vunpack.c.l.b16 %v3995
      %v4243 = vunpack.c.l.b16 %v4009
      %v4244 = vunpack.c.l.b16 %v4019
      %v4245 = vunpack.c.l.b16 %v4033
      %v4246 = vunpack.c.l.b16 %v4043
      %v4247 = vunpack.c.l.b16 %v4057
      %v4248 = vunpack.c.l.b16 %v4067
      %v4249 = vunpack.c.l.b16 %v4081
      %v4250 = vunpack.c.l.b16 %v4091
      %v4251 = vunpack.c.l.b16 %v4105
      %v4252 = vunpack.c.l.b16 %v4115
      %v4253 = vunpack.c.l.b16 %v4129
      %v4254 = vunpack.c.l.b16 %v4139
      %v4255 = vunpack.c.l.b16 %v4153
      %v4256 = vunpack.c.l.b16 %v4163
      %v4257 = vunpack.c.l.b16 %v4177
      %v4258 = vunpack.c.l.b16 %v4187
      %v4259 = vunpack.c.l.b16 %v4201
      %v4260 = vunpack.c.l.b16 %v4211
      %v4261 = vpack.c.b16 %v4230, %v4229
      %v4262 = vpack.c.b16 %v4232, %v4231
      %v4263 = vpack.c.b16 %v4234, %v4233
      %v4264 = vpack.c.b16 %v4236, %v4235
      %v4265 = vpack.c.b16 %v4238, %v4237
      %v4266 = vpack.c.b16 %v4240, %v4239
      %v4267 = vpack.c.b16 %v4242, %v4241
      %v4268 = vpack.c.b16 %v4244, %v4243
      %v4269 = vpack.c.b16 %v4246, %v4245
      %v4270 = vpack.c.b16 %v4248, %v4247
      %v4271 = vpack.c.b16 %v4250, %v4249
      %v4272 = vpack.c.b16 %v4252, %v4251
      %v4273 = vpack.c.b16 %v4254, %v4253
      %v4274 = vpack.c.b16 %v4256, %v4255
      %v4275 = vpack.c.b16 %v4258, %v4257
      %v4276 = vpack.c.b16 %v4260, %v4259
      %v4309 = vunpack.c.l.b16 %v4213
      %v4310 = vunpack.c.l.b16 %v4214
      %v4311 = vunpack.c.l.b16 %v4215
      %v4312 = vunpack.c.l.b16 %v4216
      %v4313 = vunpack.c.l.b16 %v4217
      %v4314 = vunpack.c.l.b16 %v4218
      %v4315 = vunpack.c.l.b16 %v4219
      %v4316 = vunpack.c.l.b16 %v4220
      %v4317 = vunpack.c.l.b16 %v4221
      %v4318 = vunpack.c.l.b16 %v4222
      %v4319 = vunpack.c.l.b16 %v4223
      %v4320 = vunpack.c.l.b16 %v4224
      %v4321 = vunpack.c.l.b16 %v4225
      %v4322 = vunpack.c.l.b16 %v4226
      %v4323 = vunpack.c.l.b16 %v4227
      %v4324 = vunpack.c.l.b16 %v4228
      %v4325 = vpack.c.b16 %v4310, %v4309
      %v4326 = vpack.c.b16 %v4312, %v4311
      %v4327 = vpack.c.b16 %v4314, %v4313
      %v4328 = vpack.c.b16 %v4316, %v4315
      %v4329 = vpack.c.b16 %v4318, %v4317
      %v4330 = vpack.c.b16 %v4320, %v4319
      %v4331 = vpack.c.b16 %v4322, %v4321
      %v4332 = vpack.c.b16 %v4324, %v4323
      %4341 = vmatprep.subr.bf16.mxu0 0
      %4342 = vmatpush1.bf16.msra.mxu0 %v4325
      %4343 = vmatprep.subr.bf16.mxu0 0
      %4344 = vmatpush1.bf16.msra.mxu0 %v4326
      %4345 = vmatprep.subr.bf16.mxu0 0
      %4346 = vmatpush1.bf16.msra.mxu0 %v4327
      %4347 = vmatprep.subr.bf16.mxu0 0
      %4348 = vmatpush1.bf16.msra.mxu0 %v4328
      %4349 = vmatprep.subr.bf16.mxu0 0
      %4350 = vmatpush1.bf16.msra.mxu0 %v4329
      %4351 = vmatprep.subr.bf16.mxu0 0
      %4352 = vmatpush1.bf16.msra.mxu0 %v4330
      %4353 = vmatprep.subr.bf16.mxu0 0
      %4354 = vmatpush1.bf16.msra.mxu0 %v4331
      %4355 = vmatprep.subr.bf16.mxu0 0
      %4356 = vmatpush1.bf16.msra.mxu0 %v4332
      %4357 = vmatprep.subr.bf16.mxu0 0
      %4358 = vmatpush1.bf16.msra.mxu0 0
      %4359 = vmatprep.subr.bf16.mxu0 0
      %4360 = vmatpush1.bf16.msra.mxu0 0
      %4361 = vmatprep.subr.bf16.mxu0 0
      %4362 = vmatpush1.bf16.msra.mxu0 0
      %4363 = vmatprep.subr.bf16.mxu0 0
      %4364 = vmatpush1.bf16.msra.mxu0 0
      %4365 = vmatprep.subr.bf16.mxu0 0
      %4366 = vmatpush1.bf16.msra.mxu0 0
      %4367 = vmatprep.subr.bf16.mxu0 0
      %4368 = vmatpush1.bf16.msra.mxu0 0
      %4369 = vmatprep.subr.bf16.mxu0 0
      %4370 = vmatpush1.bf16.msra.mxu0 0
      %4371 = vmatprep.subr.bf16.mxu0 0
      %4372 = vmatpush1.bf16.msra.mxu0 0
      %4373 = vmatprep.mubr.bf16.mxu0 0
      %4374 = vmatmul.mubr.bf16.gmra.mrb[0].mxu0 %v4261
      %v4375 = vpop.f32.mrb[0].mxu0
      %v4376 = vadd.f32 0.0, %v4375
      %v4377 = vpop.f32.mrb[0].mxu0
      %v4378 = vpop.f32.mrb[0].mxu0
      %v4379 = vadd.f32 0.0, %v4378
      %v4380 = vpop.f32.mrb[0].mxu0
      %4381 = vmatprep.mubr.bf16.mxu0 0
      %4382 = vmatmul.mubr.bf16.gmra.mrb[0].mxu0 %v4262
      %v4383 = vpop.f32.mrb[0].mxu0
      %v4384 = vadd.f32 0.0, %v4383
      %v4385 = vpop.f32.mrb[0].mxu0
      %v4386 = vpop.f32.mrb[0].mxu0
      %v4387 = vadd.f32 0.0, %v4386
      %v4388 = vpop.f32.mrb[0].mxu0
      %4389 = vmatprep.mubr.bf16.mxu0 0
      %4390 = vmatmul.mubr.bf16.gmra.mrb[0].mxu0 %v4263
      %v4391 = vpop.f32.mrb[0].mxu0
      %v4392 = vadd.f32 0.0, %v4391
      %v4393 = vpop.f32.mrb[0].mxu0
      %v4394 = vpop.f32.mrb[0].mxu0
      %v4395 = vadd.f32 0.0, %v4394
      %v4396 = vpop.f32.mrb[0].mxu0
      %4397 = vmatprep.mubr.bf16.mxu0 0
      %4398 = vmatmul.mubr.bf16.gmra.mrb[0].mxu0 %v4264
      %v4399 = vpop.f32.mrb[0].mxu0
      %v4400 = vadd.f32 0.0, %v4399
      %v4401 = vpop.f32.mrb[0].mxu0
      %v4402 = vpop.f32.mrb[0].mxu0
      %v4403 = vadd.f32 0.0, %v4402
      %v4404 = vpop.f32.mrb[0].mxu0
      %4405 = vmatprep.mubr.bf16.mxu0 0
      %4406 = vmatmul.mubr.bf16.gmra.mrb[0].mxu0 %v4265
      %v4407 = vpop.f32.mrb[0].mxu0
      %v4408 = vadd.f32 0.0, %v4407
      %v4409 = vpop.f32.mrb[0].mxu0
      %v4410 = vpop.f32.mrb[0].mxu0
      %v4411 = vadd.f32 0.0, %v4410
      %v4412 = vpop.f32.mrb[0].mxu0
      %4413 = vmatprep.mubr.bf16.mxu0 0
      %4414 = vmatmul.mubr.bf16.gmra.mrb[0].mxu0 %v4266
      %v4415 = vpop.f32.mrb[0].mxu0
      %v4416 = vadd.f32 0.0, %v4415
      %v4417 = vpop.f32.mrb[0].mxu0
      %v4418 = vpop.f32.mrb[0].mxu0
      %v4419 = vadd.f32 0.0, %v4418
      %v4420 = vpop.f32.mrb[0].mxu0
      %4421 = vmatprep.mubr.bf16.mxu0 0
      %4422 = vmatmul.mubr.bf16.gmra.mrb[0].mxu0 %v4267
      %v4423 = vpop.f32.mrb[0].mxu0
      %v4424 = vadd.f32 0.0, %v4423
      %v4425 = vpop.f32.mrb[0].mxu0
      %v4426 = vpop.f32.mrb[0].mxu0
      %v4427 = vadd.f32 0.0, %v4426
      %v4428 = vpop.f32.mrb[0].mxu0
      %4429 = vmatprep.mubr.bf16.mxu0 0
      %4430 = vmatmul.mubr.bf16.gmra.mrb[0].mxu0 %v4268
      %v4431 = vpop.f32.mrb[0].mxu0
      %v4432 = vadd.f32 0.0, %v4431
      %v4433 = vpop.f32.mrb[0].mxu0
      %v4434 = vpop.f32.mrb[0].mxu0
      %v4435 = vadd.f32 0.0, %v4434
      %v4436 = vpop.f32.mrb[0].mxu0
      %4437 = vmatprep.mubr.bf16.mxu0 0
      %4438 = vmatmul.mubr.bf16.gmra.mrb[0].mxu0 %v4269
      %v4439 = vpop.f32.mrb[0].mxu0
      %v4440 = vadd.f32 0.0, %v4439
      %v4441 = vpop.f32.mrb[0].mxu0
      %v4442 = vpop.f32.mrb[0].mxu0
      %v4443 = vadd.f32 0.0, %v4442
      %v4444 = vpop.f32.mrb[0].mxu0
      %4445 = vmatprep.mubr.bf16.mxu0 0
      %4446 = vmatmul.mubr.bf16.gmra.mrb[0].mxu0 %v4270
      %v4447 = vpop.f32.mrb[0].mxu0
      %v4448 = vadd.f32 0.0, %v4447
      %v4449 = vpop.f32.mrb[0].mxu0
      %v4450 = vpop.f32.mrb[0].mxu0
      %v4451 = vadd.f32 0.0, %v4450
      %v4452 = vpop.f32.mrb[0].mxu0
      %4453 = vmatprep.mubr.bf16.mxu0 0
      %4454 = vmatmul.mubr.bf16.gmra.mrb[0].mxu0 %v4271
      %v4455 = vpop.f32.mrb[0].mxu0
      %v4456 = vadd.f32 0.0, %v4455
      %v4457 = vpop.f32.mrb[0].mxu0
      %v4458 = vpop.f32.mrb[0].mxu0
      %v4459 = vadd.f32 0.0, %v4458
      %v4460 = vpop.f32.mrb[0].mxu0
      %4461 = vmatprep.mubr.bf16.mxu0 0
      %4462 = vmatmul.mubr.bf16.gmra.mrb[0].mxu0 %v4272
      %v4463 = vpop.f32.mrb[0].mxu0
      %v4464 = vadd.f32 0.0, %v4463
      %v4465 = vpop.f32.mrb[0].mxu0
      %v4466 = vpop.f32.mrb[0].mxu0
      %v4467 = vadd.f32 0.0, %v4466
      %v4468 = vpop.f32.mrb[0].mxu0
      %4469 = vmatprep.mubr.bf16.mxu0 0
      %4470 = vmatmul.mubr.bf16.gmra.mrb[0].mxu0 %v4273
      %v4471 = vpop.f32.mrb[0].mxu0
      %v4472 = vadd.f32 0.0, %v4471
      %v4473 = vpop.f32.mrb[0].mxu0
      %v4474 = vpop.f32.mrb[0].mxu0
      %v4475 = vadd.f32 0.0, %v4474
      %v4476 = vpop.f32.mrb[0].mxu0
      %4477 = vmatprep.mubr.bf16.mxu0 0
      %4478 = vmatmul.mubr.bf16.gmra.mrb[0].mxu0 %v4274
      %v4479 = vpop.f32.mrb[0].mxu0
      %v4480 = vadd.f32 0.0, %v4479
      %v4481 = vpop.f32.mrb[0].mxu0
      %v4482 = vpop.f32.mrb[0].mxu0
      %v4483 = vadd.f32 0.0, %v4482
      %v4484 = vpop.f32.mrb[0].mxu0
      %4485 = vmatprep.mubr.bf16.mxu0 0
      %4486 = vmatmul.mubr.bf16.gmra.mrb[0].mxu0 %v4275
      %v4487 = vpop.f32.mrb[0].mxu0
      %v4488 = vadd.f32 0.0, %v4487
      %v4489 = vpop.f32.mrb[0].mxu0
      %v4490 = vpop.f32.mrb[0].mxu0
      %v4491 = vadd.f32 0.0, %v4490
      %v4492 = vpop.f32.mrb[0].mxu0
      %4493 = vmatprep.mubr.bf16.mxu0 0
      %4494 = vmatmul.mubr.bf16.gmra.mrb[0].mxu0 %v4276
      %v4495 = vpop.f32.mrb[0].mxu0
      %v4496 = vadd.f32 0.0, %v4495
      %v4497 = vpop.f32.mrb[0].mxu0
      %v4498 = vpop.f32.mrb[0].mxu0
      %v4499 = vadd.f32 0.0, %v4498
      %v4500 = vpop.f32.mrb[0].mxu0
      %4501 = vdwg.mxu0
      %v4502 = vadd.f32 %v3748, %v4376
      %v4503 = vadd.f32 %v3749, %v4379
      %v4504 = vadd.f32 %v3750, %v4384
      %v4505 = vadd.f32 %v3751, %v4387
      %v4506 = vadd.f32 %v3752, %v4392
      %v4507 = vadd.f32 %v3753, %v4395
      %v4508 = vadd.f32 %v3754, %v4400
      %v4509 = vadd.f32 %v3755, %v4403
      %v4510 = vadd.f32 %v3756, %v4408
      %v4511 = vadd.f32 %v3757, %v4411
      %v4512 = vadd.f32 %v3758, %v4416
      %v4513 = vadd.f32 %v3759, %v4419
      %v4514 = vadd.f32 %v3760, %v4424
      %v4515 = vadd.f32 %v3761, %v4427
      %v4516 = vadd.f32 %v3762, %v4432
      %v4517 = vadd.f32 %v3763, %v4435
      %v4518 = vadd.f32 %v3764, %v4440
      %v4519 = vadd.f32 %v3765, %v4443
      %v4520 = vadd.f32 %v3766, %v4448
      %v4521 = vadd.f32 %v3767, %v4451
      %v4522 = vadd.f32 %v3768, %v4456
      %v4523 = vadd.f32 %v3769, %v4459
      %v4524 = vadd.f32 %v3770, %v4464
      %v4525 = vadd.f32 %v3771, %v4467
      %v4526 = vadd.f32 %v3772, %v4472
      %v4527 = vadd.f32 %v3773, %v4475
      %v4528 = vadd.f32 %v3774, %v4480
      %v4529 = vadd.f32 %v3775, %v4483
      %v4530 = vadd.f32 %v3776, %v4488
      %v4531 = vadd.f32 %v3777, %v4491
      %v4532 = vadd.f32 %v3778, %v4496
      %v4533 = vadd.f32 %v3779, %v4499
      %v4534 = vld [vmem:[%s3393] sm:$0xe]
      %v4535 = vld [vmem:[%s3393 + $0xc] sm:$0xe]
      %v4536 = vld [vmem:[%s3393 + $0x18] sm:$0xe]
      %v4537 = vld [vmem:[%s3393 + $0x24] sm:$0xe]
      %v4538 = vld [vmem:[%s3393 + $0x30] sm:$0xe]
      %v4539 = vld [vmem:[%s3393 + $0x3c] sm:$0xe]
      %v4540 = vld [vmem:[%s3393 + $0x48] sm:$0xe]
      %v4541 = vld [vmem:[%s3393 + $0x54] sm:$0xe]
      %v4542 = vld [vmem:[%s3393 + $0x60] sm:$0xe]
      %v4543 = vld [vmem:[%s3393 + $0x6c] sm:$0xe]
      %v4544 = vld [vmem:[%s3393 + $0x78] sm:$0xe]
      %v4545 = vld [vmem:[%s3393 + $0x84] sm:$0xe]
      %v4546 = vld [vmem:[%s3393 + $0x90] sm:$0xe]
      %v4547 = vld [vmem:[%s3393 + $0x9c] sm:$0xe]
      %v4548 = vld [vmem:[%s3393 + $0xa8] sm:$0xe]
      %v4549 = vld [vmem:[%s3393 + $0xb4] sm:$0xe]
      %v4598 = vrot.slane %v4534, 5
      %v4599 = vrot.slane %v4598, 4
      %v4600 = vrot.slane %v3781, 5
      %v4601 = vsel %vm1313, %v4599, %v4600
      %v4602 = vrot.slane %v4600, 4
      %v4603 = vrot.slane %v3782, 5
      %v4604 = vsel %vm1313, %v4602, %v4603
      %v4605 = vrot.slane %v4535, 5
      %v4606 = vrot.slane %v4605, 4
      %v4607 = vrot.slane %v3784, 5
      %v4608 = vsel %vm1313, %v4606, %v4607
      %v4609 = vrot.slane %v4607, 4
      %v4610 = vrot.slane %v3785, 5
      %v4611 = vsel %vm1313, %v4609, %v4610
      %v4612 = vrot.slane %v4536, 5
      %v4613 = vrot.slane %v4612, 4
      %v4614 = vrot.slane %v3787, 5
      %v4615 = vsel %vm1313, %v4613, %v4614
      %v4616 = vrot.slane %v4614, 4
      %v4617 = vrot.slane %v3788, 5
      %v4618 = vsel %vm1313, %v4616, %v4617
      %v4619 = vrot.slane %v4537, 5
      %v4620 = vrot.slane %v4619, 4
      %v4621 = vrot.slane %v3790, 5
      %v4622 = vsel %vm1313, %v4620, %v4621
      %v4623 = vrot.slane %v4621, 4
      %v4624 = vrot.slane %v3791, 5
      %v4625 = vsel %vm1313, %v4623, %v4624
      %v4626 = vrot.slane %v4538, 5
      %v4627 = vrot.slane %v4626, 4
      %v4628 = vrot.slane %v3793, 5
      %v4629 = vsel %vm1313, %v4627, %v4628
      %v4630 = vrot.slane %v4628, 4
      %v4631 = vrot.slane %v3794, 5
      %v4632 = vsel %vm1313, %v4630, %v4631
      %v4633 = vrot.slane %v4539, 5
      %v4634 = vrot.slane %v4633, 4
      %v4635 = vrot.slane %v3796, 5
      %v4636 = vsel %vm1313, %v4634, %v4635
      %v4637 = vrot.slane %v4635, 4
      %v4638 = vrot.slane %v3797, 5
      %v4639 = vsel %vm1313, %v4637, %v4638
      %v4640 = vrot.slane %v4540, 5
      %v4641 = vrot.slane %v4640, 4
      %v4642 = vrot.slane %v3799, 5
      %v4643 = vsel %vm1313, %v4641, %v4642
      %v4644 = vrot.slane %v4642, 4
      %v4645 = vrot.slane %v3800, 5
      %v4646 = vsel %vm1313, %v4644, %v4645
      %v4647 = vrot.slane %v4541, 5
      %v4648 = vrot.slane %v4647, 4
      %v4649 = vrot.slane %v3802, 5
      %v4650 = vsel %vm1313, %v4648, %v4649
      %v4651 = vrot.slane %v4649, 4
      %v4652 = vrot.slane %v3803, 5
      %v4653 = vsel %vm1313, %v4651, %v4652
      %v4654 = vrot.slane %v4542, 5
      %v4655 = vrot.slane %v4654, 4
      %v4656 = vrot.slane %v3805, 5
      %v4657 = vsel %vm1313, %v4655, %v4656
      %v4658 = vrot.slane %v4656, 4
      %v4659 = vrot.slane %v3806, 5
      %v4660 = vsel %vm1313, %v4658, %v4659
      %v4661 = vrot.slane %v4543, 5
      %v4662 = vrot.slane %v4661, 4
      %v4663 = vrot.slane %v3808, 5
      %v4664 = vsel %vm1313, %v4662, %v4663
      %v4665 = vrot.slane %v4663, 4
      %v4666 = vrot.slane %v3809, 5
      %v4667 = vsel %vm1313, %v4665, %v4666
      %v4668 = vrot.slane %v4544, 5
      %v4669 = vrot.slane %v4668, 4
      %v4670 = vrot.slane %v3811, 5
      %v4671 = vsel %vm1313, %v4669, %v4670
      %v4672 = vrot.slane %v4670, 4
      %v4673 = vrot.slane %v3812, 5
      %v4674 = vsel %vm1313, %v4672, %v4673
      %v4675 = vrot.slane %v4545, 5
      %v4676 = vrot.slane %v4675, 4
      %v4677 = vrot.slane %v3814, 5
      %v4678 = vsel %vm1313, %v4676, %v4677
      %v4679 = vrot.slane %v4677, 4
      %v4680 = vrot.slane %v3815, 5
      %v4681 = vsel %vm1313, %v4679, %v4680
      %v4682 = vrot.slane %v4546, 5
      %v4683 = vrot.slane %v4682, 4
      %v4684 = vrot.slane %v3817, 5
      %v4685 = vsel %vm1313, %v4683, %v4684
      %v4686 = vrot.slane %v4684, 4
      %v4687 = vrot.slane %v3818, 5
      %v4688 = vsel %vm1313, %v4686, %v4687
      %v4689 = vrot.slane %v4547, 5
      %v4690 = vrot.slane %v4689, 4
      %v4691 = vrot.slane %v3820, 5
      %v4692 = vsel %vm1313, %v4690, %v4691
      %v4693 = vrot.slane %v4691, 4
      %v4694 = vrot.slane %v3821, 5
      %v4695 = vsel %vm1313, %v4693, %v4694
      %v4696 = vrot.slane %v4548, 5
      %v4697 = vrot.slane %v4696, 4
      %v4698 = vrot.slane %v3823, 5
      %v4699 = vsel %vm1313, %v4697, %v4698
      %v4700 = vrot.slane %v4698, 4
      %v4701 = vrot.slane %v3824, 5
      %v4702 = vsel %vm1313, %v4700, %v4701
      %v4703 = vrot.slane %v4549, 5
      %v4704 = vrot.slane %v4703, 4
      %v4705 = vrot.slane %v3826, 5
      %v4706 = vsel %vm1313, %v4704, %v4705
      %v4707 = vrot.slane %v4705, 4
      %v4708 = vrot.slane %v3827, 5
      %v4709 = vsel %vm1313, %v4707, %v4708
      %s4710 = scalar_lea.vmem %s1, 512
      %v4711 = vld [vmem:[%s4710] sm:$0xf]
      %v4712 = vld [vmem:[%s4710 + $0x4] sm:$0xf]
      %v4713 = vld [vmem:[%s4710 + $0x8] sm:$0xf]
      %v4714 = vld [vmem:[%s4710 + $0xc] sm:$0xf]
      %v4715 = vld [vmem:[%s4710 + $0x10] sm:$0xf]
      %v4716 = vld [vmem:[%s4710 + $0x14] sm:$0xf]
      %v4717 = vld [vmem:[%s4710 + $0x18] sm:$0xf]
      %v4718 = vld [vmem:[%s4710 + $0x1c] sm:$0xf]
      %v4719 = vld [vmem:[%s4710 + $0x20] sm:$0xf]
      %v4720 = vld [vmem:[%s4710 + $0x24] sm:$0xf]
      %v4721 = vld [vmem:[%s4710 + $0x28] sm:$0xf]
      %v4722 = vld [vmem:[%s4710 + $0x2c] sm:$0xf]
      %v4723 = vld [vmem:[%s4710 + $0x30] sm:$0xf]
      %v4724 = vld [vmem:[%s4710 + $0x34] sm:$0xf]
      %v4725 = vld [vmem:[%s4710 + $0x38] sm:$0xf]
      %v4726 = vld [vmem:[%s4710 + $0x3c] sm:$0xf]
      %v4727 = vunpack.c.l.b16 %v4601
      %v4728 = vunpack.c.l.b16 %v4604
      %v4729 = vunpack.c.l.b16 %v4608
      %v4730 = vunpack.c.l.b16 %v4611
      %v4731 = vunpack.c.l.b16 %v4615
      %v4732 = vunpack.c.l.b16 %v4618
      %v4733 = vunpack.c.l.b16 %v4622
      %v4734 = vunpack.c.l.b16 %v4625
      %v4735 = vunpack.c.l.b16 %v4629
      %v4736 = vunpack.c.l.b16 %v4632
      %v4737 = vunpack.c.l.b16 %v4636
      %v4738 = vunpack.c.l.b16 %v4639
      %v4739 = vunpack.c.l.b16 %v4643
      %v4740 = vunpack.c.l.b16 %v4646
      %v4741 = vunpack.c.l.b16 %v4650
      %v4742 = vunpack.c.l.b16 %v4653
      %v4743 = vunpack.c.l.b16 %v4657
      %v4744 = vunpack.c.l.b16 %v4660
      %v4745 = vunpack.c.l.b16 %v4664
      %v4746 = vunpack.c.l.b16 %v4667
      %v4747 = vunpack.c.l.b16 %v4671
      %v4748 = vunpack.c.l.b16 %v4674
      %v4749 = vunpack.c.l.b16 %v4678
      %v4750 = vunpack.c.l.b16 %v4681
      %v4751 = vunpack.c.l.b16 %v4685
      %v4752 = vunpack.c.l.b16 %v4688
      %v4753 = vunpack.c.l.b16 %v4692
      %v4754 = vunpack.c.l.b16 %v4695
      %v4755 = vunpack.c.l.b16 %v4699
      %v4756 = vunpack.c.l.b16 %v4702
      %v4757 = vunpack.c.l.b16 %v4706
      %v4758 = vunpack.c.l.b16 %v4709
      %v4759 = vpack.c.b16 %v4728, %v4727
      %v4760 = vpack.c.b16 %v4730, %v4729
      %v4761 = vpack.c.b16 %v4732, %v4731
      %v4762 = vpack.c.b16 %v4734, %v4733
      %v4763 = vpack.c.b16 %v4736, %v4735
      %v4764 = vpack.c.b16 %v4738, %v4737
      %v4765 = vpack.c.b16 %v4740, %v4739
      %v4766 = vpack.c.b16 %v4742, %v4741
      %v4767 = vpack.c.b16 %v4744, %v4743
      %v4768 = vpack.c.b16 %v4746, %v4745
      %v4769 = vpack.c.b16 %v4748, %v4747
      %v4770 = vpack.c.b16 %v4750, %v4749
      %v4771 = vpack.c.b16 %v4752, %v4751
      %v4772 = vpack.c.b16 %v4754, %v4753
      %v4773 = vpack.c.b16 %v4756, %v4755
      %v4774 = vpack.c.b16 %v4758, %v4757
      %v4807 = vunpack.c.l.b16 %v4711
      %v4808 = vunpack.c.l.b16 %v4712
      %v4809 = vunpack.c.l.b16 %v4713
      %v4810 = vunpack.c.l.b16 %v4714
      %v4811 = vunpack.c.l.b16 %v4715
      %v4812 = vunpack.c.l.b16 %v4716
      %v4813 = vunpack.c.l.b16 %v4717
      %v4814 = vunpack.c.l.b16 %v4718
      %v4815 = vunpack.c.l.b16 %v4719
      %v4816 = vunpack.c.l.b16 %v4720
      %v4817 = vunpack.c.l.b16 %v4721
      %v4818 = vunpack.c.l.b16 %v4722
      %v4819 = vunpack.c.l.b16 %v4723
      %v4820 = vunpack.c.l.b16 %v4724
      %v4821 = vunpack.c.l.b16 %v4725
      %v4822 = vunpack.c.l.b16 %v4726
      %v4823 = vpack.c.b16 %v4808, %v4807
      %v4824 = vpack.c.b16 %v4810, %v4809
      %v4825 = vpack.c.b16 %v4812, %v4811
      %v4826 = vpack.c.b16 %v4814, %v4813
      %v4827 = vpack.c.b16 %v4816, %v4815
      %v4828 = vpack.c.b16 %v4818, %v4817
      %v4829 = vpack.c.b16 %v4820, %v4819
      %v4830 = vpack.c.b16 %v4822, %v4821
      %4839 = vmatprep.subr.bf16.mxu0 0
      %4840 = vmatpush1.bf16.msra.mxu0 %v4823
      %4841 = vmatprep.subr.bf16.mxu0 0
      %4842 = vmatpush1.bf16.msra.mxu0 %v4824
      %4843 = vmatprep.subr.bf16.mxu0 0
      %4844 = vmatpush1.bf16.msra.mxu0 %v4825
      %4845 = vmatprep.subr.bf16.mxu0 0
      %4846 = vmatpush1.bf16.msra.mxu0 %v4826
      %4847 = vmatprep.subr.bf16.mxu0 0
      %4848 = vmatpush1.bf16.msra.mxu0 %v4827
      %4849 = vmatprep.subr.bf16.mxu0 0
      %4850 = vmatpush1.bf16.msra.mxu0 %v4828
      %4851 = vmatprep.subr.bf16.mxu0 0
      %4852 = vmatpush1.bf16.msra.mxu0 %v4829
      %4853 = vmatprep.subr.bf16.mxu0 0
      %4854 = vmatpush1.bf16.msra.mxu0 %v4830
      %4855 = vmatprep.subr.bf16.mxu0 0
      %4856 = vmatpush1.bf16.msra.mxu0 0
      %4857 = vmatprep.subr.bf16.mxu0 0
      %4858 = vmatpush1.bf16.msra.mxu0 0
      %4859 = vmatprep.subr.bf16.mxu0 0
      %4860 = vmatpush1.bf16.msra.mxu0 0
      %4861 = vmatprep.subr.bf16.mxu0 0
      %4862 = vmatpush1.bf16.msra.mxu0 0
      %4863 = vmatprep.subr.bf16.mxu0 0
      %4864 = vmatpush1.bf16.msra.mxu0 0
      %4865 = vmatprep.subr.bf16.mxu0 0
      %4866 = vmatpush1.bf16.msra.mxu0 0
      %4867 = vmatprep.subr.bf16.mxu0 0
      %4868 = vmatpush1.bf16.msra.mxu0 0
      %4869 = vmatprep.subr.bf16.mxu0 0
      %4870 = vmatpush1.bf16.msra.mxu0 0
      %4871 = vmatprep.mubr.bf16.mxu0 0
      %4872 = vmatmul.mubr.bf16.gmra.mrb[0].mxu0 %v4759
      %v4873 = vpop.f32.mrb[0].mxu0
      %v4874 = vadd.f32 0.0, %v4873
      %v4875 = vpop.f32.mrb[0].mxu0
      %v4876 = vpop.f32.mrb[0].mxu0
      %v4877 = vadd.f32 0.0, %v4876
      %v4878 = vpop.f32.mrb[0].mxu0
      %4879 = vmatprep.mubr.bf16.mxu0 0
      %4880 = vmatmul.mubr.bf16.gmra.mrb[0].mxu0 %v4760
      %v4881 = vpop.f32.mrb[0].mxu0
      %v4882 = vadd.f32 0.0, %v4881
      %v4883 = vpop.f32.mrb[0].mxu0
      %v4884 = vpop.f32.mrb[0].mxu0
      %v4885 = vadd.f32 0.0, %v4884
      %v4886 = vpop.f32.mrb[0].mxu0
      %4887 = vmatprep.mubr.bf16.mxu0 0
      %4888 = vmatmul.mubr.bf16.gmra.mrb[0].mxu0 %v4761
      %v4889 = vpop.f32.mrb[0].mxu0
      %v4890 = vadd.f32 0.0, %v4889
      %v4891 = vpop.f32.mrb[0].mxu0
      %v4892 = vpop.f32.mrb[0].mxu0
      %v4893 = vadd.f32 0.0, %v4892
      %v4894 = vpop.f32.mrb[0].mxu0
      %4895 = vmatprep.mubr.bf16.mxu0 0
      %4896 = vmatmul.mubr.bf16.gmra.mrb[0].mxu0 %v4762
      %v4897 = vpop.f32.mrb[0].mxu0
      %v4898 = vadd.f32 0.0, %v4897
      %v4899 = vpop.f32.mrb[0].mxu0
      %v4900 = vpop.f32.mrb[0].mxu0
      %v4901 = vadd.f32 0.0, %v4900
      %v4902 = vpop.f32.mrb[0].mxu0
      %4903 = vmatprep.mubr.bf16.mxu0 0
      %4904 = vmatmul.mubr.bf16.gmra.mrb[0].mxu0 %v4763
      %v4905 = vpop.f32.mrb[0].mxu0
      %v4906 = vadd.f32 0.0, %v4905
      %v4907 = vpop.f32.mrb[0].mxu0
      %v4908 = vpop.f32.mrb[0].mxu0
      %v4909 = vadd.f32 0.0, %v4908
      %v4910 = vpop.f32.mrb[0].mxu0
      %4911 = vmatprep.mubr.bf16.mxu0 0
      %4912 = vmatmul.mubr.bf16.gmra.mrb[0].mxu0 %v4764
      %v4913 = vpop.f32.mrb[0].mxu0
      %v4914 = vadd.f32 0.0, %v4913
      %v4915 = vpop.f32.mrb[0].mxu0
      %v4916 = vpop.f32.mrb[0].mxu0
      %v4917 = vadd.f32 0.0, %v4916
      %v4918 = vpop.f32.mrb[0].mxu0
      %4919 = vmatprep.mubr.bf16.mxu0 0
      %4920 = vmatmul.mubr.bf16.gmra.mrb[0].mxu0 %v4765
      %v4921 = vpop.f32.mrb[0].mxu0
      %v4922 = vadd.f32 0.0, %v4921
      %v4923 = vpop.f32.mrb[0].mxu0
      %v4924 = vpop.f32.mrb[0].mxu0
      %v4925 = vadd.f32 0.0, %v4924
      %v4926 = vpop.f32.mrb[0].mxu0
      %4927 = vmatprep.mubr.bf16.mxu0 0
      %4928 = vmatmul.mubr.bf16.gmra.mrb[0].mxu0 %v4766
      %v4929 = vpop.f32.mrb[0].mxu0
      %v4930 = vadd.f32 0.0, %v4929
      %v4931 = vpop.f32.mrb[0].mxu0
      %v4932 = vpop.f32.mrb[0].mxu0
      %v4933 = vadd.f32 0.0, %v4932
      %v4934 = vpop.f32.mrb[0].mxu0
      %4935 = vmatprep.mubr.bf16.mxu0 0
      %4936 = vmatmul.mubr.bf16.gmra.mrb[0].mxu0 %v4767
      %v4937 = vpop.f32.mrb[0].mxu0
      %v4938 = vadd.f32 0.0, %v4937
      %v4939 = vpop.f32.mrb[0].mxu0
      %v4940 = vpop.f32.mrb[0].mxu0
      %v4941 = vadd.f32 0.0, %v4940
      %v4942 = vpop.f32.mrb[0].mxu0
      %4943 = vmatprep.mubr.bf16.mxu0 0
      %4944 = vmatmul.mubr.bf16.gmra.mrb[0].mxu0 %v4768
      %v4945 = vpop.f32.mrb[0].mxu0
      %v4946 = vadd.f32 0.0, %v4945
      %v4947 = vpop.f32.mrb[0].mxu0
      %v4948 = vpop.f32.mrb[0].mxu0
      %v4949 = vadd.f32 0.0, %v4948
      %v4950 = vpop.f32.mrb[0].mxu0
      %4951 = vmatprep.mubr.bf16.mxu0 0
      %4952 = vmatmul.mubr.bf16.gmra.mrb[0].mxu0 %v4769
      %v4953 = vpop.f32.mrb[0].mxu0
      %v4954 = vadd.f32 0.0, %v4953
      %v4955 = vpop.f32.mrb[0].mxu0
      %v4956 = vpop.f32.mrb[0].mxu0
      %v4957 = vadd.f32 0.0, %v4956
      %v4958 = vpop.f32.mrb[0].mxu0
      %4959 = vmatprep.mubr.bf16.mxu0 0
      %4960 = vmatmul.mubr.bf16.gmra.mrb[0].mxu0 %v4770
      %v4961 = vpop.f32.mrb[0].mxu0
      %v4962 = vadd.f32 0.0, %v4961
      %v4963 = vpop.f32.mrb[0].mxu0
      %v4964 = vpop.f32.mrb[0].mxu0
      %v4965 = vadd.f32 0.0, %v4964
      %v4966 = vpop.f32.mrb[0].mxu0
      %4967 = vmatprep.mubr.bf16.mxu0 0
      %4968 = vmatmul.mubr.bf16.gmra.mrb[0].mxu0 %v4771
      %v4969 = vpop.f32.mrb[0].mxu0
      %v4970 = vadd.f32 0.0, %v4969
      %v4971 = vpop.f32.mrb[0].mxu0
      %v4972 = vpop.f32.mrb[0].mxu0
      %v4973 = vadd.f32 0.0, %v4972
      %v4974 = vpop.f32.mrb[0].mxu0
      %4975 = vmatprep.mubr.bf16.mxu0 0
      %4976 = vmatmul.mubr.bf16.gmra.mrb[0].mxu0 %v4772
      %v4977 = vpop.f32.mrb[0].mxu0
      %v4978 = vadd.f32 0.0, %v4977
      %v4979 = vpop.f32.mrb[0].mxu0
      %v4980 = vpop.f32.mrb[0].mxu0
      %v4981 = vadd.f32 0.0, %v4980
      %v4982 = vpop.f32.mrb[0].mxu0
      %4983 = vmatprep.mubr.bf16.mxu0 0
      %4984 = vmatmul.mubr.bf16.gmra.mrb[0].mxu0 %v4773
      %v4985 = vpop.f32.mrb[0].mxu0
      %v4986 = vadd.f32 0.0, %v4985
      %v4987 = vpop.f32.mrb[0].mxu0
      %v4988 = vpop.f32.mrb[0].mxu0
      %v4989 = vadd.f32 0.0, %v4988
      %v4990 = vpop.f32.mrb[0].mxu0
      %4991 = vmatprep.mubr.bf16.mxu0 0
      %4992 = vmatmul.mubr.bf16.gmra.mrb[0].mxu0 %v4774
      %v4993 = vpop.f32.mrb[0].mxu0
      %v4994 = vadd.f32 0.0, %v4993
      %v4995 = vpop.f32.mrb[0].mxu0
      %v4996 = vpop.f32.mrb[0].mxu0
      %v4997 = vadd.f32 0.0, %v4996
      %v4998 = vpop.f32.mrb[0].mxu0
      %4999 = vdwg.mxu0
      %v5000 = vadd.f32 %v4502, %v4874
      %v5001 = vadd.f32 %v4503, %v4877
      %v5002 = vadd.f32 %v4504, %v4882
      %v5003 = vadd.f32 %v4505, %v4885
      %v5004 = vadd.f32 %v4506, %v4890
      %v5005 = vadd.f32 %v4507, %v4893
      %v5006 = vadd.f32 %v4508, %v4898
      %v5007 = vadd.f32 %v4509, %v4901
      %v5008 = vadd.f32 %v4510, %v4906
      %v5009 = vadd.f32 %v4511, %v4909
      %v5010 = vadd.f32 %v4512, %v4914
      %v5011 = vadd.f32 %v4513, %v4917
      %v5012 = vadd.f32 %v4514, %v4922
      %v5013 = vadd.f32 %v4515, %v4925
      %v5014 = vadd.f32 %v4516, %v4930
      %v5015 = vadd.f32 %v4517, %v4933
      %v5016 = vadd.f32 %v4518, %v4938
      %v5017 = vadd.f32 %v4519, %v4941
      %v5018 = vadd.f32 %v4520, %v4946
      %v5019 = vadd.f32 %v4521, %v4949
      %v5020 = vadd.f32 %v4522, %v4954
      %v5021 = vadd.f32 %v4523, %v4957
      %v5022 = vadd.f32 %v4524, %v4962
      %v5023 = vadd.f32 %v4525, %v4965
      %v5024 = vadd.f32 %v4526, %v4970
      %v5025 = vadd.f32 %v4527, %v4973
      %v5026 = vadd.f32 %v4528, %v4978
      %v5027 = vadd.f32 %v4529, %v4981
      %v5028 = vadd.f32 %v4530, %v4986
      %v5029 = vadd.f32 %v4531, %v4989
      %v5030 = vadd.f32 %v4532, %v4994
      %v5031 = vadd.f32 %v4533, %v4997
      %5032 = vst [vmem:[%s204] sm:$0xff] %v5000
      %5033 = vst [vmem:[%s204 + $0x8] sm:$0xff] %v5001
      %5034 = vst [vmem:[%s204 + $0x10] sm:$0xff] %v5002
      %5035 = vst [vmem:[%s204 + $0x18] sm:$0xff] %v5003
      %5036 = vst [vmem:[%s204 + $0x20] sm:$0xff] %v5004
      %5037 = vst [vmem:[%s204 + $0x28] sm:$0xff] %v5005
      %5038 = vst [vmem:[%s204 + $0x30] sm:$0xff] %v5006
      %5039 = vst [vmem:[%s204 + $0x38] sm:$0xff] %v5007
      %5040 = vst [vmem:[%s204 + $0x40] sm:$0xff] %v5008
      %5041 = vst [vmem:[%s204 + $0x48] sm:$0xff] %v5009
      %5042 = vst [vmem:[%s204 + $0x50] sm:$0xff] %v5010
      %5043 = vst [vmem:[%s204 + $0x58] sm:$0xff] %v5011
      %5044 = vst [vmem:[%s204 + $0x60] sm:$0xff] %v5012
      %5045 = vst [vmem:[%s204 + $0x68] sm:$0xff] %v5013
      %5046 = vst [vmem:[%s204 + $0x70] sm:$0xff] %v5014
      %5047 = vst [vmem:[%s204 + $0x78] sm:$0xff] %v5015
      %5048 = vst [vmem:[%s204 + $0x80] sm:$0xff] %v5016
      %5049 = vst [vmem:[%s204 + $0x88] sm:$0xff] %v5017
      %5050 = vst [vmem:[%s204 + $0x90] sm:$0xff] %v5018
      %5051 = vst [vmem:[%s204 + $0x98] sm:$0xff] %v5019
      %5052 = vst [vmem:[%s204 + $0xa0] sm:$0xff] %v5020
      %5053 = vst [vmem:[%s204 + $0xa8] sm:$0xff] %v5021
      %5054 = vst [vmem:[%s204 + $0xb0] sm:$0xff] %v5022
      %5055 = vst [vmem:[%s204 + $0xb8] sm:$0xff] %v5023
      %5056 = vst [vmem:[%s204 + $0xc0] sm:$0xff] %v5024
      %5057 = vst [vmem:[%s204 + $0xc8] sm:$0xff] %v5025
      %5058 = vst [vmem:[%s204 + $0xd0] sm:$0xff] %v5026
      %5059 = vst [vmem:[%s204 + $0xd8] sm:$0xff] %v5027
      %5060 = vst [vmem:[%s204 + $0xe0] sm:$0xff] %v5028
      %5061 = vst [vmem:[%s204 + $0xe8] sm:$0xff] %v5029
      %5062 = vst [vmem:[%s204 + $0xf0] sm:$0xff] %v5030
      %5063 = vst [vmem:[%s204 + $0xf8] sm:$0xff] %v5031
      %v5064 = vadd.f32 %v5000, %v5001
      %v5065 = vadd.f32 %v5064, %v5002
      %v5066 = vadd.f32 %v5065, %v5003
      %v5067 = vadd.f32 %v5066, %v5004
      %v5068 = vadd.f32 %v5067, %v5005
      %v5069 = vadd.f32 %v5068, %v5006
      %v5070 = vadd.f32 %v5069, %v5007
      %v5071 = vadd.f32 %v5070, %v5008
      %v5072 = vadd.f32 %v5071, %v5009
      %v5073 = vadd.f32 %v5072, %v5010
      %v5074 = vadd.f32 %v5073, %v5011
      %v5075 = vadd.f32 %v5074, %v5012
      %v5076 = vadd.f32 %v5075, %v5013
      %v5077 = vadd.f32 %v5076, %v5014
      %v5078 = vadd.f32 %v5077, %v5015
      %v5079 = vadd.f32 %v5078, %v5016
      %v5080 = vadd.f32 %v5079, %v5017
      %v5081 = vadd.f32 %v5080, %v5018
      %v5082 = vadd.f32 %v5081, %v5019
      %v5083 = vadd.f32 %v5082, %v5020
      %v5084 = vadd.f32 %v5083, %v5021
      %v5085 = vadd.f32 %v5084, %v5022
      %v5086 = vadd.f32 %v5085, %v5023
      %v5087 = vadd.f32 %v5086, %v5024
      %v5088 = vadd.f32 %v5087, %v5025
      %v5089 = vadd.f32 %v5088, %v5026
      %v5090 = vadd.f32 %v5089, %v5027
      %v5091 = vadd.f32 %v5090, %v5028
      %v5092 = vadd.f32 %v5091, %v5029
      %v5093 = vadd.f32 %v5092, %v5030
      %v5094 = vadd.f32 %v5093, %v5031
      %v5095 = vrot.slane %v5094, 4
      %v5096 = vadd.f32 %v5094, %v5095
      %v5097 = vrot.slane %v5096, 2
      %v5098 = vadd.f32 %v5096, %v5097
      %v5099 = vrot.slane %v5098, 1
      %v5100 = vadd.f32 %v5098, %v5099
      %5101 = vst [vmem:[%s211] sm:$0x1] %v5100
      %v5102 = vmul.f32 %v5000, %v5000
      %v5103 = vmul.f32 %v5001, %v5001
      %v5104 = vmul.f32 %v5002, %v5002
      %v5105 = vmul.f32 %v5003, %v5003
      %v5106 = vmul.f32 %v5004, %v5004
      %v5107 = vmul.f32 %v5005, %v5005
      %v5108 = vmul.f32 %v5006, %v5006
      %v5109 = vmul.f32 %v5007, %v5007
      %v5110 = vmul.f32 %v5008, %v5008
      %v5111 = vmul.f32 %v5009, %v5009
      %v5112 = vmul.f32 %v5010, %v5010
      %v5113 = vmul.f32 %v5011, %v5011
      %v5114 = vmul.f32 %v5012, %v5012
      %v5115 = vmul.f32 %v5013, %v5013
      %v5116 = vmul.f32 %v5014, %v5014
      %v5117 = vmul.f32 %v5015, %v5015
      %v5118 = vmul.f32 %v5016, %v5016
      %v5119 = vmul.f32 %v5017, %v5017
      %v5120 = vmul.f32 %v5018, %v5018
      %v5121 = vmul.f32 %v5019, %v5019
      %v5122 = vmul.f32 %v5020, %v5020
      %v5123 = vmul.f32 %v5021, %v5021
      %v5124 = vmul.f32 %v5022, %v5022
      %v5125 = vmul.f32 %v5023, %v5023
      %v5126 = vmul.f32 %v5024, %v5024
      %v5127 = vmul.f32 %v5025, %v5025
      %v5128 = vmul.f32 %v5026, %v5026
      %v5129 = vmul.f32 %v5027, %v5027
      %v5130 = vmul.f32 %v5028, %v5028
      %v5131 = vmul.f32 %v5029, %v5029
      %v5132 = vmul.f32 %v5030, %v5030
      %v5133 = vmul.f32 %v5031, %v5031
      %v5134 = vadd.f32 %v5102, %v5103
      %v5135 = vadd.f32 %v5134, %v5104
      %v5136 = vadd.f32 %v5135, %v5105
      %v5137 = vadd.f32 %v5136, %v5106
      %v5138 = vadd.f32 %v5137, %v5107
      %v5139 = vadd.f32 %v5138, %v5108
      %v5140 = vadd.f32 %v5139, %v5109
      %v5141 = vadd.f32 %v5140, %v5110
      %v5142 = vadd.f32 %v5141, %v5111
      %v5143 = vadd.f32 %v5142, %v5112
      %v5144 = vadd.f32 %v5143, %v5113
      %v5145 = vadd.f32 %v5144, %v5114
      %v5146 = vadd.f32 %v5145, %v5115
      %v5147 = vadd.f32 %v5146, %v5116
      %v5148 = vadd.f32 %v5147, %v5117
      %v5149 = vadd.f32 %v5148, %v5118
      %v5150 = vadd.f32 %v5149, %v5119
      %v5151 = vadd.f32 %v5150, %v5120
      %v5152 = vadd.f32 %v5151, %v5121
      %v5153 = vadd.f32 %v5152, %v5122
      %v5154 = vadd.f32 %v5153, %v5123
      %v5155 = vadd.f32 %v5154, %v5124
      %v5156 = vadd.f32 %v5155, %v5125
      %v5157 = vadd.f32 %v5156, %v5126
      %v5158 = vadd.f32 %v5157, %v5127
      %v5159 = vadd.f32 %v5158, %v5128
      %v5160 = vadd.f32 %v5159, %v5129
      %v5161 = vadd.f32 %v5160, %v5130
      %v5162 = vadd.f32 %v5161, %v5131
      %v5163 = vadd.f32 %v5162, %v5132
      %v5164 = vadd.f32 %v5163, %v5133
      %v5165 = vrot.slane %v5164, 4
      %v5166 = vadd.f32 %v5164, %v5165
      %v5167 = vrot.slane %v5166, 2
      %v5168 = vadd.f32 %v5166, %v5167
      %v5169 = vrot.slane %v5168, 1
      %v5170 = vadd.f32 %v5168, %v5169
      %5171 = vst [vmem:[%s211 + $0x1] sm:$0x1] %v5170
      %p5172 = scmp.lt.s32.totalorder %s19, 1
      %s5173 = scalar_select %p5172, %s19, 1
      %p5174 = scmp.lt.s32.totalorder %s20, 0
      %s5175 = scalar_select %p5174, %s20, 0
      %s5176 = smul.addr %s5175, 32
      %s5177 = smul.addr %s5173, 32
      %s5178 = sadd.s32 %s5176, %s5177
      %s5179 = smul.addr %s5178, 8
      %s5180 = scalar_lea.vmem %s2, %s5179
      %p5181 = scmp.lt.s32.totalorder %s19, 1
      %s5182 = scalar_select %p5181, %s19, 1
      %p5183 = scmp.lt.s32.totalorder %s20, 0
      %s5184 = scalar_select %p5183, %s20, 0
      %s5185 = sadd.s32 %s5184, %s5182
      %s5186 = smul.addr %s5185, 2
      %s5187 = scalar_lea.vmem %s3, %s5186
      // Predicated region
      $region29: #{conv_block_forward.3} parent=27 // pred_check
        %p5188 = pneg %p94
      $region30: #{conv_block_forward.3} parent=27 // pred_check_branch
        %5190 = sbr.rel (%p5188) target = $region32
      $region31: #{conv_block_forward.3} parent=27 // pred_region
        _
      $region32: #{conv_block_forward.3} parent=27 // pred_fallthru
        _
      // Predicated region
      $region33: #{conv_block_forward.3} parent=27 // pred_check
        %p5191 = pneg %p122
      $region34: #{conv_block_forward.3} parent=27 // pred_check_branch
        %5193 = sbr.rel (%p5191) target = $region36
      $region35: #{conv_block_forward.3} parent=27 // pred_region
        _
      $region36: #{conv_block_forward.3} parent=27 // pred_fallthru
        _
    $region28: #{conv_block_forward.3} parent=5 // pred_fallthru
      _
    %p5194 = scmp.le.s32.totalorder 2, %s10
    // Predicated region
    $region37: #{conv_block_forward.3} parent=5 // pred_check
      %p5195 = pneg %p5194
    $region38: #{conv_block_forward.3} parent=5 // pred_check_branch
      %5197 = sbr.rel (%p5195) target = $region40
    $region39: #{conv_block_forward.3} parent=5 // pred_region
      %s5198 = ssub.s32 %s10, 2
      // Predicated region
      $region41: #{conv_block_forward.3} parent=39 // pred_check
        %p5199 = pneg %p100
      $region42: #{conv_block_forward.3} parent=39 // pred_check_branch
        %5201 = sbr.rel (%p5199) target = $region44
      $region43: #{conv_block_forward.3} parent=39 // pred_region
        %p5202 = scmp.lt.s32.totalorder %s21, 1
        %s5203 = scalar_select %p5202, %s21, 1
        %p5204 = scmp.lt.s32.totalorder %s22, 0
        %s5205 = scalar_select %p5204, %s22, 0
        %s5206 = smul.addr %s5205, 32
        %s5207 = smul.addr %s5203, 32
        %s5208 = sadd.s32 %s5206, %s5207
        %s5209 = smul.addr %s5208, 8
        %s5210 = scalar_lea.vmem %s2, %s5209
      $region44: #{conv_block_forward.3} parent=39 // pred_fallthru
        _
      // Predicated region
      $region45: #{conv_block_forward.3} parent=39 // pred_check
        %p5211 = pneg %p128
      $region46: #{conv_block_forward.3} parent=39 // pred_check_branch
        %5213 = sbr.rel (%p5211) target = $region48
      $region47: #{conv_block_forward.3} parent=39 // pred_region
        %p5214 = scmp.lt.s32.totalorder %s21, 1
        %s5215 = scalar_select %p5214, %s21, 1
        %p5216 = scmp.lt.s32.totalorder %s22, 0
        %s5217 = scalar_select %p5216, %s22, 0
        %s5218 = sadd.s32 %s5217, %s5215
        %s5219 = smul.addr %s5218, 2
        %s5220 = scalar_lea.vmem %s3, %s5219
      $region48: #{conv_block_forward.3} parent=39 // pred_fallthru
        _
    $region40: #{conv_block_forward.3} parent=5 // pred_fallthru
      _
  $region6: #{conv_block_forward.3} parent=0 // loop_footer
    %s14 = sadd.s32 1, %s10
  $region7: #{conv_block_forward.3} parent=0 // loop_footer_branch
    %9 = sbr.rel target = $region3
  $region8: #{conv_block_forward.3} parent=0 // loop_exit
    _

</llo_original>
